<compile_context>
chip_gen: v6e
topology: v6e:2x2x1
jax: 0.10.0
libtpu: 0.0.40
codegen_flags: <defaults>
</compile_context>

<pallas_src>
import functools

import jax
import jax.numpy as jnp
from jax.experimental import pallas as pl
from jax.experimental.pallas import tpu as pltpu


# ----------------------------------------------------------------------------
# Host-side helpers: gate reorder + row packer for the single parameter DMA.
# ----------------------------------------------------------------------------
def _ceil8(n):
    return -(-n // 8) * 8


def _reorder_gates(w4h, H):
    """Permute last-axis gate blocks from PyTorch [i, f, g, o] to [i, f, o, g]."""
    return jnp.concatenate(
        [w4h[..., :2 * H], w4h[..., 3 * H:4 * H], w4h[..., 2 * H:3 * H]], axis=-1)


def pack_rows(named_arrays, width=128):
    """Stack small 2-D f32 weights into one (R, width) array.

    Each entry is padded to an 8-sublane-aligned row group so the kernel can
    read it back with clean static ref slices.  offsets[name] = (row0, rows,
    cols) are Python ints (static at kernel trace time).
    """
    blocks, offsets, r = [], {}, 0
    for name, a in named_arrays:
        a = jnp.asarray(a, jnp.float32)
        nr, nc = a.shape
        assert nc <= width, (name, a.shape)
        pr = _ceil8(nr)
        blocks.append(jnp.pad(a, ((0, pr - nr), (0, width - nc))))
        offsets[name] = (r, nr, nc)
        r += pr
    return jnp.concatenate(blocks, axis=0), offsets


# ----------------------------------------------------------------------------
# Pallas kernel: whole forward pass for all fused windows at once.
# Row ordering of the fused batch axis is r = w * B + b (window-major).
# ----------------------------------------------------------------------------
def da_mil_kernel(data_ref, pk_ref, wide_ref, wdec_ref, out_ref,
                  *, B, step, T, D, He, Hd, offs):
    BF = B * step
    TD = T * D
    THe = T * He
    Ge = 4 * He
    Gd = 4 * Hd

    def gp(name):
        r0, nr, nc = offs[name]
        return pk_ref[r0:r0 + nr, 0:nc]

    data = data_ref[...]                               # (BF, T*D + T)
    X_flat = data[:, 0:TD]                             # (BF, T*D) lane-packed
    tgt = data[:, TD:TD + T]                           # (BF, T)

    # --- encoder input attention: exact (h/c/bias shift dropped), once ---
    score_x = jnp.dot(X_flat, gp('m_ea'),
                      preferred_element_type=jnp.float32)         # (BF, D)
    m = jnp.max(score_x, axis=1, keepdims=True)
    e = jnp.exp(score_x - m)
    attn_in = e * pl.reciprocal(jnp.sum(e, axis=1, keepdims=True), approx=True)
    attn_tiled = jnp.dot(attn_in, gp('tile_d'),
                         preferred_element_type=jnp.float32)      # (BF, T*D)
    wi_flat = X_flat * attn_tiled                                 # weighted inputs, all t

    # --- hoisted encoder input projection for all T steps (+ bias folded) ---
    g_in_all = (jnp.dot(wi_flat, wide_ref[0:TD, :],
                        preferred_element_type=jnp.float32)
                + wide_ref[TD:TD + 1, :])                         # (BF, T*4He)

    w_hh_e = gp('w_hh_e')                                         # (He, 4He)

    # --- encoder LSTM, fully unrolled; only h @ w_hh_e on the serial chain ---
    enc_steps = []
    for t in range(T):
        g = g_in_all[:, t * Ge:(t + 1) * Ge]
        if t > 0:  # h == 0 at t == 0 (exact skip)
            g = g + jnp.dot(h, w_hh_e, preferred_element_type=jnp.float32)
        sig = jax.nn.sigmoid(g[:, 0:3 * He])          # gates reordered [i,f,o|g]
        gg = jnp.tanh(g[:, 3 * He:Ge])
        ig, fg, og = sig[:, 0:He], sig[:, He:2 * He], sig[:, 2 * He:3 * He]
        c = ig * gg if t == 0 else fg * c + ig * gg
        h = og * jnp.tanh(c)
        enc_steps.append(h)
    enc_flat = jnp.concatenate(enc_steps, axis=1)     # (BF, T*He) = one f32 vreg

    # --- decoder-loop invariants (lane-dense layout) ---
    enc_proj = (jnp.dot(enc_flat, gp('w1e_block'),
                        preferred_element_type=jnp.float32)
                + gp('b1_tiled'))                                 # (BF, T*He)
    enc_dfc = jnp.dot(enc_flat, gp('w_dfc_block'),
                      preferred_element_type=jnp.float32)         # (BF, T)
    w2_blk = gp('w2_block')                                       # (T*He, T)
    wdec = wdec_ref[...]                                          # (2Hd, T*He+4Hd)
    dfc_scal = gp('dfc_scal')                                     # (1, 2)
    y_aff = tgt * dfc_scal[:, 0:1] + dfc_scal[:, 1:2]             # (BF, T)
    w_ih_d_b = jnp.broadcast_to(gp('w_ih_d'), (BF, Gd))
    b_d_b = jnp.broadcast_to(gp('b_d'), (BF, Gd))

    # --- decoder LSTM with temporal attention, fully unrolled ---
    for t in range(T):
        if t > 0:  # h == c == 0 at t == 0 (exact skip of the fused matmul)
            hg = jnp.dot(jnp.concatenate([h, c], axis=1), wdec,
                         preferred_element_type=jnp.float32)      # (BF, T*He+4Hd)
            h1 = jnp.tanh(enc_proj + hg[:, 0:THe])
        else:
            h1 = jnp.tanh(enc_proj)
        score = jnp.dot(h1, w2_blk, preferred_element_type=jnp.float32)  # (BF, T)
        m = jnp.max(score, axis=1, keepdims=True)
        e = jnp.exp(score - m)
        attn = e * pl.reciprocal(jnp.sum(e, axis=1, keepdims=True), approx=True)
        y_tilde = (jnp.sum(attn * enc_dfc, axis=1, keepdims=True)
                   + y_aff[:, t:t + 1])                           # (BF, 1)
        g = y_tilde * w_ih_d_b + b_d_b
        if t > 0:
            g = g + hg[:, THe:]                                   # h @ w_hh_d term
        sig = jax.nn.sigmoid(g[:, 0:3 * Hd])
        gg = jnp.tanh(g[:, 3 * Hd:Gd])
        ig, fg, og = sig[:, 0:Hd], sig[:, Hd:2 * Hd], sig[:, 2 * Hd:3 * Hd]
        c = ig * gg if t == 0 else fg * c + ig * gg
        h = og * jnp.tanh(c)

    # --- head: fc + tanh, linear + sigmoid ---
    out_fc = jnp.tanh(jnp.dot(h, gp('w_f'), preferred_element_type=jnp.float32)
                      + gp('b_f'))
    out_p = jax.nn.sigmoid(jnp.dot(out_fc, gp('w_l'),
                                   preferred_element_type=jnp.float32)
                           + gp('b_l'))                           # (BF, out_dim)

    # --- element-wise max over the window axis (rows are w*B + b) ---
    res = out_p[0:B, :]
    for w in range(1, step):
        res = jnp.maximum(res, out_p[w * B:(w + 1) * B, :])
    out_ref[...] = res


# ----------------------------------------------------------------------------
# Parameter setup (deterministic, PyTorch nn.Module conventions)
# ----------------------------------------------------------------------------
def init_params(key, in_dim, T, He, Hd, Fh, out_dim):
    ks = jax.random.split(key, 20)

    def n(k, shape, scale=0.1):
        return (scale * jax.random.normal(k, shape)).astype(jnp.float32)

    return dict(
        enc_Wih=n(ks[0], (4 * He, in_dim)),
        enc_Whh=n(ks[1], (4 * He, He)),
        enc_bih=n(ks[2], (4 * He,)),
        enc_bhh=n(ks[3], (4 * He,)),
        ea_w=n(ks[4], (1, 2 * He + T)),
        ea_b=n(ks[5], (1,)),
        dec_Wih=n(ks[6], (4 * Hd, 1)),
        dec_Whh=n(ks[7], (4 * Hd, Hd)),
        dec_bih=n(ks[8], (4 * Hd,)),
        dec_bhh=n(ks[9], (4 * Hd,)),
        da1_w=n(ks[10], (He, 2 * Hd + He)),
        da1_b=n(ks[11], (He,)),
        da2_w=n(ks[12], (1, He)),
        da2_b=n(ks[13], (1,)),
        dfc_w=n(ks[14], (1, He + 1)),
        dfc_b=n(ks[15], (1,)),
        fc_w=n(ks[16], (Fh, Hd)),
        fc_b=n(ks[17], (Fh,)),
        lg_w=n(ks[18], (out_dim, Fh)),
        lg_b=n(ks[19], (out_dim,)),
    )


def prepare_kernel_params(p, *, in_dim, T, He, Hd):
    """Build the 3 packed kernel constants (exact softmax simplifications,
    gate reorder, fused/block-diag weights).  Returns (pack, offs, wide, wdec).
    """
    D = in_dim
    f32 = lambda a: jnp.asarray(a, jnp.float32)
    eyeT = jnp.eye(T, dtype=jnp.float32)

    # encoder LSTM (x @ W layout, gates reordered to [i, f, o, g])
    w_ih_e = _reorder_gates(f32(p['enc_Wih']).T, He)              # (D, 4He)
    w_hh_e = _reorder_gates(f32(p['enc_Whh']).T, He)              # (He, 4He)
    b_e = _reorder_gates(f32(p['enc_bih'] + p['enc_bhh']).reshape(1, -1), He)

    # encoder input attention: only the X part survives the softmax shift
    w_ea_x = f32(p['ea_w'])[:, 2 * He:].T                         # (T, 1)
    m_ea = jnp.kron(w_ea_x, jnp.eye(D, dtype=jnp.float32))        # (T*D, D)
    tile_d = jnp.kron(jnp.ones((1, T), jnp.float32),
                      jnp.eye(D, dtype=jnp.float32))              # (D, T*D)

    # hoisted encoder input projection (block-diag) + tiled bias
    wide = jnp.concatenate(
        [jnp.kron(eyeT, w_ih_e), jnp.tile(b_e, (1, T))], axis=0)  # (T*D+1, T*4He)

    # decoder temporal attention (da2 bias dropped: softmax shift-invariant)
    w1_h = f32(p['da1_w'])[:, :Hd].T                              # (Hd, He)
    w1_c = f32(p['da1_w'])[:, Hd:2 * Hd].T                        # (Hd, He)
    w1_e = f32(p['da1_w'])[:, 2 * Hd:].T                          # (He, He)
    w1e_block = jnp.kron(eyeT, w1_e)                              # (T*He, T*He)
    b1_tiled = jnp.tile(f32(p['da1_b']).reshape(1, -1), (1, T))   # (1, T*He)
    w2_block = jnp.kron(eyeT, f32(p['da2_w']).T)                  # (T*He, T)

    # decoder_fc
    dfc_w = f32(p['dfc_w'])                                       # (1, He+1)
    w_dfc_block = jnp.kron(eyeT, dfc_w[:, :He].T)                 # (T*He, T)
    dfc_scal = jnp.concatenate(
        [dfc_w[:, He:He + 1], f32(p['dfc_b']).reshape(1, 1)], axis=1)   # (1, 2)

    # decoder LSTM (input size 1), gates reordered; fused per-step weight
    w_ih_d = _reorder_gates(f32(p['dec_Wih']).T, Hd)              # (1, 4Hd)
    w_hh_d = _reorder_gates(f32(p['dec_Whh']).T, Hd)              # (Hd, 4Hd)
    b_d = _reorder_gates(f32(p['dec_bih'] + p['dec_bhh']).reshape(1, -1), Hd)
    wdec = jnp.concatenate([
        jnp.concatenate([jnp.tile(w1_h, (1, T)), w_hh_d], axis=1),
        jnp.concatenate([jnp.tile(w1_c, (1, T)),
                         jnp.zeros((Hd, 4 * Hd), jnp.float32)], axis=1),
    ], axis=0)                                                    # (2Hd, T*He+4Hd)

    pack, offs = pack_rows([
        ('m_ea', m_ea), ('tile_d', tile_d), ('w_hh_e', w_hh_e),
        ('w1e_block', w1e_block), ('b1_tiled', b1_tiled),
        ('w2_block', w2_block), ('w_dfc_block', w_dfc_block),
        ('w_ih_d', w_ih_d), ('b_d', b_d), ('dfc_scal', dfc_scal),
        ('w_f', f32(p['fc_w']).T), ('b_f', f32(p['fc_b']).reshape(1, -1)),
        ('w_l', f32(p['lg_w']).T), ('b_l', f32(p['lg_b']).reshape(1, -1)),
    ], width=128)
    return pack, offs, wide, wdec


# ----------------------------------------------------------------------------
# Wrapper calling pallas_call (no grid: one invocation, 4 input DMAs).
# ----------------------------------------------------------------------------
def da_mil_forward(related_seq, target_seq, params, *, T, step, He, Hd, Fh,
                   out_dim):
    B, L, in_dim = related_seq.shape
    assert L >= step + T - 1
    related_seq = related_seq.astype(jnp.float32)
    target_seq = target_seq.astype(jnp.float32)

    # Fuse the `step` sliding windows into the batch axis (row r = w*B + b)
    # and lane-pack X as (BF, T*D); targets appended in the same array.
    idx = jnp.arange(step)[:, None] + jnp.arange(T)[None, :]          # (step, T)
    rel_win = jnp.transpose(related_seq[:, idx, :],
                            (1, 0, 2, 3)).reshape(step * B, T * in_dim)
    tgt_win = jnp.transpose(target_seq[:, idx], (1, 0, 2)).reshape(step * B, T)
    data = jnp.concatenate([rel_win, tgt_win], axis=1)                # (BF, T*D+T)

    pack, offs, wide, wdec = prepare_kernel_params(
        params, in_dim=in_dim, T=T, He=He, Hd=Hd)
    inputs = [data, pack, wide, wdec]

    kernel = functools.partial(da_mil_kernel, B=B, step=step, T=T, D=in_dim,
                               He=He, Hd=Hd, offs=offs)

    vmem = pltpu.MemorySpace.VMEM
    return pl.pallas_call(
        kernel,
        out_shape=jax.ShapeDtypeStruct((B, out_dim), jnp.float32),
        in_specs=[pl.BlockSpec(memory_space=vmem) for _ in inputs],
        out_specs=pl.BlockSpec(memory_space=vmem),
    )(*inputs)


# ----------------------------------------------------------------------------
# Pure-JAX reference (mirrors the PyTorch forward semantics, un-optimized)
# ----------------------------------------------------------------------------
def _lstm_step(x, h, c, W_ih, W_hh, b_ih, b_hh):
    H = h.shape[-1]
    g = x @ W_ih.T + h @ W_hh.T + b_ih + b_hh
    i = jax.nn.sigmoid(g[:, :H])
    f = jax.nn.sigmoid(g[:, H:2 * H])
    gg = jnp.tanh(g[:, 2 * H:3 * H])
    o = jax.nn.sigmoid(g[:, 3 * H:])
    c = f * c + i * gg
    h = o * jnp.tanh(c)
    return h, c


def ref_forward(related, target, p, *, T, step, He, Hd):
    B, L, D = related.shape
    outs = []
    for i in range(step):
        X = related[:, i:i + T, :]
        Y = target[:, i:i + T]
        h = jnp.zeros((B, He)); c = jnp.zeros((B, He))
        enc_list = []
        for t in range(T):
            x = jnp.concatenate(
                [jnp.broadcast_to(h[:, None, :], (B, D, He)),
                 jnp.broadcast_to(c[:, None, :], (B, D, He)),
                 jnp.transpose(X, (0, 2, 1))], axis=2)
            s = x.reshape(-1, 2 * He + T) @ p['ea_w'].T + p['ea_b']
            attn = jax.nn.softmax(s.reshape(B, D), axis=1)
            wi = attn * X[:, t, :]
            h, c = _lstm_step(wi, h, c, p['enc_Wih'], p['enc_Whh'],
                              p['enc_bih'], p['enc_bhh'])
            enc_list.append(h)
        enc = jnp.stack(enc_list, axis=1)                     # (B, T, He)
        h = jnp.zeros((B, Hd)); c = jnp.zeros((B, Hd))
        for t in range(T):
            x = jnp.concatenate(
                [jnp.broadcast_to(h[:, None, :], (B, T, Hd)),
                 jnp.broadcast_to(c[:, None, :], (B, T, Hd)),
                 enc], axis=2)
            h1 = jnp.tanh(x.reshape(-1, 2 * Hd + He) @ p['da1_w'].T + p['da1_b'])
            sc = (h1 @ p['da2_w'].T + p['da2_b']).reshape(B, T)
            attn = jax.nn.softmax(sc, axis=1)
            context = jnp.einsum('bt,bte->be', attn, enc)
            y_tilde = (jnp.concatenate([context, Y[:, t:t + 1]], axis=1)
                       @ p['dfc_w'].T + p['dfc_b'])
            h, c = _lstm_step(y_tilde, h, c, p['dec_Wih'], p['dec_Whh'],
                              p['dec_bih'], p['dec_bhh'])
        outs.append(h)
    input_final = jnp.stack(outs, axis=1)                     # (B, step, Hd)
    out_fc = jnp.tanh(input_final @ p['fc_w'].T + p['fc_b'])
    out_p = jax.nn.sigmoid(out_fc @ p['lg_w'].T + p['lg_b'])
    return jnp.max(out_p, axis=1)


# ----------------------------------------------------------------------------
if __name__ == "__main__":
    # Hyper-parameters (small, consistent with the module's forward).
    B, in_dim, T, step = 2, 4, 8, 4
    He, Hd, Fh, out_dim = 16, 16, 32, 4
    L = step + T - 1

    key = jax.random.PRNGKey(0)
    k_rel, k_tgt, k_par = jax.random.split(key, 3)
    related_seq = jax.random.normal(k_rel, (B, L, in_dim), dtype=jnp.float32)
    target_seq = jax.random.normal(k_tgt, (B, L), dtype=jnp.float32)
    params = init_params(k_par, in_dim, T, He, Hd, Fh, out_dim)

    p_max = da_mil_forward(related_seq, target_seq, params,
                           T=T, step=step, He=He, Hd=Hd, Fh=Fh,
                           out_dim=out_dim)
    p_max = jax.block_until_ready(p_max)

    p_ref = jax.block_until_ready(
        ref_forward(related_seq, target_seq, params,
                    T=T, step=step, He=He, Hd=Hd))

    assert p_max.shape == (B, out_dim)
    # Tolerance tightened 5x vs. the previous version.  It cannot go all the
    # way to 1e-5 because both kernel and reference matmuls run at TPU default
    # precision (bf16 MXU passes) with different groupings, and the kernel's
    # softmaxes use the approximate EUP reciprocal.
    err = jnp.max(jnp.abs(p_max - p_ref))
    assert err < 2e-3, (err, p_max, p_ref)

    print("KERNEL_OK")
</pallas_src>

<mosaic_0001>
module attributes {stable_mosaic.version = 11 : i64} {
  func.func @da_mil_kernel(%arg0: memref<8x40xf32, #tpu.memory_space<vmem>>, %arg1: memref<536x128xf32, #tpu.memory_space<vmem>>, %arg2: memref<33x512xf32, #tpu.memory_space<vmem>>, %arg3: memref<32x192xf32, #tpu.memory_space<vmem>>, %arg4: memref<2x4xf32, #tpu.memory_space<vmem>>) attributes {dimension_semantics = [], scalar_prefetch = 0 : i64, scratch_operands = 0 : i64, tpu.core_type = #tpu.core_type<tc>} {
    %c0 = arith.constant 0 : index
    %c0_0 = arith.constant 0 : index
    %0 = vector.load %arg0[%c0, %c0_0] : memref<8x40xf32, #tpu.memory_space<vmem>>, vector<8x40xf32>
    %1 = vector.extract_strided_slice %0 {offsets = [0, 0], sizes = [8, 32], strides = [1, 1]} : vector<8x40xf32> to vector<8x32xf32>
    %2 = vector.extract_strided_slice %0 {offsets = [0, 32], sizes = [8, 8], strides = [1, 1]} : vector<8x40xf32> to vector<8x8xf32>
    %c0_1 = arith.constant 0 : index
    %c0_2 = arith.constant 0 : index
    %3 = vector.load %arg1[%c0_1, %c0_2] : memref<536x128xf32, #tpu.memory_space<vmem>>, vector<32x4xf32>
    %cst = arith.constant dense<0.000000e+00> : vector<8x4xf32>
    %4 = tpu.matmul %1, %3, %cst {dimension_numbers = #tpu.dot_dimension_numbers<[1], [0], [0], [1], [0, 0, 1, 1], [], []>} : vector<8x32xf32>, vector<32x4xf32>, vector<8x4xf32> -> vector<8x4xf32>
    %cst_3 = arith.constant dense<0xFF800000> : vector<8xf32>
    %5 = vector.multi_reduction <maximumf>, %4, %cst_3 [1] : vector<8x4xf32> to vector<8xf32>
    %6 = vector.shape_cast %5 : vector<8xf32> to vector<8x1xf32>
    %7 = vector.broadcast %6 : vector<8x1xf32> to vector<8x4xf32>
    %8 = arith.subf %4, %7 : vector<8x4xf32>
    %9 = math.exp %8 : vector<8x4xf32>
    %cst_4 = arith.constant dense<0.000000e+00> : vector<8xf32>
    %10 = vector.multi_reduction <add>, %9, %cst_4 [1] : vector<8x4xf32> to vector<8xf32>
    %11 = vector.shape_cast %10 : vector<8xf32> to vector<8x1xf32>
    %12 = tpu.reciprocal %11 {approx = true} : vector<8x1xf32> -> vector<8x1xf32>
    %13 = vector.broadcast %12 : vector<8x1xf32> to vector<8x4xf32>
    %14 = arith.mulf %9, %13 : vector<8x4xf32>
    %c32 = arith.constant 32 : index
    %c0_5 = arith.constant 0 : index
    %15 = vector.load %arg1[%c32, %c0_5] : memref<536x128xf32, #tpu.memory_space<vmem>>, vector<4x32xf32>
    %cst_6 = arith.constant dense<0.000000e+00> : vector<8x32xf32>
    %16 = tpu.matmul %14, %15, %cst_6 {dimension_numbers = #tpu.dot_dimension_numbers<[1], [0], [0], [1], [0, 0, 1, 1], [], []>} : vector<8x4xf32>, vector<4x32xf32>, vector<8x32xf32> -> vector<8x32xf32>
    %17 = arith.mulf %1, %16 : vector<8x32xf32>
    %c0_7 = arith.constant 0 : index
    %c0_8 = arith.constant 0 : index
    %18 = vector.load %arg2[%c0_7, %c0_8] : memref<33x512xf32, #tpu.memory_space<vmem>>, vector<32x512xf32>
    %cst_9 = arith.constant dense<0.000000e+00> : vector<8x512xf32>
    %19 = tpu.matmul %17, %18, %cst_9 {dimension_numbers = #tpu.dot_dimension_numbers<[1], [0], [0], [1], [0, 0, 1, 1], [], []>} : vector<8x32xf32>, vector<32x512xf32>, vector<8x512xf32> -> vector<8x512xf32>
    %c32_10 = arith.constant 32 : index
    %c0_11 = arith.constant 0 : index
    %20 = vector.load %arg2[%c32_10, %c0_11] : memref<33x512xf32, #tpu.memory_space<vmem>>, vector<1x512xf32>
    %21 = vector.broadcast %20 : vector<1x512xf32> to vector<8x512xf32>
    %22 = arith.addf %19, %21 : vector<8x512xf32>
    %c40 = arith.constant 40 : index
    %c0_12 = arith.constant 0 : index
    %23 = vector.load %arg1[%c40, %c0_12] : memref<536x128xf32, #tpu.memory_space<vmem>>, vector<16x64xf32>
    %24 = vector.extract_strided_slice %22 {offsets = [0, 0], sizes = [8, 64], strides = [1, 1]} : vector<8x512xf32> to vector<8x64xf32>
    %25 = vector.extract_strided_slice %24 {offsets = [0, 0], sizes = [8, 48], strides = [1, 1]} : vector<8x64xf32> to vector<8x48xf32>
    %26 = arith.negf %25 : vector<8x48xf32>
    %27 = math.exp %26 : vector<8x48xf32>
    %cst_13 = arith.constant 1.000000e+00 : f32
    %28 = vector.broadcast %cst_13 : f32 to vector<8x48xf32>
    %29 = arith.addf %28, %27 : vector<8x48xf32>
    %30 = arith.divf %28, %29 : vector<8x48xf32>
    %31 = vector.extract_strided_slice %24 {offsets = [0, 48], sizes = [8, 16], strides = [1, 1]} : vector<8x64xf32> to vector<8x16xf32>
    %32 = math.tanh %31 : vector<8x16xf32>
    %33 = vector.extract_strided_slice %30 {offsets = [0, 0], sizes = [8, 16], strides = [1, 1]} : vector<8x48xf32> to vector<8x16xf32>
    %34 = vector.extract_strided_slice %30 {offsets = [0, 32], sizes = [8, 16], strides = [1, 1]} : vector<8x48xf32> to vector<8x16xf32>
    %35 = arith.mulf %33, %32 : vector<8x16xf32>
    %36 = math.tanh %35 : vector<8x16xf32>
    %37 = arith.mulf %34, %36 : vector<8x16xf32>
    %38 = vector.extract_strided_slice %22 {offsets = [0, 64], sizes = [8, 64], strides = [1, 1]} : vector<8x512xf32> to vector<8x64xf32>
    %cst_14 = arith.constant dense<0.000000e+00> : vector<8x64xf32>
    %39 = tpu.matmul %37, %23, %cst_14 {dimension_numbers = #tpu.dot_dimension_numbers<[1], [0], [0], [1], [0, 0, 1, 1], [], []>} : vector<8x16xf32>, vector<16x64xf32>, vector<8x64xf32> -> vector<8x64xf32>
    %40 = arith.addf %38, %39 : vector<8x64xf32>
    %41 = vector.extract_strided_slice %40 {offsets = [0, 0], sizes = [8, 48], strides = [1, 1]} : vector<8x64xf32> to vector<8x48xf32>
    %42 = arith.negf %41 : vector<8x48xf32>
    %43 = math.exp %42 : vector<8x48xf32>
    %cst_15 = arith.constant 1.000000e+00 : f32
    %44 = vector.broadcast %cst_15 : f32 to vector<8x48xf32>
    %45 = arith.addf %44, %43 : vector<8x48xf32>
    %46 = arith.divf %44, %45 : vector<8x48xf32>
    %47 = vector.extract_strided_slice %40 {offsets = [0, 48], sizes = [8, 16], strides = [1, 1]} : vector<8x64xf32> to vector<8x16xf32>
    %48 = math.tanh %47 : vector<8x16xf32>
    %49 = vector.extract_strided_slice %46 {offsets = [0, 0], sizes = [8, 16], strides = [1, 1]} : vector<8x48xf32> to vector<8x16xf32>
    %50 = vector.extract_strided_slice %46 {offsets = [0, 16], sizes = [8, 16], strides = [1, 1]} : vector<8x48xf32> to vector<8x16xf32>
    %51 = vector.extract_strided_slice %46 {offsets = [0, 32], sizes = [8, 16], strides = [1, 1]} : vector<8x48xf32> to vector<8x16xf32>
    %52 = arith.mulf %50, %35 : vector<8x16xf32>
    %53 = arith.mulf %49, %48 : vector<8x16xf32>
    %54 = arith.addf %52, %53 : vector<8x16xf32>
    %55 = math.tanh %54 : vector<8x16xf32>
    %56 = arith.mulf %51, %55 : vector<8x16xf32>
    %57 = vector.extract_strided_slice %22 {offsets = [0, 128], sizes = [8, 64], strides = [1, 1]} : vector<8x512xf32> to vector<8x64xf32>
    %cst_16 = arith.constant dense<0.000000e+00> : vector<8x64xf32>
    %58 = tpu.matmul %56, %23, %cst_16 {dimension_numbers = #tpu.dot_dimension_numbers<[1], [0], [0], [1], [0, 0, 1, 1], [], []>} : vector<8x16xf32>, vector<16x64xf32>, vector<8x64xf32> -> vector<8x64xf32>
    %59 = arith.addf %57, %58 : vector<8x64xf32>
    %60 = vector.extract_strided_slice %59 {offsets = [0, 0], sizes = [8, 48], strides = [1, 1]} : vector<8x64xf32> to vector<8x48xf32>
    %61 = arith.negf %60 : vector<8x48xf32>
    %62 = math.exp %61 : vector<8x48xf32>
    %cst_17 = arith.constant 1.000000e+00 : f32
    %63 = vector.broadcast %cst_17 : f32 to vector<8x48xf32>
    %64 = arith.addf %63, %62 : vector<8x48xf32>
    %65 = arith.divf %63, %64 : vector<8x48xf32>
    %66 = vector.extract_strided_slice %59 {offsets = [0, 48], sizes = [8, 16], strides = [1, 1]} : vector<8x64xf32> to vector<8x16xf32>
    %67 = math.tanh %66 : vector<8x16xf32>
    %68 = vector.extract_strided_slice %65 {offsets = [0, 0], sizes = [8, 16], strides = [1, 1]} : vector<8x48xf32> to vector<8x16xf32>
    %69 = vector.extract_strided_slice %65 {offsets = [0, 16], sizes = [8, 16], strides = [1, 1]} : vector<8x48xf32> to vector<8x16xf32>
    %70 = vector.extract_strided_slice %65 {offsets = [0, 32], sizes = [8, 16], strides = [1, 1]} : vector<8x48xf32> to vector<8x16xf32>
    %71 = arith.mulf %69, %54 : vector<8x16xf32>
    %72 = arith.mulf %68, %67 : vector<8x16xf32>
    %73 = arith.addf %71, %72 : vector<8x16xf32>
    %74 = math.tanh %73 : vector<8x16xf32>
    %75 = arith.mulf %70, %74 : vector<8x16xf32>
    %76 = vector.extract_strided_slice %22 {offsets = [0, 192], sizes = [8, 64], strides = [1, 1]} : vector<8x512xf32> to vector<8x64xf32>
    %cst_18 = arith.constant dense<0.000000e+00> : vector<8x64xf32>
    %77 = tpu.matmul %75, %23, %cst_18 {dimension_numbers = #tpu.dot_dimension_numbers<[1], [0], [0], [1], [0, 0, 1, 1], [], []>} : vector<8x16xf32>, vector<16x64xf32>, vector<8x64xf32> -> vector<8x64xf32>
    %78 = arith.addf %76, %77 : vector<8x64xf32>
    %79 = vector.extract_strided_slice %78 {offsets = [0, 0], sizes = [8, 48], strides = [1, 1]} : vector<8x64xf32> to vector<8x48xf32>
    %80 = arith.negf %79 : vector<8x48xf32>
    %81 = math.exp %80 : vector<8x48xf32>
    %cst_19 = arith.constant 1.000000e+00 : f32
    %82 = vector.broadcast %cst_19 : f32 to vector<8x48xf32>
    %83 = arith.addf %82, %81 : vector<8x48xf32>
    %84 = arith.divf %82, %83 : vector<8x48xf32>
    %85 = vector.extract_strided_slice %78 {offsets = [0, 48], sizes = [8, 16], strides = [1, 1]} : vector<8x64xf32> to vector<8x16xf32>
    %86 = math.tanh %85 : vector<8x16xf32>
    %87 = vector.extract_strided_slice %84 {offsets = [0, 0], sizes = [8, 16], strides = [1, 1]} : vector<8x48xf32> to vector<8x16xf32>
    %88 = vector.extract_strided_slice %84 {offsets = [0, 16], sizes = [8, 16], strides = [1, 1]} : vector<8x48xf32> to vector<8x16xf32>
    %89 = vector.extract_strided_slice %84 {offsets = [0, 32], sizes = [8, 16], strides = [1, 1]} : vector<8x48xf32> to vector<8x16xf32>
    %90 = arith.mulf %88, %73 : vector<8x16xf32>
    %91 = arith.mulf %87, %86 : vector<8x16xf32>
    %92 = arith.addf %90, %91 : vector<8x16xf32>
    %93 = math.tanh %92 : vector<8x16xf32>
    %94 = arith.mulf %89, %93 : vector<8x16xf32>
    %95 = vector.extract_strided_slice %22 {offsets = [0, 256], sizes = [8, 64], strides = [1, 1]} : vector<8x512xf32> to vector<8x64xf32>
    %cst_20 = arith.constant dense<0.000000e+00> : vector<8x64xf32>
    %96 = tpu.matmul %94, %23, %cst_20 {dimension_numbers = #tpu.dot_dimension_numbers<[1], [0], [0], [1], [0, 0, 1, 1], [], []>} : vector<8x16xf32>, vector<16x64xf32>, vector<8x64xf32> -> vector<8x64xf32>
    %97 = arith.addf %95, %96 : vector<8x64xf32>
    %98 = vector.extract_strided_slice %97 {offsets = [0, 0], sizes = [8, 48], strides = [1, 1]} : vector<8x64xf32> to vector<8x48xf32>
    %99 = arith.negf %98 : vector<8x48xf32>
    %100 = math.exp %99 : vector<8x48xf32>
    %cst_21 = arith.constant 1.000000e+00 : f32
    %101 = vector.broadcast %cst_21 : f32 to vector<8x48xf32>
    %102 = arith.addf %101, %100 : vector<8x48xf32>
    %103 = arith.divf %101, %102 : vector<8x48xf32>
    %104 = vector.extract_strided_slice %97 {offsets = [0, 48], sizes = [8, 16], strides = [1, 1]} : vector<8x64xf32> to vector<8x16xf32>
    %105 = math.tanh %104 : vector<8x16xf32>
    %106 = vector.extract_strided_slice %103 {offsets = [0, 0], sizes = [8, 16], strides = [1, 1]} : vector<8x48xf32> to vector<8x16xf32>
    %107 = vector.extract_strided_slice %103 {offsets = [0, 16], sizes = [8, 16], strides = [1, 1]} : vector<8x48xf32> to vector<8x16xf32>
    %108 = vector.extract_strided_slice %103 {offsets = [0, 32], sizes = [8, 16], strides = [1, 1]} : vector<8x48xf32> to vector<8x16xf32>
    %109 = arith.mulf %107, %92 : vector<8x16xf32>
    %110 = arith.mulf %106, %105 : vector<8x16xf32>
    %111 = arith.addf %109, %110 : vector<8x16xf32>
    %112 = math.tanh %111 : vector<8x16xf32>
    %113 = arith.mulf %108, %112 : vector<8x16xf32>
    %114 = vector.extract_strided_slice %22 {offsets = [0, 320], sizes = [8, 64], strides = [1, 1]} : vector<8x512xf32> to vector<8x64xf32>
    %cst_22 = arith.constant dense<0.000000e+00> : vector<8x64xf32>
    %115 = tpu.matmul %113, %23, %cst_22 {dimension_numbers = #tpu.dot_dimension_numbers<[1], [0], [0], [1], [0, 0, 1, 1], [], []>} : vector<8x16xf32>, vector<16x64xf32>, vector<8x64xf32> -> vector<8x64xf32>
    %116 = arith.addf %114, %115 : vector<8x64xf32>
    %117 = vector.extract_strided_slice %116 {offsets = [0, 0], sizes = [8, 48], strides = [1, 1]} : vector<8x64xf32> to vector<8x48xf32>
    %118 = arith.negf %117 : vector<8x48xf32>
    %119 = math.exp %118 : vector<8x48xf32>
    %cst_23 = arith.constant 1.000000e+00 : f32
    %120 = vector.broadcast %cst_23 : f32 to vector<8x48xf32>
    %121 = arith.addf %120, %119 : vector<8x48xf32>
    %122 = arith.divf %120, %121 : vector<8x48xf32>
    %123 = vector.extract_strided_slice %116 {offsets = [0, 48], sizes = [8, 16], strides = [1, 1]} : vector<8x64xf32> to vector<8x16xf32>
    %124 = math.tanh %123 : vector<8x16xf32>
    %125 = vector.extract_strided_slice %122 {offsets = [0, 0], sizes = [8, 16], strides = [1, 1]} : vector<8x48xf32> to vector<8x16xf32>
    %126 = vector.extract_strided_slice %122 {offsets = [0, 16], sizes = [8, 16], strides = [1, 1]} : vector<8x48xf32> to vector<8x16xf32>
    %127 = vector.extract_strided_slice %122 {offsets = [0, 32], sizes = [8, 16], strides = [1, 1]} : vector<8x48xf32> to vector<8x16xf32>
    %128 = arith.mulf %126, %111 : vector<8x16xf32>
    %129 = arith.mulf %125, %124 : vector<8x16xf32>
    %130 = arith.addf %128, %129 : vector<8x16xf32>
    %131 = math.tanh %130 : vector<8x16xf32>
    %132 = arith.mulf %127, %131 : vector<8x16xf32>
    %133 = vector.extract_strided_slice %22 {offsets = [0, 384], sizes = [8, 64], strides = [1, 1]} : vector<8x512xf32> to vector<8x64xf32>
    %cst_24 = arith.constant dense<0.000000e+00> : vector<8x64xf32>
    %134 = tpu.matmul %132, %23, %cst_24 {dimension_numbers = #tpu.dot_dimension_numbers<[1], [0], [0], [1], [0, 0, 1, 1], [], []>} : vector<8x16xf32>, vector<16x64xf32>, vector<8x64xf32> -> vector<8x64xf32>
    %135 = arith.addf %133, %134 : vector<8x64xf32>
    %136 = vector.extract_strided_slice %135 {offsets = [0, 0], sizes = [8, 48], strides = [1, 1]} : vector<8x64xf32> to vector<8x48xf32>
    %137 = arith.negf %136 : vector<8x48xf32>
    %138 = math.exp %137 : vector<8x48xf32>
    %cst_25 = arith.constant 1.000000e+00 : f32
    %139 = vector.broadcast %cst_25 : f32 to vector<8x48xf32>
    %140 = arith.addf %139, %138 : vector<8x48xf32>
    %141 = arith.divf %139, %140 : vector<8x48xf32>
    %142 = vector.extract_strided_slice %135 {offsets = [0, 48], sizes = [8, 16], strides = [1, 1]} : vector<8x64xf32> to vector<8x16xf32>
    %143 = math.tanh %142 : vector<8x16xf32>
    %144 = vector.extract_strided_slice %141 {offsets = [0, 0], sizes = [8, 16], strides = [1, 1]} : vector<8x48xf32> to vector<8x16xf32>
    %145 = vector.extract_strided_slice %141 {offsets = [0, 16], sizes = [8, 16], strides = [1, 1]} : vector<8x48xf32> to vector<8x16xf32>
    %146 = vector.extract_strided_slice %141 {offsets = [0, 32], sizes = [8, 16], strides = [1, 1]} : vector<8x48xf32> to vector<8x16xf32>
    %147 = arith.mulf %145, %130 : vector<8x16xf32>
    %148 = arith.mulf %144, %143 : vector<8x16xf32>
    %149 = arith.addf %147, %148 : vector<8x16xf32>
    %150 = math.tanh %149 : vector<8x16xf32>
    %151 = arith.mulf %146, %150 : vector<8x16xf32>
    %152 = vector.extract_strided_slice %22 {offsets = [0, 448], sizes = [8, 64], strides = [1, 1]} : vector<8x512xf32> to vector<8x64xf32>
    %cst_26 = arith.constant dense<0.000000e+00> : vector<8x64xf32>
    %153 = tpu.matmul %151, %23, %cst_26 {dimension_numbers = #tpu.dot_dimension_numbers<[1], [0], [0], [1], [0, 0, 1, 1], [], []>} : vector<8x16xf32>, vector<16x64xf32>, vector<8x64xf32> -> vector<8x64xf32>
    %154 = arith.addf %152, %153 : vector<8x64xf32>
    %155 = vector.extract_strided_slice %154 {offsets = [0, 0], sizes = [8, 48], strides = [1, 1]} : vector<8x64xf32> to vector<8x48xf32>
    %156 = arith.negf %155 : vector<8x48xf32>
    %157 = math.exp %156 : vector<8x48xf32>
    %cst_27 = arith.constant 1.000000e+00 : f32
    %158 = vector.broadcast %cst_27 : f32 to vector<8x48xf32>
    %159 = arith.addf %158, %157 : vector<8x48xf32>
    %160 = arith.divf %158, %159 : vector<8x48xf32>
    %161 = vector.extract_strided_slice %154 {offsets = [0, 48], sizes = [8, 16], strides = [1, 1]} : vector<8x64xf32> to vector<8x16xf32>
    %162 = math.tanh %161 : vector<8x16xf32>
    %163 = vector.extract_strided_slice %160 {offsets = [0, 0], sizes = [8, 16], strides = [1, 1]} : vector<8x48xf32> to vector<8x16xf32>
    %164 = vector.extract_strided_slice %160 {offsets = [0, 16], sizes = [8, 16], strides = [1, 1]} : vector<8x48xf32> to vector<8x16xf32>
    %165 = vector.extract_strided_slice %160 {offsets = [0, 32], sizes = [8, 16], strides = [1, 1]} : vector<8x48xf32> to vector<8x16xf32>
    %166 = arith.mulf %164, %149 : vector<8x16xf32>
    %167 = arith.mulf %163, %162 : vector<8x16xf32>
    %168 = arith.addf %166, %167 : vector<8x16xf32>
    %169 = math.tanh %168 : vector<8x16xf32>
    %170 = arith.mulf %165, %169 : vector<8x16xf32>
    %171 = tpu.concatenate %37, %56, %75, %94, %113, %132, %151, %170 in 1 : vector<8x16xf32>, vector<8x16xf32>, vector<8x16xf32>, vector<8x16xf32>, vector<8x16xf32>, vector<8x16xf32>, vector<8x16xf32>, vector<8x16xf32> -> vector<8x128xf32>
    %c56 = arith.constant 56 : index
    %c0_28 = arith.constant 0 : index
    %172 = vector.load %arg1[%c56, %c0_28] : memref<536x128xf32, #tpu.memory_space<vmem>>, vector<128x128xf32>
    %cst_29 = arith.constant dense<0.000000e+00> : vector<8x128xf32>
    %173 = tpu.matmul %171, %172, %cst_29 {dimension_numbers = #tpu.dot_dimension_numbers<[1], [0], [0], [1], [0, 0, 1, 1], [], []>} : vector<8x128xf32>, vector<128x128xf32>, vector<8x128xf32> -> vector<8x128xf32>
    %c184 = arith.constant 184 : index
    %c0_30 = arith.constant 0 : index
    %174 = vector.load %arg1[%c184, %c0_30] : memref<536x128xf32, #tpu.memory_space<vmem>>, vector<1x128xf32>
    %175 = vector.broadcast %174 : vector<1x128xf32> to vector<8x128xf32>
    %176 = arith.addf %173, %175 : vector<8x128xf32>
    %c320 = arith.constant 320 : index
    %c0_31 = arith.constant 0 : index
    %177 = vector.load %arg1[%c320, %c0_31] : memref<536x128xf32, #tpu.memory_space<vmem>>, vector<128x8xf32>
    %cst_32 = arith.constant dense<0.000000e+00> : vector<8x8xf32>
    %178 = tpu.matmul %171, %177, %cst_32 {dimension_numbers = #tpu.dot_dimension_numbers<[1], [0], [0], [1], [0, 0, 1, 1], [], []>} : vector<8x128xf32>, vector<128x8xf32>, vector<8x8xf32> -> vector<8x8xf32>
    %c192 = arith.constant 192 : index
    %c0_33 = arith.constant 0 : index
    %179 = vector.load %arg1[%c192, %c0_33] : memref<536x128xf32, #tpu.memory_space<vmem>>, vector<128x8xf32>
    %c0_34 = arith.constant 0 : index
    %c0_35 = arith.constant 0 : index
    %180 = vector.load %arg3[%c0_34, %c0_35] : memref<32x192xf32, #tpu.memory_space<vmem>>, vector<32x192xf32>
    %c464 = arith.constant 464 : index
    %c0_36 = arith.constant 0 : index
    %181 = vector.load %arg1[%c464, %c0_36] : memref<536x128xf32, #tpu.memory_space<vmem>>, vector<1x2xf32>
    %182 = vector.extract_strided_slice %181 {offsets = [0, 0], sizes = [1, 1], strides = [1, 1]} : vector<1x2xf32> to vector<1x1xf32>
    %183 = vector.broadcast %182 : vector<1x1xf32> to vector<8x8xf32>
    %184 = arith.mulf %2, %183 : vector<8x8xf32>
    %185 = vector.extract_strided_slice %181 {offsets = [0, 1], sizes = [1, 1], strides = [1, 1]} : vector<1x2xf32> to vector<1x1xf32>
    %186 = vector.broadcast %185 : vector<1x1xf32> to vector<8x8xf32>
    %187 = arith.addf %184, %186 : vector<8x8xf32>
    %c448 = arith.constant 448 : index
    %c0_37 = arith.constant 0 : index
    %188 = vector.load %arg1[%c448, %c0_37] : memref<536x128xf32, #tpu.memory_space<vmem>>, vector<1x64xf32>
    %189 = vector.shape_cast %188 : vector<1x64xf32> to vector<1x64xf32>
    %190 = vector.broadcast %189 : vector<1x64xf32> to vector<8x64xf32>
    %c456 = arith.constant 456 : index
    %c0_38 = arith.constant 0 : index
    %191 = vector.load %arg1[%c456, %c0_38] : memref<536x128xf32, #tpu.memory_space<vmem>>, vector<1x64xf32>
    %192 = vector.shape_cast %191 : vector<1x64xf32> to vector<1x64xf32>
    %193 = vector.broadcast %192 : vector<1x64xf32> to vector<8x64xf32>
    %194 = math.tanh %176 : vector<8x128xf32>
    %cst_39 = arith.constant dense<0.000000e+00> : vector<8x8xf32>
    %195 = tpu.matmul %194, %179, %cst_39 {dimension_numbers = #tpu.dot_dimension_numbers<[1], [0], [0], [1], [0, 0, 1, 1], [], []>} : vector<8x128xf32>, vector<128x8xf32>, vector<8x8xf32> -> vector<8x8xf32>
    %cst_40 = arith.constant dense<0xFF800000> : vector<8xf32>
    %196 = vector.multi_reduction <maximumf>, %195, %cst_40 [1] : vector<8x8xf32> to vector<8xf32>
    %197 = vector.shape_cast %196 : vector<8xf32> to vector<8x1xf32>
    %198 = vector.broadcast %197 : vector<8x1xf32> to vector<8x8xf32>
    %199 = arith.subf %195, %198 : vector<8x8xf32>
    %200 = math.exp %199 : vector<8x8xf32>
    %cst_41 = arith.constant dense<0.000000e+00> : vector<8xf32>
    %201 = vector.multi_reduction <add>, %200, %cst_41 [1] : vector<8x8xf32> to vector<8xf32>
    %202 = vector.shape_cast %201 : vector<8xf32> to vector<8x1xf32>
    %203 = tpu.reciprocal %202 {approx = true} : vector<8x1xf32> -> vector<8x1xf32>
    %204 = vector.broadcast %203 : vector<8x1xf32> to vector<8x8xf32>
    %205 = arith.mulf %200, %204 : vector<8x8xf32>
    %206 = arith.mulf %205, %178 : vector<8x8xf32>
    %cst_42 = arith.constant dense<0.000000e+00> : vector<8xf32>
    %207 = vector.multi_reduction <add>, %206, %cst_42 [1] : vector<8x8xf32> to vector<8xf32>
    %208 = vector.shape_cast %207 : vector<8xf32> to vector<8x1xf32>
    %209 = vector.extract_strided_slice %187 {offsets = [0, 0], sizes = [8, 1], strides = [1, 1]} : vector<8x8xf32> to vector<8x1xf32>
    %210 = arith.addf %208, %209 : vector<8x1xf32>
    %211 = vector.broadcast %210 : vector<8x1xf32> to vector<8x64xf32>
    %212 = arith.mulf %211, %190 : vector<8x64xf32>
    %213 = arith.addf %212, %193 : vector<8x64xf32>
    %214 = vector.extract_strided_slice %213 {offsets = [0, 0], sizes = [8, 48], strides = [1, 1]} : vector<8x64xf32> to vector<8x48xf32>
    %215 = arith.negf %214 : vector<8x48xf32>
    %216 = math.exp %215 : vector<8x48xf32>
    %cst_43 = arith.constant 1.000000e+00 : f32
    %217 = vector.broadcast %cst_43 : f32 to vector<8x48xf32>
    %218 = arith.addf %217, %216 : vector<8x48xf32>
    %219 = arith.divf %217, %218 : vector<8x48xf32>
    %220 = vector.extract_strided_slice %213 {offsets = [0, 48], sizes = [8, 16], strides = [1, 1]} : vector<8x64xf32> to vector<8x16xf32>
    %221 = math.tanh %220 : vector<8x16xf32>
    %222 = vector.extract_strided_slice %219 {offsets = [0, 0], sizes = [8, 16], strides = [1, 1]} : vector<8x48xf32> to vector<8x16xf32>
    %223 = vector.extract_strided_slice %219 {offsets = [0, 32], sizes = [8, 16], strides = [1, 1]} : vector<8x48xf32> to vector<8x16xf32>
    %224 = arith.mulf %222, %221 : vector<8x16xf32>
    %225 = math.tanh %224 : vector<8x16xf32>
    %226 = arith.mulf %223, %225 : vector<8x16xf32>
    %227 = tpu.concatenate %226, %224 in 1 : vector<8x16xf32>, vector<8x16xf32> -> vector<8x32xf32>
    %cst_44 = arith.constant dense<0.000000e+00> : vector<8x192xf32>
    %228 = tpu.matmul %227, %180, %cst_44 {dimension_numbers = #tpu.dot_dimension_numbers<[1], [0], [0], [1], [0, 0, 1, 1], [], []>} : vector<8x32xf32>, vector<32x192xf32>, vector<8x192xf32> -> vector<8x192xf32>
    %229 = vector.extract_strided_slice %228 {offsets = [0, 0], sizes = [8, 128], strides = [1, 1]} : vector<8x192xf32> to vector<8x128xf32>
    %230 = arith.addf %176, %229 : vector<8x128xf32>
    %231 = math.tanh %230 : vector<8x128xf32>
    %cst_45 = arith.constant dense<0.000000e+00> : vector<8x8xf32>
    %232 = tpu.matmul %231, %179, %cst_45 {dimension_numbers = #tpu.dot_dimension_numbers<[1], [0], [0], [1], [0, 0, 1, 1], [], []>} : vector<8x128xf32>, vector<128x8xf32>, vector<8x8xf32> -> vector<8x8xf32>
    %cst_46 = arith.constant dense<0xFF800000> : vector<8xf32>
    %233 = vector.multi_reduction <maximumf>, %232, %cst_46 [1] : vector<8x8xf32> to vector<8xf32>
    %234 = vector.shape_cast %233 : vector<8xf32> to vector<8x1xf32>
    %235 = vector.broadcast %234 : vector<8x1xf32> to vector<8x8xf32>
    %236 = arith.subf %232, %235 : vector<8x8xf32>
    %237 = math.exp %236 : vector<8x8xf32>
    %cst_47 = arith.constant dense<0.000000e+00> : vector<8xf32>
    %238 = vector.multi_reduction <add>, %237, %cst_47 [1] : vector<8x8xf32> to vector<8xf32>
    %239 = vector.shape_cast %238 : vector<8xf32> to vector<8x1xf32>
    %240 = tpu.reciprocal %239 {approx = true} : vector<8x1xf32> -> vector<8x1xf32>
    %241 = vector.broadcast %240 : vector<8x1xf32> to vector<8x8xf32>
    %242 = arith.mulf %237, %241 : vector<8x8xf32>
    %243 = arith.mulf %242, %178 : vector<8x8xf32>
    %cst_48 = arith.constant dense<0.000000e+00> : vector<8xf32>
    %244 = vector.multi_reduction <add>, %243, %cst_48 [1] : vector<8x8xf32> to vector<8xf32>
    %245 = vector.shape_cast %244 : vector<8xf32> to vector<8x1xf32>
    %246 = vector.extract_strided_slice %187 {offsets = [0, 1], sizes = [8, 1], strides = [1, 1]} : vector<8x8xf32> to vector<8x1xf32>
    %247 = arith.addf %245, %246 : vector<8x1xf32>
    %248 = vector.broadcast %247 : vector<8x1xf32> to vector<8x64xf32>
    %249 = arith.mulf %248, %190 : vector<8x64xf32>
    %250 = arith.addf %249, %193 : vector<8x64xf32>
    %251 = vector.extract_strided_slice %228 {offsets = [0, 128], sizes = [8, 64], strides = [1, 1]} : vector<8x192xf32> to vector<8x64xf32>
    %252 = arith.addf %250, %251 : vector<8x64xf32>
    %253 = vector.extract_strided_slice %252 {offsets = [0, 0], sizes = [8, 48], strides = [1, 1]} : vector<8x64xf32> to vector<8x48xf32>
    %254 = arith.negf %253 : vector<8x48xf32>
    %255 = math.exp %254 : vector<8x48xf32>
    %cst_49 = arith.constant 1.000000e+00 : f32
    %256 = vector.broadcast %cst_49 : f32 to vector<8x48xf32>
    %257 = arith.addf %256, %255 : vector<8x48xf32>
    %258 = arith.divf %256, %257 : vector<8x48xf32>
    %259 = vector.extract_strided_slice %252 {offsets = [0, 48], sizes = [8, 16], strides = [1, 1]} : vector<8x64xf32> to vector<8x16xf32>
    %260 = math.tanh %259 : vector<8x16xf32>
    %261 = vector.extract_strided_slice %258 {offsets = [0, 0], sizes = [8, 16], strides = [1, 1]} : vector<8x48xf32> to vector<8x16xf32>
    %262 = vector.extract_strided_slice %258 {offsets = [0, 16], sizes = [8, 16], strides = [1, 1]} : vector<8x48xf32> to vector<8x16xf32>
    %263 = vector.extract_strided_slice %258 {offsets = [0, 32], sizes = [8, 16], strides = [1, 1]} : vector<8x48xf32> to vector<8x16xf32>
    %264 = arith.mulf %262, %224 : vector<8x16xf32>
    %265 = arith.mulf %261, %260 : vector<8x16xf32>
    %266 = arith.addf %264, %265 : vector<8x16xf32>
    %267 = math.tanh %266 : vector<8x16xf32>
    %268 = arith.mulf %263, %267 : vector<8x16xf32>
    %269 = tpu.concatenate %268, %266 in 1 : vector<8x16xf32>, vector<8x16xf32> -> vector<8x32xf32>
    %cst_50 = arith.constant dense<0.000000e+00> : vector<8x192xf32>
    %270 = tpu.matmul %269, %180, %cst_50 {dimension_numbers = #tpu.dot_dimension_numbers<[1], [0], [0], [1], [0, 0, 1, 1], [], []>} : vector<8x32xf32>, vector<32x192xf32>, vector<8x192xf32> -> vector<8x192xf32>
    %271 = vector.extract_strided_slice %270 {offsets = [0, 0], sizes = [8, 128], strides = [1, 1]} : vector<8x192xf32> to vector<8x128xf32>
    %272 = arith.addf %176, %271 : vector<8x128xf32>
    %273 = math.tanh %272 : vector<8x128xf32>
    %cst_51 = arith.constant dense<0.000000e+00> : vector<8x8xf32>
    %274 = tpu.matmul %273, %179, %cst_51 {dimension_numbers = #tpu.dot_dimension_numbers<[1], [0], [0], [1], [0, 0, 1, 1], [], []>} : vector<8x128xf32>, vector<128x8xf32>, vector<8x8xf32> -> vector<8x8xf32>
    %cst_52 = arith.constant dense<0xFF800000> : vector<8xf32>
    %275 = vector.multi_reduction <maximumf>, %274, %cst_52 [1] : vector<8x8xf32> to vector<8xf32>
    %276 = vector.shape_cast %275 : vector<8xf32> to vector<8x1xf32>
    %277 = vector.broadcast %276 : vector<8x1xf32> to vector<8x8xf32>
    %278 = arith.subf %274, %277 : vector<8x8xf32>
    %279 = math.exp %278 : vector<8x8xf32>
    %cst_53 = arith.constant dense<0.000000e+00> : vector<8xf32>
    %280 = vector.multi_reduction <add>, %279, %cst_53 [1] : vector<8x8xf32> to vector<8xf32>
    %281 = vector.shape_cast %280 : vector<8xf32> to vector<8x1xf32>
    %282 = tpu.reciprocal %281 {approx = true} : vector<8x1xf32> -> vector<8x1xf32>
    %283 = vector.broadcast %282 : vector<8x1xf32> to vector<8x8xf32>
    %284 = arith.mulf %279, %283 : vector<8x8xf32>
    %285 = arith.mulf %284, %178 : vector<8x8xf32>
    %cst_54 = arith.constant dense<0.000000e+00> : vector<8xf32>
    %286 = vector.multi_reduction <add>, %285, %cst_54 [1] : vector<8x8xf32> to vector<8xf32>
    %287 = vector.shape_cast %286 : vector<8xf32> to vector<8x1xf32>
    %288 = vector.extract_strided_slice %187 {offsets = [0, 2], sizes = [8, 1], strides = [1, 1]} : vector<8x8xf32> to vector<8x1xf32>
    %289 = arith.addf %287, %288 : vector<8x1xf32>
    %290 = vector.broadcast %289 : vector<8x1xf32> to vector<8x64xf32>
    %291 = arith.mulf %290, %190 : vector<8x64xf32>
    %292 = arith.addf %291, %193 : vector<8x64xf32>
    %293 = vector.extract_strided_slice %270 {offsets = [0, 128], sizes = [8, 64], strides = [1, 1]} : vector<8x192xf32> to vector<8x64xf32>
    %294 = arith.addf %292, %293 : vector<8x64xf32>
    %295 = vector.extract_strided_slice %294 {offsets = [0, 0], sizes = [8, 48], strides = [1, 1]} : vector<8x64xf32> to vector<8x48xf32>
    %296 = arith.negf %295 : vector<8x48xf32>
    %297 = math.exp %296 : vector<8x48xf32>
    %cst_55 = arith.constant 1.000000e+00 : f32
    %298 = vector.broadcast %cst_55 : f32 to vector<8x48xf32>
    %299 = arith.addf %298, %297 : vector<8x48xf32>
    %300 = arith.divf %298, %299 : vector<8x48xf32>
    %301 = vector.extract_strided_slice %294 {offsets = [0, 48], sizes = [8, 16], strides = [1, 1]} : vector<8x64xf32> to vector<8x16xf32>
    %302 = math.tanh %301 : vector<8x16xf32>
    %303 = vector.extract_strided_slice %300 {offsets = [0, 0], sizes = [8, 16], strides = [1, 1]} : vector<8x48xf32> to vector<8x16xf32>
    %304 = vector.extract_strided_slice %300 {offsets = [0, 16], sizes = [8, 16], strides = [1, 1]} : vector<8x48xf32> to vector<8x16xf32>
    %305 = vector.extract_strided_slice %300 {offsets = [0, 32], sizes = [8, 16], strides = [1, 1]} : vector<8x48xf32> to vector<8x16xf32>
    %306 = arith.mulf %304, %266 : vector<8x16xf32>
    %307 = arith.mulf %303, %302 : vector<8x16xf32>
    %308 = arith.addf %306, %307 : vector<8x16xf32>
    %309 = math.tanh %308 : vector<8x16xf32>
    %310 = arith.mulf %305, %309 : vector<8x16xf32>
    %311 = tpu.concatenate %310, %308 in 1 : vector<8x16xf32>, vector<8x16xf32> -> vector<8x32xf32>
    %cst_56 = arith.constant dense<0.000000e+00> : vector<8x192xf32>
    %312 = tpu.matmul %311, %180, %cst_56 {dimension_numbers = #tpu.dot_dimension_numbers<[1], [0], [0], [1], [0, 0, 1, 1], [], []>} : vector<8x32xf32>, vector<32x192xf32>, vector<8x192xf32> -> vector<8x192xf32>
    %313 = vector.extract_strided_slice %312 {offsets = [0, 0], sizes = [8, 128], strides = [1, 1]} : vector<8x192xf32> to vector<8x128xf32>
    %314 = arith.addf %176, %313 : vector<8x128xf32>
    %315 = math.tanh %314 : vector<8x128xf32>
    %cst_57 = arith.constant dense<0.000000e+00> : vector<8x8xf32>
    %316 = tpu.matmul %315, %179, %cst_57 {dimension_numbers = #tpu.dot_dimension_numbers<[1], [0], [0], [1], [0, 0, 1, 1], [], []>} : vector<8x128xf32>, vector<128x8xf32>, vector<8x8xf32> -> vector<8x8xf32>
    %cst_58 = arith.constant dense<0xFF800000> : vector<8xf32>
    %317 = vector.multi_reduction <maximumf>, %316, %cst_58 [1] : vector<8x8xf32> to vector<8xf32>
    %318 = vector.shape_cast %317 : vector<8xf32> to vector<8x1xf32>
    %319 = vector.broadcast %318 : vector<8x1xf32> to vector<8x8xf32>
    %320 = arith.subf %316, %319 : vector<8x8xf32>
    %321 = math.exp %320 : vector<8x8xf32>
    %cst_59 = arith.constant dense<0.000000e+00> : vector<8xf32>
    %322 = vector.multi_reduction <add>, %321, %cst_59 [1] : vector<8x8xf32> to vector<8xf32>
    %323 = vector.shape_cast %322 : vector<8xf32> to vector<8x1xf32>
    %324 = tpu.reciprocal %323 {approx = true} : vector<8x1xf32> -> vector<8x1xf32>
    %325 = vector.broadcast %324 : vector<8x1xf32> to vector<8x8xf32>
    %326 = arith.mulf %321, %325 : vector<8x8xf32>
    %327 = arith.mulf %326, %178 : vector<8x8xf32>
    %cst_60 = arith.constant dense<0.000000e+00> : vector<8xf32>
    %328 = vector.multi_reduction <add>, %327, %cst_60 [1] : vector<8x8xf32> to vector<8xf32>
    %329 = vector.shape_cast %328 : vector<8xf32> to vector<8x1xf32>
    %330 = vector.extract_strided_slice %187 {offsets = [0, 3], sizes = [8, 1], strides = [1, 1]} : vector<8x8xf32> to vector<8x1xf32>
    %331 = arith.addf %329, %330 : vector<8x1xf32>
    %332 = vector.broadcast %331 : vector<8x1xf32> to vector<8x64xf32>
    %333 = arith.mulf %332, %190 : vector<8x64xf32>
    %334 = arith.addf %333, %193 : vector<8x64xf32>
    %335 = vector.extract_strided_slice %312 {offsets = [0, 128], sizes = [8, 64], strides = [1, 1]} : vector<8x192xf32> to vector<8x64xf32>
    %336 = arith.addf %334, %335 : vector<8x64xf32>
    %337 = vector.extract_strided_slice %336 {offsets = [0, 0], sizes = [8, 48], strides = [1, 1]} : vector<8x64xf32> to vector<8x48xf32>
    %338 = arith.negf %337 : vector<8x48xf32>
    %339 = math.exp %338 : vector<8x48xf32>
    %cst_61 = arith.constant 1.000000e+00 : f32
    %340 = vector.broadcast %cst_61 : f32 to vector<8x48xf32>
    %341 = arith.addf %340, %339 : vector<8x48xf32>
    %342 = arith.divf %340, %341 : vector<8x48xf32>
    %343 = vector.extract_strided_slice %336 {offsets = [0, 48], sizes = [8, 16], strides = [1, 1]} : vector<8x64xf32> to vector<8x16xf32>
    %344 = math.tanh %343 : vector<8x16xf32>
    %345 = vector.extract_strided_slice %342 {offsets = [0, 0], sizes = [8, 16], strides = [1, 1]} : vector<8x48xf32> to vector<8x16xf32>
    %346 = vector.extract_strided_slice %342 {offsets = [0, 16], sizes = [8, 16], strides = [1, 1]} : vector<8x48xf32> to vector<8x16xf32>
    %347 = vector.extract_strided_slice %342 {offsets = [0, 32], sizes = [8, 16], strides = [1, 1]} : vector<8x48xf32> to vector<8x16xf32>
    %348 = arith.mulf %346, %308 : vector<8x16xf32>
    %349 = arith.mulf %345, %344 : vector<8x16xf32>
    %350 = arith.addf %348, %349 : vector<8x16xf32>
    %351 = math.tanh %350 : vector<8x16xf32>
    %352 = arith.mulf %347, %351 : vector<8x16xf32>
    %353 = tpu.concatenate %352, %350 in 1 : vector<8x16xf32>, vector<8x16xf32> -> vector<8x32xf32>
    %cst_62 = arith.constant dense<0.000000e+00> : vector<8x192xf32>
    %354 = tpu.matmul %353, %180, %cst_62 {dimension_numbers = #tpu.dot_dimension_numbers<[1], [0], [0], [1], [0, 0, 1, 1], [], []>} : vector<8x32xf32>, vector<32x192xf32>, vector<8x192xf32> -> vector<8x192xf32>
    %355 = vector.extract_strided_slice %354 {offsets = [0, 0], sizes = [8, 128], strides = [1, 1]} : vector<8x192xf32> to vector<8x128xf32>
    %356 = arith.addf %176, %355 : vector<8x128xf32>
    %357 = math.tanh %356 : vector<8x128xf32>
    %cst_63 = arith.constant dense<0.000000e+00> : vector<8x8xf32>
    %358 = tpu.matmul %357, %179, %cst_63 {dimension_numbers = #tpu.dot_dimension_numbers<[1], [0], [0], [1], [0, 0, 1, 1], [], []>} : vector<8x128xf32>, vector<128x8xf32>, vector<8x8xf32> -> vector<8x8xf32>
    %cst_64 = arith.constant dense<0xFF800000> : vector<8xf32>
    %359 = vector.multi_reduction <maximumf>, %358, %cst_64 [1] : vector<8x8xf32> to vector<8xf32>
    %360 = vector.shape_cast %359 : vector<8xf32> to vector<8x1xf32>
    %361 = vector.broadcast %360 : vector<8x1xf32> to vector<8x8xf32>
    %362 = arith.subf %358, %361 : vector<8x8xf32>
    %363 = math.exp %362 : vector<8x8xf32>
    %cst_65 = arith.constant dense<0.000000e+00> : vector<8xf32>
    %364 = vector.multi_reduction <add>, %363, %cst_65 [1] : vector<8x8xf32> to vector<8xf32>
    %365 = vector.shape_cast %364 : vector<8xf32> to vector<8x1xf32>
    %366 = tpu.reciprocal %365 {approx = true} : vector<8x1xf32> -> vector<8x1xf32>
    %367 = vector.broadcast %366 : vector<8x1xf32> to vector<8x8xf32>
    %368 = arith.mulf %363, %367 : vector<8x8xf32>
    %369 = arith.mulf %368, %178 : vector<8x8xf32>
    %cst_66 = arith.constant dense<0.000000e+00> : vector<8xf32>
    %370 = vector.multi_reduction <add>, %369, %cst_66 [1] : vector<8x8xf32> to vector<8xf32>
    %371 = vector.shape_cast %370 : vector<8xf32> to vector<8x1xf32>
    %372 = vector.extract_strided_slice %187 {offsets = [0, 4], sizes = [8, 1], strides = [1, 1]} : vector<8x8xf32> to vector<8x1xf32>
    %373 = arith.addf %371, %372 : vector<8x1xf32>
    %374 = vector.broadcast %373 : vector<8x1xf32> to vector<8x64xf32>
    %375 = arith.mulf %374, %190 : vector<8x64xf32>
    %376 = arith.addf %375, %193 : vector<8x64xf32>
    %377 = vector.extract_strided_slice %354 {offsets = [0, 128], sizes = [8, 64], strides = [1, 1]} : vector<8x192xf32> to vector<8x64xf32>
    %378 = arith.addf %376, %377 : vector<8x64xf32>
    %379 = vector.extract_strided_slice %378 {offsets = [0, 0], sizes = [8, 48], strides = [1, 1]} : vector<8x64xf32> to vector<8x48xf32>
    %380 = arith.negf %379 : vector<8x48xf32>
    %381 = math.exp %380 : vector<8x48xf32>
    %cst_67 = arith.constant 1.000000e+00 : f32
    %382 = vector.broadcast %cst_67 : f32 to vector<8x48xf32>
    %383 = arith.addf %382, %381 : vector<8x48xf32>
    %384 = arith.divf %382, %383 : vector<8x48xf32>
    %385 = vector.extract_strided_slice %378 {offsets = [0, 48], sizes = [8, 16], strides = [1, 1]} : vector<8x64xf32> to vector<8x16xf32>
    %386 = math.tanh %385 : vector<8x16xf32>
    %387 = vector.extract_strided_slice %384 {offsets = [0, 0], sizes = [8, 16], strides = [1, 1]} : vector<8x48xf32> to vector<8x16xf32>
    %388 = vector.extract_strided_slice %384 {offsets = [0, 16], sizes = [8, 16], strides = [1, 1]} : vector<8x48xf32> to vector<8x16xf32>
    %389 = vector.extract_strided_slice %384 {offsets = [0, 32], sizes = [8, 16], strides = [1, 1]} : vector<8x48xf32> to vector<8x16xf32>
    %390 = arith.mulf %388, %350 : vector<8x16xf32>
    %391 = arith.mulf %387, %386 : vector<8x16xf32>
    %392 = arith.addf %390, %391 : vector<8x16xf32>
    %393 = math.tanh %392 : vector<8x16xf32>
    %394 = arith.mulf %389, %393 : vector<8x16xf32>
    %395 = tpu.concatenate %394, %392 in 1 : vector<8x16xf32>, vector<8x16xf32> -> vector<8x32xf32>
    %cst_68 = arith.constant dense<0.000000e+00> : vector<8x192xf32>
    %396 = tpu.matmul %395, %180, %cst_68 {dimension_numbers = #tpu.dot_dimension_numbers<[1], [0], [0], [1], [0, 0, 1, 1], [], []>} : vector<8x32xf32>, vector<32x192xf32>, vector<8x192xf32> -> vector<8x192xf32>
    %397 = vector.extract_strided_slice %396 {offsets = [0, 0], sizes = [8, 128], strides = [1, 1]} : vector<8x192xf32> to vector<8x128xf32>
    %398 = arith.addf %176, %397 : vector<8x128xf32>
    %399 = math.tanh %398 : vector<8x128xf32>
    %cst_69 = arith.constant dense<0.000000e+00> : vector<8x8xf32>
    %400 = tpu.matmul %399, %179, %cst_69 {dimension_numbers = #tpu.dot_dimension_numbers<[1], [0], [0], [1], [0, 0, 1, 1], [], []>} : vector<8x128xf32>, vector<128x8xf32>, vector<8x8xf32> -> vector<8x8xf32>
    %cst_70 = arith.constant dense<0xFF800000> : vector<8xf32>
    %401 = vector.multi_reduction <maximumf>, %400, %cst_70 [1] : vector<8x8xf32> to vector<8xf32>
    %402 = vector.shape_cast %401 : vector<8xf32> to vector<8x1xf32>
    %403 = vector.broadcast %402 : vector<8x1xf32> to vector<8x8xf32>
    %404 = arith.subf %400, %403 : vector<8x8xf32>
    %405 = math.exp %404 : vector<8x8xf32>
    %cst_71 = arith.constant dense<0.000000e+00> : vector<8xf32>
    %406 = vector.multi_reduction <add>, %405, %cst_71 [1] : vector<8x8xf32> to vector<8xf32>
    %407 = vector.shape_cast %406 : vector<8xf32> to vector<8x1xf32>
    %408 = tpu.reciprocal %407 {approx = true} : vector<8x1xf32> -> vector<8x1xf32>
    %409 = vector.broadcast %408 : vector<8x1xf32> to vector<8x8xf32>
    %410 = arith.mulf %405, %409 : vector<8x8xf32>
    %411 = arith.mulf %410, %178 : vector<8x8xf32>
    %cst_72 = arith.constant dense<0.000000e+00> : vector<8xf32>
    %412 = vector.multi_reduction <add>, %411, %cst_72 [1] : vector<8x8xf32> to vector<8xf32>
    %413 = vector.shape_cast %412 : vector<8xf32> to vector<8x1xf32>
    %414 = vector.extract_strided_slice %187 {offsets = [0, 5], sizes = [8, 1], strides = [1, 1]} : vector<8x8xf32> to vector<8x1xf32>
    %415 = arith.addf %413, %414 : vector<8x1xf32>
    %416 = vector.broadcast %415 : vector<8x1xf32> to vector<8x64xf32>
    %417 = arith.mulf %416, %190 : vector<8x64xf32>
    %418 = arith.addf %417, %193 : vector<8x64xf32>
    %419 = vector.extract_strided_slice %396 {offsets = [0, 128], sizes = [8, 64], strides = [1, 1]} : vector<8x192xf32> to vector<8x64xf32>
    %420 = arith.addf %418, %419 : vector<8x64xf32>
    %421 = vector.extract_strided_slice %420 {offsets = [0, 0], sizes = [8, 48], strides = [1, 1]} : vector<8x64xf32> to vector<8x48xf32>
    %422 = arith.negf %421 : vector<8x48xf32>
    %423 = math.exp %422 : vector<8x48xf32>
    %cst_73 = arith.constant 1.000000e+00 : f32
    %424 = vector.broadcast %cst_73 : f32 to vector<8x48xf32>
    %425 = arith.addf %424, %423 : vector<8x48xf32>
    %426 = arith.divf %424, %425 : vector<8x48xf32>
    %427 = vector.extract_strided_slice %420 {offsets = [0, 48], sizes = [8, 16], strides = [1, 1]} : vector<8x64xf32> to vector<8x16xf32>
    %428 = math.tanh %427 : vector<8x16xf32>
    %429 = vector.extract_strided_slice %426 {offsets = [0, 0], sizes = [8, 16], strides = [1, 1]} : vector<8x48xf32> to vector<8x16xf32>
    %430 = vector.extract_strided_slice %426 {offsets = [0, 16], sizes = [8, 16], strides = [1, 1]} : vector<8x48xf32> to vector<8x16xf32>
    %431 = vector.extract_strided_slice %426 {offsets = [0, 32], sizes = [8, 16], strides = [1, 1]} : vector<8x48xf32> to vector<8x16xf32>
    %432 = arith.mulf %430, %392 : vector<8x16xf32>
    %433 = arith.mulf %429, %428 : vector<8x16xf32>
    %434 = arith.addf %432, %433 : vector<8x16xf32>
    %435 = math.tanh %434 : vector<8x16xf32>
    %436 = arith.mulf %431, %435 : vector<8x16xf32>
    %437 = tpu.concatenate %436, %434 in 1 : vector<8x16xf32>, vector<8x16xf32> -> vector<8x32xf32>
    %cst_74 = arith.constant dense<0.000000e+00> : vector<8x192xf32>
    %438 = tpu.matmul %437, %180, %cst_74 {dimension_numbers = #tpu.dot_dimension_numbers<[1], [0], [0], [1], [0, 0, 1, 1], [], []>} : vector<8x32xf32>, vector<32x192xf32>, vector<8x192xf32> -> vector<8x192xf32>
    %439 = vector.extract_strided_slice %438 {offsets = [0, 0], sizes = [8, 128], strides = [1, 1]} : vector<8x192xf32> to vector<8x128xf32>
    %440 = arith.addf %176, %439 : vector<8x128xf32>
    %441 = math.tanh %440 : vector<8x128xf32>
    %cst_75 = arith.constant dense<0.000000e+00> : vector<8x8xf32>
    %442 = tpu.matmul %441, %179, %cst_75 {dimension_numbers = #tpu.dot_dimension_numbers<[1], [0], [0], [1], [0, 0, 1, 1], [], []>} : vector<8x128xf32>, vector<128x8xf32>, vector<8x8xf32> -> vector<8x8xf32>
    %cst_76 = arith.constant dense<0xFF800000> : vector<8xf32>
    %443 = vector.multi_reduction <maximumf>, %442, %cst_76 [1] : vector<8x8xf32> to vector<8xf32>
    %444 = vector.shape_cast %443 : vector<8xf32> to vector<8x1xf32>
    %445 = vector.broadcast %444 : vector<8x1xf32> to vector<8x8xf32>
    %446 = arith.subf %442, %445 : vector<8x8xf32>
    %447 = math.exp %446 : vector<8x8xf32>
    %cst_77 = arith.constant dense<0.000000e+00> : vector<8xf32>
    %448 = vector.multi_reduction <add>, %447, %cst_77 [1] : vector<8x8xf32> to vector<8xf32>
    %449 = vector.shape_cast %448 : vector<8xf32> to vector<8x1xf32>
    %450 = tpu.reciprocal %449 {approx = true} : vector<8x1xf32> -> vector<8x1xf32>
    %451 = vector.broadcast %450 : vector<8x1xf32> to vector<8x8xf32>
    %452 = arith.mulf %447, %451 : vector<8x8xf32>
    %453 = arith.mulf %452, %178 : vector<8x8xf32>
    %cst_78 = arith.constant dense<0.000000e+00> : vector<8xf32>
    %454 = vector.multi_reduction <add>, %453, %cst_78 [1] : vector<8x8xf32> to vector<8xf32>
    %455 = vector.shape_cast %454 : vector<8xf32> to vector<8x1xf32>
    %456 = vector.extract_strided_slice %187 {offsets = [0, 6], sizes = [8, 1], strides = [1, 1]} : vector<8x8xf32> to vector<8x1xf32>
    %457 = arith.addf %455, %456 : vector<8x1xf32>
    %458 = vector.broadcast %457 : vector<8x1xf32> to vector<8x64xf32>
    %459 = arith.mulf %458, %190 : vector<8x64xf32>
    %460 = arith.addf %459, %193 : vector<8x64xf32>
    %461 = vector.extract_strided_slice %438 {offsets = [0, 128], sizes = [8, 64], strides = [1, 1]} : vector<8x192xf32> to vector<8x64xf32>
    %462 = arith.addf %460, %461 : vector<8x64xf32>
    %463 = vector.extract_strided_slice %462 {offsets = [0, 0], sizes = [8, 48], strides = [1, 1]} : vector<8x64xf32> to vector<8x48xf32>
    %464 = arith.negf %463 : vector<8x48xf32>
    %465 = math.exp %464 : vector<8x48xf32>
    %cst_79 = arith.constant 1.000000e+00 : f32
    %466 = vector.broadcast %cst_79 : f32 to vector<8x48xf32>
    %467 = arith.addf %466, %465 : vector<8x48xf32>
    %468 = arith.divf %466, %467 : vector<8x48xf32>
    %469 = vector.extract_strided_slice %462 {offsets = [0, 48], sizes = [8, 16], strides = [1, 1]} : vector<8x64xf32> to vector<8x16xf32>
    %470 = math.tanh %469 : vector<8x16xf32>
    %471 = vector.extract_strided_slice %468 {offsets = [0, 0], sizes = [8, 16], strides = [1, 1]} : vector<8x48xf32> to vector<8x16xf32>
    %472 = vector.extract_strided_slice %468 {offsets = [0, 16], sizes = [8, 16], strides = [1, 1]} : vector<8x48xf32> to vector<8x16xf32>
    %473 = vector.extract_strided_slice %468 {offsets = [0, 32], sizes = [8, 16], strides = [1, 1]} : vector<8x48xf32> to vector<8x16xf32>
    %474 = arith.mulf %472, %434 : vector<8x16xf32>
    %475 = arith.mulf %471, %470 : vector<8x16xf32>
    %476 = arith.addf %474, %475 : vector<8x16xf32>
    %477 = math.tanh %476 : vector<8x16xf32>
    %478 = arith.mulf %473, %477 : vector<8x16xf32>
    %479 = tpu.concatenate %478, %476 in 1 : vector<8x16xf32>, vector<8x16xf32> -> vector<8x32xf32>
    %cst_80 = arith.constant dense<0.000000e+00> : vector<8x192xf32>
    %480 = tpu.matmul %479, %180, %cst_80 {dimension_numbers = #tpu.dot_dimension_numbers<[1], [0], [0], [1], [0, 0, 1, 1], [], []>} : vector<8x32xf32>, vector<32x192xf32>, vector<8x192xf32> -> vector<8x192xf32>
    %481 = vector.extract_strided_slice %480 {offsets = [0, 0], sizes = [8, 128], strides = [1, 1]} : vector<8x192xf32> to vector<8x128xf32>
    %482 = arith.addf %176, %481 : vector<8x128xf32>
    %483 = math.tanh %482 : vector<8x128xf32>
    %cst_81 = arith.constant dense<0.000000e+00> : vector<8x8xf32>
    %484 = tpu.matmul %483, %179, %cst_81 {dimension_numbers = #tpu.dot_dimension_numbers<[1], [0], [0], [1], [0, 0, 1, 1], [], []>} : vector<8x128xf32>, vector<128x8xf32>, vector<8x8xf32> -> vector<8x8xf32>
    %cst_82 = arith.constant dense<0xFF800000> : vector<8xf32>
    %485 = vector.multi_reduction <maximumf>, %484, %cst_82 [1] : vector<8x8xf32> to vector<8xf32>
    %486 = vector.shape_cast %485 : vector<8xf32> to vector<8x1xf32>
    %487 = vector.broadcast %486 : vector<8x1xf32> to vector<8x8xf32>
    %488 = arith.subf %484, %487 : vector<8x8xf32>
    %489 = math.exp %488 : vector<8x8xf32>
    %cst_83 = arith.constant dense<0.000000e+00> : vector<8xf32>
    %490 = vector.multi_reduction <add>, %489, %cst_83 [1] : vector<8x8xf32> to vector<8xf32>
    %491 = vector.shape_cast %490 : vector<8xf32> to vector<8x1xf32>
    %492 = tpu.reciprocal %491 {approx = true} : vector<8x1xf32> -> vector<8x1xf32>
    %493 = vector.broadcast %492 : vector<8x1xf32> to vector<8x8xf32>
    %494 = arith.mulf %489, %493 : vector<8x8xf32>
    %495 = arith.mulf %494, %178 : vector<8x8xf32>
    %cst_84 = arith.constant dense<0.000000e+00> : vector<8xf32>
    %496 = vector.multi_reduction <add>, %495, %cst_84 [1] : vector<8x8xf32> to vector<8xf32>
    %497 = vector.shape_cast %496 : vector<8xf32> to vector<8x1xf32>
    %498 = vector.extract_strided_slice %187 {offsets = [0, 7], sizes = [8, 1], strides = [1, 1]} : vector<8x8xf32> to vector<8x1xf32>
    %499 = arith.addf %497, %498 : vector<8x1xf32>
    %500 = vector.broadcast %499 : vector<8x1xf32> to vector<8x64xf32>
    %501 = arith.mulf %500, %190 : vector<8x64xf32>
    %502 = arith.addf %501, %193 : vector<8x64xf32>
    %503 = vector.extract_strided_slice %480 {offsets = [0, 128], sizes = [8, 64], strides = [1, 1]} : vector<8x192xf32> to vector<8x64xf32>
    %504 = arith.addf %502, %503 : vector<8x64xf32>
    %505 = vector.extract_strided_slice %504 {offsets = [0, 0], sizes = [8, 48], strides = [1, 1]} : vector<8x64xf32> to vector<8x48xf32>
    %506 = arith.negf %505 : vector<8x48xf32>
    %507 = math.exp %506 : vector<8x48xf32>
    %cst_85 = arith.constant 1.000000e+00 : f32
    %508 = vector.broadcast %cst_85 : f32 to vector<8x48xf32>
    %509 = arith.addf %508, %507 : vector<8x48xf32>
    %510 = arith.divf %508, %509 : vector<8x48xf32>
    %511 = vector.extract_strided_slice %504 {offsets = [0, 48], sizes = [8, 16], strides = [1, 1]} : vector<8x64xf32> to vector<8x16xf32>
    %512 = math.tanh %511 : vector<8x16xf32>
    %513 = vector.extract_strided_slice %510 {offsets = [0, 0], sizes = [8, 16], strides = [1, 1]} : vector<8x48xf32> to vector<8x16xf32>
    %514 = vector.extract_strided_slice %510 {offsets = [0, 16], sizes = [8, 16], strides = [1, 1]} : vector<8x48xf32> to vector<8x16xf32>
    %515 = vector.extract_strided_slice %510 {offsets = [0, 32], sizes = [8, 16], strides = [1, 1]} : vector<8x48xf32> to vector<8x16xf32>
    %516 = arith.mulf %514, %476 : vector<8x16xf32>
    %517 = arith.mulf %513, %512 : vector<8x16xf32>
    %518 = arith.addf %516, %517 : vector<8x16xf32>
    %519 = math.tanh %518 : vector<8x16xf32>
    %520 = arith.mulf %515, %519 : vector<8x16xf32>
    %c472 = arith.constant 472 : index
    %c0_86 = arith.constant 0 : index
    %521 = vector.load %arg1[%c472, %c0_86] : memref<536x128xf32, #tpu.memory_space<vmem>>, vector<16x32xf32>
    %cst_87 = arith.constant dense<0.000000e+00> : vector<8x32xf32>
    %522 = tpu.matmul %520, %521, %cst_87 {dimension_numbers = #tpu.dot_dimension_numbers<[1], [0], [0], [1], [0, 0, 1, 1], [], []>} : vector<8x16xf32>, vector<16x32xf32>, vector<8x32xf32> -> vector<8x32xf32>
    %c488 = arith.constant 488 : index
    %c0_88 = arith.constant 0 : index
    %523 = vector.load %arg1[%c488, %c0_88] : memref<536x128xf32, #tpu.memory_space<vmem>>, vector<1x32xf32>
    %524 = vector.broadcast %523 : vector<1x32xf32> to vector<8x32xf32>
    %525 = arith.addf %522, %524 : vector<8x32xf32>
    %526 = math.tanh %525 : vector<8x32xf32>
    %c496 = arith.constant 496 : index
    %c0_89 = arith.constant 0 : index
    %527 = vector.load %arg1[%c496, %c0_89] : memref<536x128xf32, #tpu.memory_space<vmem>>, vector<32x4xf32>
    %cst_90 = arith.constant dense<0.000000e+00> : vector<8x4xf32>
    %528 = tpu.matmul %526, %527, %cst_90 {dimension_numbers = #tpu.dot_dimension_numbers<[1], [0], [0], [1], [0, 0, 1, 1], [], []>} : vector<8x32xf32>, vector<32x4xf32>, vector<8x4xf32> -> vector<8x4xf32>
    %c528 = arith.constant 528 : index
    %c0_91 = arith.constant 0 : index
    %529 = vector.load %arg1[%c528, %c0_91] : memref<536x128xf32, #tpu.memory_space<vmem>>, vector<1x4xf32>
    %530 = vector.broadcast %529 : vector<1x4xf32> to vector<8x4xf32>
    %531 = arith.addf %528, %530 : vector<8x4xf32>
    %532 = arith.negf %531 : vector<8x4xf32>
    %533 = math.exp %532 : vector<8x4xf32>
    %cst_92 = arith.constant 1.000000e+00 : f32
    %534 = vector.broadcast %cst_92 : f32 to vector<8x4xf32>
    %535 = arith.addf %534, %533 : vector<8x4xf32>
    %536 = arith.divf %534, %535 : vector<8x4xf32>
    %537 = vector.extract_strided_slice %536 {offsets = [0, 0], sizes = [2, 4], strides = [1, 1]} : vector<8x4xf32> to vector<2x4xf32>
    %538 = vector.extract_strided_slice %536 {offsets = [2, 0], sizes = [2, 4], strides = [1, 1]} : vector<8x4xf32> to vector<2x4xf32>
    %539 = arith.maximumf %537, %538 : vector<2x4xf32>
    %540 = vector.extract_strided_slice %536 {offsets = [4, 0], sizes = [2, 4], strides = [1, 1]} : vector<8x4xf32> to vector<2x4xf32>
    %541 = arith.maximumf %539, %540 : vector<2x4xf32>
    %542 = vector.extract_strided_slice %536 {offsets = [6, 0], sizes = [2, 4], strides = [1, 1]} : vector<8x4xf32> to vector<2x4xf32>
    %543 = arith.maximumf %541, %542 : vector<2x4xf32>
    %c0_93 = arith.constant 0 : index
    %c0_94 = arith.constant 0 : index
    %544 = vector.load %arg4[%c0_93, %c0_94] : memref<2x4xf32, #tpu.memory_space<vmem>>, vector<2x4xf32>
    tpu.vector_store %arg4[%c0_93, %c0_94], %543 {strides = array<i32>} : memref<2x4xf32, #tpu.memory_space<vmem>>, vector<2x4xf32>,
    return
  }
}

</mosaic_0001>

<llo_original>
// kernel: tpu_custom_call.1
$region0: #{tpu_custom_call.1}
  #allocation0 [shape = 'u32[]', space=smem, size = 0x4, offset = 0x4, fixed_abs, tag = 'smem constant byte address 0x4 - core index']
  #allocation1 [shape = 'u32[144,128]{1,0:T(1,128)}', space=vmem, size = 0x12000, scoped, tag = 'internal scratch']
  %s0 = inlined_call_operand.hbm [shape: f32[8,40], index: 0, kind: input, shape index: {}]
  %s1 = inlined_call_operand.hbm [shape: f32[536,128], index: 1, kind: input, shape index: {}]
  %s2 = inlined_call_operand.hbm [shape: f32[33,512], index: 2, kind: input, shape index: {}]
  %s3 = inlined_call_operand.hbm [shape: f32[32,192], index: 3, kind: input, shape index: {}]
  %s4 = inlined_call_operand.hbm [shape: f32[2,4], index: 4, kind: output, shape index: {}]
  %s5 = sld [smem:[#allocation0]]
  $region42: #{tpu_custom_call.1} parent=0
    _
  %s7 = ssub.s32 1, %s5
  %s8 = scalar_select 0, %s7, %s5
  $region1: #{tpu_custom_call.1} parent=0
    #allocation2 [shape = 'u8[4096]{0}', space=vmem, size = 0x1000, scoped, tag = 'input window, operand 0, single buffered']
    #allocation3 [shape = 's32[1]{0}', space=sflag, size = 0x4, scoped, tag = 'scoped memory for tpu_custom_call.1']
    #allocation4 [shape = 's32[1]{0}', space=sflag, size = 0x4, scoped, tag = 'scoped memory for tpu_custom_call.1']
    #allocation5 [shape = 'u8[274432]{0}', space=vmem, size = 0x43000, scoped, tag = 'input window, operand 1, single buffered']
    #allocation6 [shape = 's32[1]{0}', space=sflag, size = 0x4, scoped, tag = 'scoped memory for tpu_custom_call.1']
    #allocation7 [shape = 'u8[81920]{0}', space=vmem, size = 0x14000, scoped, tag = 'input window, operand 2, single buffered']
    #allocation8 [shape = 'u8[32768]{0}', space=vmem, size = 0x8000, scoped, tag = 'input window, operand 3, single buffered']
    #allocation9 [shape = 's32[1]{0}', space=sflag, size = 0x4, scoped, tag = 'scoped memory for tpu_custom_call.1']
    #allocation10 [shape = 'u8[1024]{0}', space=vmem, size = 0x400, scoped, tag = 'output window, operand 0, single buffered']
    %9 = vsyncpa [#allocation3], 0
    %10 = vsyncpa [#allocation6], 0
    %11 = vsyncpa [#allocation9], 0
    %12 = vsyncpa [#allocation4], 0
    // Predicated region
    $region2: #{tpu_custom_call.1} parent=1 // pred_check
      _
    $region3: #{tpu_custom_call.1} parent=1 // pred_check_branch
      %14 = sbr.rel (0) target = $region5
    $region4: #{tpu_custom_call.1} parent=1 // pred_region
      %s16 = ssub.s32 128, 128
      %17 = vsyncadd [#allocation3], %s16
      %s19 = sshll.u32 [#allocation2], 4
      %s20 = int_to_ptr.vmem [resolvable:$true] %s19
      %22 = dma.hbm_to_vmem [thread:$0]  %s0, 128, %s20, [#allocation3]
    $region5: #{tpu_custom_call.1} parent=1 // pred_fallthru
      _
    // Predicated region
    $region6: #{tpu_custom_call.1} parent=1 // pred_check
      _
    $region7: #{tpu_custom_call.1} parent=1 // pred_check_branch
      %24 = sbr.rel (0) target = $region9
    $region8: #{tpu_custom_call.1} parent=1 // pred_region
      %s26 = ssub.s32 8576, 8576
      %27 = vsyncadd [#allocation6], %s26
      %s28 = sshll.u32 [#allocation5], 4
      %s29 = int_to_ptr.vmem [resolvable:$true] %s28
      %34 = dma.hbm_to_vmem [thread:$0]  %s1, 8576, %s29, [#allocation6], 128, 128, 8
    $region9: #{tpu_custom_call.1} parent=1 // pred_fallthru
      _
    // Predicated region
    $region10: #{tpu_custom_call.1} parent=1 // pred_check
      _
    $region11: #{tpu_custom_call.1} parent=1 // pred_check_branch
      %36 = sbr.rel (0) target = $region13
    $region12: #{tpu_custom_call.1} parent=1 // pred_region
      %s38 = ssub.s32 2560, 2560
      %39 = vsyncadd [#allocation6], %s38
      %s40 = sshll.u32 [#allocation7], 4
      %s41 = int_to_ptr.vmem [resolvable:$true] %s40
      %46 = dma.hbm_to_vmem [thread:$0]  %s2, 2560, %s41, [#allocation6], 512, 512, 32
    $region13: #{tpu_custom_call.1} parent=1 // pred_fallthru
      _
    // Predicated region
    $region14: #{tpu_custom_call.1} parent=1 // pred_check
      _
    $region15: #{tpu_custom_call.1} parent=1 // pred_check_branch
      %48 = sbr.rel (0) target = $region17
    $region16: #{tpu_custom_call.1} parent=1 // pred_region
      %s50 = ssub.s32 1024, 1024
      %51 = vsyncadd [#allocation9], %s50
      %s52 = sshll.u32 [#allocation8], 4
      %s53 = int_to_ptr.vmem [resolvable:$true] %s52
      %58 = dma.hbm_to_vmem [thread:$0]  %s3, 1024, %s53, [#allocation9], 256, 256, 16
    $region17: #{tpu_custom_call.1} parent=1 // pred_fallthru
      _
    // Predicated region
    $region18: #{tpu_custom_call.1} parent=1 // pred_check
      _
    $region19: #{tpu_custom_call.1} parent=1 // pred_check_branch
      %60 = sbr.rel (0) target = $region21
    $region20: #{tpu_custom_call.1} parent=1 // pred_region
      %61 = dma.done [#allocation3], 128
    $region21: #{tpu_custom_call.1} parent=1 // pred_fallthru
      _
    // Predicated region
    $region22: #{tpu_custom_call.1} parent=1 // pred_check
      _
    $region23: #{tpu_custom_call.1} parent=1 // pred_check_branch
      %63 = sbr.rel (0) target = $region25
    $region24: #{tpu_custom_call.1} parent=1 // pred_region
      %64 = dma.done [#allocation6], 8576
    $region25: #{tpu_custom_call.1} parent=1 // pred_fallthru
      _
    // Predicated region
    $region26: #{tpu_custom_call.1} parent=1 // pred_check
      _
    $region27: #{tpu_custom_call.1} parent=1 // pred_check_branch
      %66 = sbr.rel (0) target = $region29
    $region28: #{tpu_custom_call.1} parent=1 // pred_region
      %67 = dma.done [#allocation6], 2560
    $region29: #{tpu_custom_call.1} parent=1 // pred_fallthru
      _
    // Predicated region
    $region30: #{tpu_custom_call.1} parent=1 // pred_check
      _
    $region31: #{tpu_custom_call.1} parent=1 // pred_check_branch
      %69 = sbr.rel (0) target = $region33
    $region32: #{tpu_custom_call.1} parent=1 // pred_region
      %70 = dma.done [#allocation9], 1024
    $region33: #{tpu_custom_call.1} parent=1 // pred_fallthru
      _
    %v71 = vld [vmem:[#allocation2] sm:$0xff]
    %v72 = vld [vmem:[#allocation5] sm:$0xff]
    %v73 = vld [vmem:[#allocation5 + $0x8] sm:$0xff]
    %v74 = vld [vmem:[#allocation5 + $0x10] sm:$0xff]
    %v75 = vld [vmem:[#allocation5 + $0x18] sm:$0xff]
    %vm76 = vcmask 261120
    %v78 = vsel %vm76, %v71, 0
    %80 = vmatprep.subr.mxu0 0.0
    %81 = vmatpush1.msra.mxu0 0.0
    %82 = vmatprep.subr.mxu0 0.0
    %83 = vmatpush1.msra.mxu0 0.0
    %84 = vmatprep.subr.mxu0 0.0
    %85 = vmatpush1.msra.mxu0 0.0
    %86 = vmatprep.subr.mxu0 0.0
    %87 = vmatpush1.msra.mxu0 0.0
    %88 = vmatprep.subr.mxu0 0.0
    %89 = vmatpush1.msra.mxu0 0.0
    %90 = vmatprep.subr.mxu0 0.0
    %91 = vmatpush1.msra.mxu0 0.0
    %92 = vmatprep.subr.mxu0 0.0
    %93 = vmatpush1.msra.mxu0 0.0
    %94 = vmatprep.subr.mxu0 0.0
    %95 = vmatpush1.msra.mxu0 0.0
    %96 = vmatprep.subr.mxu0 0.0
    %97 = vmatpush1.msra.mxu0 0.0
    %98 = vmatprep.subr.mxu0 0.0
    %99 = vmatpush1.msra.mxu0 0.0
    %100 = vmatprep.subr.mxu0 0.0
    %101 = vmatpush1.msra.mxu0 0.0
    %102 = vmatprep.subr.mxu0 0.0
    %103 = vmatpush1.msra.mxu0 0.0
    %104 = vmatprep.subr.mxu0 0.0
    %105 = vmatpush1.msra.mxu0 %v75
    %106 = vmatprep.subr.mxu0 0.0
    %107 = vmatpush1.msra.mxu0 %v74
    %108 = vmatprep.subr.mxu0 0.0
    %109 = vmatpush1.msra.mxu0 %v73
    %110 = vmatprep.subr.mxu0 0.0
    %111 = vmatpush1.msra.mxu0 %v72
    %112 = vmatprep.subr.mxu0 0.0
    %113 = vmatpush2.msra.mxu0 0.0
    %114 = vmatprep.subr.mxu0 0.0
    %115 = vmatpush2.msra.mxu0 0.0
    %116 = vmatprep.subr.mxu0 0.0
    %117 = vmatpush2.msra.mxu0 0.0
    %118 = vmatprep.subr.mxu0 0.0
    %119 = vmatpush2.msra.mxu0 0.0
    %120 = vmatprep.subr.mxu0 0.0
    %121 = vmatpush2.msra.mxu0 0.0
    %122 = vmatprep.subr.mxu0 0.0
    %123 = vmatpush2.msra.mxu0 0.0
    %124 = vmatprep.subr.mxu0 0.0
    %125 = vmatpush2.msra.mxu0 0.0
    %126 = vmatprep.subr.mxu0 0.0
    %127 = vmatpush2.msra.mxu0 0.0
    %128 = vmatprep.subr.mxu0 0.0
    %129 = vmatpush2.msra.mxu0 0.0
    %130 = vmatprep.subr.mxu0 0.0
    %131 = vmatpush2.msra.mxu0 0.0
    %132 = vmatprep.subr.mxu0 0.0
    %133 = vmatpush2.msra.mxu0 0.0
    %134 = vmatprep.subr.mxu0 0.0
    %135 = vmatpush2.msra.mxu0 0.0
    %136 = vmatprep.subr.mxu0 0.0
    %137 = vmatpush2.msra.mxu0 0.0
    %138 = vmatprep.subr.mxu0 0.0
    %139 = vmatpush2.msra.mxu0 0.0
    %140 = vmatprep.subr.mxu0 0.0
    %141 = vmatpush2.msra.mxu0 0.0
    %142 = vmatprep.subr.mxu0 0.0
    %143 = vmatpush2.msra.mxu0 0.0
    %144 = vmatprep.mubr.f32.mxu0 0.0
    %145 = vmatmul.mubr.f32.gmra.mxu0 %v78
    %v146 = vpop.f32.mrf.mxu0
    %v147 = vadd.f32 0.0, %v146
    %v148 = vpop.f32.mrf.mxu0
    %149 = vdwg.mxu0
    %vm150 = vcmask 31744
    %v151 = vsel %vm150, %v147, -inf
    %152 = vmax.xlane.f32.xlu0 %v151
    %v153 = vpop.xlane.xlu0 %152
    %v154 = vsub.f32 %v147, %v153
    %v155 = vmul.f32 %v154, 1.442695
    %v156 = vpow.pop %v155
    %v157 = vsel %vm150, %v156, 0.0
    %158 = vadd.xlane.f32.xlu0 %v157
    %v159 = vpop.xlane.xlu0 %158
    %v160 = vrcp.pop %v159
    %v161 = vmul.f32 %v156, %v160
    %v162 = vld [vmem:[#allocation5 + $0x20] sm:$0xf]
    %v164 = vsel %vm150, %v161, 0
    %vm166 = vcmask 1043456
    %v168 = vsel %vm166, %v162, 0
    %170 = vmatprep.subr.mxu0 0.0
    %171 = vmatpush1.msra.mxu0 0.0
    %172 = vmatprep.subr.mxu0 0.0
    %173 = vmatpush1.msra.mxu0 0.0
    %174 = vmatprep.subr.mxu0 0.0
    %175 = vmatpush1.msra.mxu0 0.0
    %176 = vmatprep.subr.mxu0 0.0
    %177 = vmatpush1.msra.mxu0 0.0
    %178 = vmatprep.subr.mxu0 0.0
    %179 = vmatpush1.msra.mxu0 0.0
    %180 = vmatprep.subr.mxu0 0.0
    %181 = vmatpush1.msra.mxu0 0.0
    %182 = vmatprep.subr.mxu0 0.0
    %183 = vmatpush1.msra.mxu0 0.0
    %184 = vmatprep.subr.mxu0 0.0
    %185 = vmatpush1.msra.mxu0 0.0
    %186 = vmatprep.subr.mxu0 0.0
    %187 = vmatpush1.msra.mxu0 0.0
    %188 = vmatprep.subr.mxu0 0.0
    %189 = vmatpush1.msra.mxu0 0.0
    %190 = vmatprep.subr.mxu0 0.0
    %191 = vmatpush1.msra.mxu0 0.0
    %192 = vmatprep.subr.mxu0 0.0
    %193 = vmatpush1.msra.mxu0 0.0
    %194 = vmatprep.subr.mxu0 0.0
    %195 = vmatpush1.msra.mxu0 0.0
    %196 = vmatprep.subr.mxu0 0.0
    %197 = vmatpush1.msra.mxu0 0.0
    %198 = vmatprep.subr.mxu0 0.0
    %199 = vmatpush1.msra.mxu0 0.0
    %200 = vmatprep.subr.mxu0 0.0
    %201 = vmatpush1.msra.mxu0 %v168
    %202 = vmatprep.subr.mxu0 0.0
    %203 = vmatpush2.msra.mxu0 0.0
    %204 = vmatprep.subr.mxu0 0.0
    %205 = vmatpush2.msra.mxu0 0.0
    %206 = vmatprep.subr.mxu0 0.0
    %207 = vmatpush2.msra.mxu0 0.0
    %208 = vmatprep.subr.mxu0 0.0
    %209 = vmatpush2.msra.mxu0 0.0
    %210 = vmatprep.subr.mxu0 0.0
    %211 = vmatpush2.msra.mxu0 0.0
    %212 = vmatprep.subr.mxu0 0.0
    %213 = vmatpush2.msra.mxu0 0.0
    %214 = vmatprep.subr.mxu0 0.0
    %215 = vmatpush2.msra.mxu0 0.0
    %216 = vmatprep.subr.mxu0 0.0
    %217 = vmatpush2.msra.mxu0 0.0
    %218 = vmatprep.subr.mxu0 0.0
    %219 = vmatpush2.msra.mxu0 0.0
    %220 = vmatprep.subr.mxu0 0.0
    %221 = vmatpush2.msra.mxu0 0.0
    %222 = vmatprep.subr.mxu0 0.0
    %223 = vmatpush2.msra.mxu0 0.0
    %224 = vmatprep.subr.mxu0 0.0
    %225 = vmatpush2.msra.mxu0 0.0
    %226 = vmatprep.subr.mxu0 0.0
    %227 = vmatpush2.msra.mxu0 0.0
    %228 = vmatprep.subr.mxu0 0.0
    %229 = vmatpush2.msra.mxu0 0.0
    %230 = vmatprep.subr.mxu0 0.0
    %231 = vmatpush2.msra.mxu0 0.0
    %232 = vmatprep.subr.mxu0 0.0
    %233 = vmatpush2.msra.mxu0 0.0
    %234 = vmatprep.mubr.f32.mxu0 0.0
    %235 = vmatmul.mubr.f32.gmra.mxu0 %v164
    %v236 = vpop.f32.mrf.mxu0
    %v237 = vadd.f32 0.0, %v236
    %v238 = vpop.f32.mrf.mxu0
    %239 = vdwg.mxu0
    %v240 = vmul.f32 %v71, %v237
    %v241 = vld [vmem:[#allocation7] sm:$0xff]
    %v242 = vld [vmem:[#allocation7 + $0x8] sm:$0xff]
    %v243 = vld [vmem:[#allocation7 + $0x10] sm:$0xff]
    %v244 = vld [vmem:[#allocation7 + $0x18] sm:$0xff]
    %v245 = vld [vmem:[#allocation7 + $0x20] sm:$0xff]
    %v246 = vld [vmem:[#allocation7 + $0x28] sm:$0xff]
    %v247 = vld [vmem:[#allocation7 + $0x30] sm:$0xff]
    %v248 = vld [vmem:[#allocation7 + $0x38] sm:$0xff]
    %v249 = vld [vmem:[#allocation7 + $0x40] sm:$0xff]
    %v250 = vld [vmem:[#allocation7 + $0x48] sm:$0xff]
    %v251 = vld [vmem:[#allocation7 + $0x50] sm:$0xff]
    %v252 = vld [vmem:[#allocation7 + $0x58] sm:$0xff]
    %v253 = vld [vmem:[#allocation7 + $0x60] sm:$0xff]
    %v254 = vld [vmem:[#allocation7 + $0x68] sm:$0xff]
    %v255 = vld [vmem:[#allocation7 + $0x70] sm:$0xff]
    %v256 = vld [vmem:[#allocation7 + $0x78] sm:$0xff]
    %s257 = scalar_lea.vmem [#allocation7], 128
    %v258 = vld [vmem:[%s257] ss:$8 sm:$0xf]
    %v260 = vlaneseq
    %v261 = vshrl.u32 %v260, 7
    %v262 = vsub.s32 0, %v261
    %v263 = vrot.slane %v258, %v262
    %v264 = vlaneseq
    %v265 = vshrl.u32 %v264, 7
    %v266 = vsub.s32 1, %v265
    %v267 = vrot.slane %v258, %v266
    %v268 = vlaneseq
    %v269 = vshrl.u32 %v268, 7
    %v270 = vsub.s32 2, %v269
    %v271 = vrot.slane %v258, %v270
    %v272 = vlaneseq
    %v273 = vshrl.u32 %v272, 7
    %v274 = vsub.s32 3, %v273
    %v275 = vrot.slane %v258, %v274
    %v281 = vsel %vm76, %v240, 0
    %283 = vmatprep.subr.mxu0 0.0
    %284 = vmatpush1.msra.mxu0 0.0
    %285 = vmatprep.subr.mxu0 0.0
    %286 = vmatpush1.msra.mxu0 0.0
    %287 = vmatprep.subr.mxu0 0.0
    %288 = vmatpush1.msra.mxu0 0.0
    %289 = vmatprep.subr.mxu0 0.0
    %290 = vmatpush1.msra.mxu0 0.0
    %291 = vmatprep.subr.mxu0 0.0
    %292 = vmatpush1.msra.mxu0 0.0
    %293 = vmatprep.subr.mxu0 0.0
    %294 = vmatpush1.msra.mxu0 0.0
    %295 = vmatprep.subr.mxu0 0.0
    %296 = vmatpush1.msra.mxu0 0.0
    %297 = vmatprep.subr.mxu0 0.0
    %298 = vmatpush1.msra.mxu0 0.0
    %299 = vmatprep.subr.mxu0 0.0
    %300 = vmatpush1.msra.mxu0 0.0
    %301 = vmatprep.subr.mxu0 0.0
    %302 = vmatpush1.msra.mxu0 0.0
    %303 = vmatprep.subr.mxu0 0.0
    %304 = vmatpush1.msra.mxu0 0.0
    %305 = vmatprep.subr.mxu0 0.0
    %306 = vmatpush1.msra.mxu0 0.0
    %307 = vmatprep.subr.mxu0 %v254
    %308 = vmatpush1.msra.mxu0 %v253
    %309 = vmatprep.subr.mxu0 %v250
    %310 = vmatpush1.msra.mxu0 %v249
    %311 = vmatprep.subr.mxu0 %v246
    %312 = vmatpush1.msra.mxu0 %v245
    %313 = vmatprep.subr.mxu0 %v242
    %314 = vmatpush1.msra.mxu0 %v241
    %315 = vmatprep.subr.mxu0 0.0
    %316 = vmatpush2.msra.mxu0 0.0
    %317 = vmatprep.subr.mxu0 0.0
    %318 = vmatpush2.msra.mxu0 0.0
    %319 = vmatprep.subr.mxu0 0.0
    %320 = vmatpush2.msra.mxu0 0.0
    %321 = vmatprep.subr.mxu0 0.0
    %322 = vmatpush2.msra.mxu0 0.0
    %323 = vmatprep.subr.mxu0 0.0
    %324 = vmatpush2.msra.mxu0 0.0
    %325 = vmatprep.subr.mxu0 0.0
    %326 = vmatpush2.msra.mxu0 0.0
    %327 = vmatprep.subr.mxu0 0.0
    %328 = vmatpush2.msra.mxu0 0.0
    %329 = vmatprep.subr.mxu0 0.0
    %330 = vmatpush2.msra.mxu0 0.0
    %331 = vmatprep.subr.mxu0 0.0
    %332 = vmatpush2.msra.mxu0 0.0
    %333 = vmatprep.subr.mxu0 0.0
    %334 = vmatpush2.msra.mxu0 0.0
    %335 = vmatprep.subr.mxu0 0.0
    %336 = vmatpush2.msra.mxu0 0.0
    %337 = vmatprep.subr.mxu0 0.0
    %338 = vmatpush2.msra.mxu0 0.0
    %339 = vmatprep.subr.mxu0 0.0
    %340 = vmatpush2.msra.mxu0 0.0
    %341 = vmatprep.subr.mxu0 0.0
    %342 = vmatpush2.msra.mxu0 0.0
    %343 = vmatprep.subr.mxu0 0.0
    %344 = vmatpush2.msra.mxu0 0.0
    %345 = vmatprep.subr.mxu0 0.0
    %346 = vmatpush2.msra.mxu0 0.0
    %347 = vmatprep.mubr.f32.mxu0 0.0
    %348 = vmatmul.mubr.f32.gmra.mxu0 %v281
    %v349 = vpop.f32.mrf.mxu0
    %v350 = vadd.f32 %v263, %v349
    %v351 = vpop.f32.mrf.mxu0
    %v352 = vadd.f32 %v267, %v351
    %353 = vdwg.mxu0
    %354 = vmatprep.subr.mxu0 0.0
    %355 = vmatpush1.msra.mxu0 0.0
    %356 = vmatprep.subr.mxu0 0.0
    %357 = vmatpush1.msra.mxu0 0.0
    %358 = vmatprep.subr.mxu0 0.0
    %359 = vmatpush1.msra.mxu0 0.0
    %360 = vmatprep.subr.mxu0 0.0
    %361 = vmatpush1.msra.mxu0 0.0
    %362 = vmatprep.subr.mxu0 0.0
    %363 = vmatpush1.msra.mxu0 0.0
    %364 = vmatprep.subr.mxu0 0.0
    %365 = vmatpush1.msra.mxu0 0.0
    %366 = vmatprep.subr.mxu0 0.0
    %367 = vmatpush1.msra.mxu0 0.0
    %368 = vmatprep.subr.mxu0 0.0
    %369 = vmatpush1.msra.mxu0 0.0
    %370 = vmatprep.subr.mxu0 0.0
    %371 = vmatpush1.msra.mxu0 0.0
    %372 = vmatprep.subr.mxu0 0.0
    %373 = vmatpush1.msra.mxu0 0.0
    %374 = vmatprep.subr.mxu0 0.0
    %375 = vmatpush1.msra.mxu0 0.0
    %376 = vmatprep.subr.mxu0 0.0
    %377 = vmatpush1.msra.mxu0 0.0
    %378 = vmatprep.subr.mxu0 %v256
    %379 = vmatpush1.msra.mxu0 %v255
    %380 = vmatprep.subr.mxu0 %v252
    %381 = vmatpush1.msra.mxu0 %v251
    %382 = vmatprep.subr.mxu0 %v248
    %383 = vmatpush1.msra.mxu0 %v247
    %384 = vmatprep.subr.mxu0 %v244
    %385 = vmatpush1.msra.mxu0 %v243
    %386 = vmatprep.subr.mxu0 0.0
    %387 = vmatpush2.msra.mxu0 0.0
    %388 = vmatprep.subr.mxu0 0.0
    %389 = vmatpush2.msra.mxu0 0.0
    %390 = vmatprep.subr.mxu0 0.0
    %391 = vmatpush2.msra.mxu0 0.0
    %392 = vmatprep.subr.mxu0 0.0
    %393 = vmatpush2.msra.mxu0 0.0
    %394 = vmatprep.subr.mxu0 0.0
    %395 = vmatpush2.msra.mxu0 0.0
    %396 = vmatprep.subr.mxu0 0.0
    %397 = vmatpush2.msra.mxu0 0.0
    %398 = vmatprep.subr.mxu0 0.0
    %399 = vmatpush2.msra.mxu0 0.0
    %400 = vmatprep.subr.mxu0 0.0
    %401 = vmatpush2.msra.mxu0 0.0
    %402 = vmatprep.subr.mxu0 0.0
    %403 = vmatpush2.msra.mxu0 0.0
    %404 = vmatprep.subr.mxu0 0.0
    %405 = vmatpush2.msra.mxu0 0.0
    %406 = vmatprep.subr.mxu0 0.0
    %407 = vmatpush2.msra.mxu0 0.0
    %408 = vmatprep.subr.mxu0 0.0
    %409 = vmatpush2.msra.mxu0 0.0
    %410 = vmatprep.subr.mxu0 0.0
    %411 = vmatpush2.msra.mxu0 0.0
    %412 = vmatprep.subr.mxu0 0.0
    %413 = vmatpush2.msra.mxu0 0.0
    %414 = vmatprep.subr.mxu0 0.0
    %415 = vmatpush2.msra.mxu0 0.0
    %416 = vmatprep.subr.mxu0 0.0
    %417 = vmatpush2.msra.mxu0 0.0
    %418 = vmatprep.mubr.f32.mxu0 0.0
    %419 = vmatmul.mubr.f32.gmra.mxu0 %v281
    %v420 = vpop.f32.mrf.mxu0
    %v421 = vadd.f32 %v271, %v420
    %v422 = vpop.f32.mrf.mxu0
    %v423 = vadd.f32 %v275, %v422
    %424 = vdwg.mxu0
    %v425 = vld [vmem:[#allocation5 + $0x28] sm:$0xff]
    %v426 = vld [vmem:[#allocation5 + $0x30] sm:$0xff]
    %v427 = vxor.u32 %v350, 2147483648
    %v428 = vmul.f32 %v427, 1.442695
    %v429 = vpow.pop %v428
    %v430 = vadd.f32 %v429, 1.0
    %v431 = vrcp.pop %v430
    %v432 = vmul.f32 1.0, %v431
    %v433 = vtanh.pop %v350
    %435 = vrot.lane.b32.xlu0 %v433, 80
    %v436 = vpop.permute.xlu0 %435
    %v438 = vmul.f32 %v432, %v436
    %v439 = vtanh.pop %v438
    %441 = vrot.lane.b32.xlu0 %v439, 32
    %v442 = vpop.permute.xlu0 %441
    %v444 = vmul.f32 %v432, %v442
    %446 = vrot.lane.b32.xlu0 %v444, 96
    %v447 = vpop.permute.xlu0 %446
    %vm448 = vcmask 130048
    %v449 = vsel %vm448, %v447, 0
    %451 = vmatprep.subr.mxu0 0.0
    %452 = vmatpush1.msra.mxu0 0.0
    %453 = vmatprep.subr.mxu0 0.0
    %454 = vmatpush1.msra.mxu0 0.0
    %455 = vmatprep.subr.mxu0 0.0
    %456 = vmatpush1.msra.mxu0 0.0
    %457 = vmatprep.subr.mxu0 0.0
    %458 = vmatpush1.msra.mxu0 0.0
    %459 = vmatprep.subr.mxu0 0.0
    %460 = vmatpush1.msra.mxu0 0.0
    %461 = vmatprep.subr.mxu0 0.0
    %462 = vmatpush1.msra.mxu0 0.0
    %463 = vmatprep.subr.mxu0 0.0
    %464 = vmatpush1.msra.mxu0 0.0
    %465 = vmatprep.subr.mxu0 0.0
    %466 = vmatpush1.msra.mxu0 0.0
    %467 = vmatprep.subr.mxu0 0.0
    %468 = vmatpush1.msra.mxu0 0.0
    %469 = vmatprep.subr.mxu0 0.0
    %470 = vmatpush1.msra.mxu0 0.0
    %471 = vmatprep.subr.mxu0 0.0
    %472 = vmatpush1.msra.mxu0 0.0
    %473 = vmatprep.subr.mxu0 0.0
    %474 = vmatpush1.msra.mxu0 0.0
    %475 = vmatprep.subr.mxu0 0.0
    %476 = vmatpush1.msra.mxu0 0.0
    %477 = vmatprep.subr.mxu0 0.0
    %478 = vmatpush1.msra.mxu0 0.0
    %479 = vmatprep.subr.mxu0 0.0
    %480 = vmatpush1.msra.mxu0 %v426
    %481 = vmatprep.subr.mxu0 0.0
    %482 = vmatpush1.msra.mxu0 %v425
    %483 = vmatprep.subr.mxu0 0.0
    %484 = vmatpush2.msra.mxu0 0.0
    %485 = vmatprep.subr.mxu0 0.0
    %486 = vmatpush2.msra.mxu0 0.0
    %487 = vmatprep.subr.mxu0 0.0
    %488 = vmatpush2.msra.mxu0 0.0
    %489 = vmatprep.subr.mxu0 0.0
    %490 = vmatpush2.msra.mxu0 0.0
    %491 = vmatprep.subr.mxu0 0.0
    %492 = vmatpush2.msra.mxu0 0.0
    %493 = vmatprep.subr.mxu0 0.0
    %494 = vmatpush2.msra.mxu0 0.0
    %495 = vmatprep.subr.mxu0 0.0
    %496 = vmatpush2.msra.mxu0 0.0
    %497 = vmatprep.subr.mxu0 0.0
    %498 = vmatpush2.msra.mxu0 0.0
    %499 = vmatprep.subr.mxu0 0.0
    %500 = vmatpush2.msra.mxu0 0.0
    %501 = vmatprep.subr.mxu0 0.0
    %502 = vmatpush2.msra.mxu0 0.0
    %503 = vmatprep.subr.mxu0 0.0
    %504 = vmatpush2.msra.mxu0 0.0
    %505 = vmatprep.subr.mxu0 0.0
    %506 = vmatpush2.msra.mxu0 0.0
    %507 = vmatprep.subr.mxu0 0.0
    %508 = vmatpush2.msra.mxu0 0.0
    %509 = vmatprep.subr.mxu0 0.0
    %510 = vmatpush2.msra.mxu0 0.0
    %511 = vmatprep.subr.mxu0 0.0
    %512 = vmatpush2.msra.mxu0 0.0
    %513 = vmatprep.subr.mxu0 0.0
    %514 = vmatpush2.msra.mxu0 0.0
    %515 = vmatprep.mubr.f32.mxu0 0.0
    %516 = vmatmul.mubr.f32.gmra.mxu0 %v449
    %v517 = vpop.f32.mrf.mxu0
    %v518 = vadd.f32 0.0, %v517
    %v519 = vpop.f32.mrf.mxu0
    %520 = vdwg.mxu0
    %522 = vrot.lane.b32.xlu0 %v518, 64
    %v523 = vpop.permute.xlu0 %522
    %v525 = vadd.f32 %v350, %v523
    %v526 = vxor.u32 %v525, 2147483648
    %v527 = vmul.f32 %v526, 1.442695
    %v528 = vpow.pop %v527
    %v529 = vadd.f32 %v528, 1.0
    %v530 = vrcp.pop %v529
    %v531 = vmul.f32 1.0, %v530
    %v532 = vtanh.pop %v525
    %534 = vrot.lane.b32.xlu0 %v438, 80
    %v535 = vpop.permute.xlu0 %534
    %v537 = vmul.f32 %v531, %v535
    %539 = vrot.lane.b32.xlu0 %v532, 80
    %v540 = vpop.permute.xlu0 %539
    %v542 = vmul.f32 %v531, %v540
    %544 = vrot.lane.b32.xlu0 %v542, 16
    %v545 = vpop.permute.xlu0 %544
    %v547 = vadd.f32 %v537, %v545
    %v548 = vtanh.pop %v547
    %550 = vrot.lane.b32.xlu0 %v548, 16
    %v551 = vpop.permute.xlu0 %550
    %v553 = vmul.f32 %v531, %v551
    %555 = vrot.lane.b32.xlu0 %v553, 32
    %v556 = vpop.permute.xlu0 %555
    %v557 = vsel %vm448, %v556, 0
    %559 = vmatprep.subr.mxu0 0.0
    %560 = vmatpush1.msra.mxu0 0.0
    %561 = vmatprep.subr.mxu0 0.0
    %562 = vmatpush1.msra.mxu0 0.0
    %563 = vmatprep.subr.mxu0 0.0
    %564 = vmatpush1.msra.mxu0 0.0
    %565 = vmatprep.subr.mxu0 0.0
    %566 = vmatpush1.msra.mxu0 0.0
    %567 = vmatprep.subr.mxu0 0.0
    %568 = vmatpush1.msra.mxu0 0.0
    %569 = vmatprep.subr.mxu0 0.0
    %570 = vmatpush1.msra.mxu0 0.0
    %571 = vmatprep.subr.mxu0 0.0
    %572 = vmatpush1.msra.mxu0 0.0
    %573 = vmatprep.subr.mxu0 0.0
    %574 = vmatpush1.msra.mxu0 0.0
    %575 = vmatprep.subr.mxu0 0.0
    %576 = vmatpush1.msra.mxu0 0.0
    %577 = vmatprep.subr.mxu0 0.0
    %578 = vmatpush1.msra.mxu0 0.0
    %579 = vmatprep.subr.mxu0 0.0
    %580 = vmatpush1.msra.mxu0 0.0
    %581 = vmatprep.subr.mxu0 0.0
    %582 = vmatpush1.msra.mxu0 0.0
    %583 = vmatprep.subr.mxu0 0.0
    %584 = vmatpush1.msra.mxu0 0.0
    %585 = vmatprep.subr.mxu0 0.0
    %586 = vmatpush1.msra.mxu0 0.0
    %587 = vmatprep.subr.mxu0 0.0
    %588 = vmatpush1.msra.mxu0 %v426
    %589 = vmatprep.subr.mxu0 0.0
    %590 = vmatpush1.msra.mxu0 %v425
    %591 = vmatprep.subr.mxu0 0.0
    %592 = vmatpush2.msra.mxu0 0.0
    %593 = vmatprep.subr.mxu0 0.0
    %594 = vmatpush2.msra.mxu0 0.0
    %595 = vmatprep.subr.mxu0 0.0
    %596 = vmatpush2.msra.mxu0 0.0
    %597 = vmatprep.subr.mxu0 0.0
    %598 = vmatpush2.msra.mxu0 0.0
    %599 = vmatprep.subr.mxu0 0.0
    %600 = vmatpush2.msra.mxu0 0.0
    %601 = vmatprep.subr.mxu0 0.0
    %602 = vmatpush2.msra.mxu0 0.0
    %603 = vmatprep.subr.mxu0 0.0
    %604 = vmatpush2.msra.mxu0 0.0
    %605 = vmatprep.subr.mxu0 0.0
    %606 = vmatpush2.msra.mxu0 0.0
    %607 = vmatprep.subr.mxu0 0.0
    %608 = vmatpush2.msra.mxu0 0.0
    %609 = vmatprep.subr.mxu0 0.0
    %610 = vmatpush2.msra.mxu0 0.0
    %611 = vmatprep.subr.mxu0 0.0
    %612 = vmatpush2.msra.mxu0 0.0
    %613 = vmatprep.subr.mxu0 0.0
    %614 = vmatpush2.msra.mxu0 0.0
    %615 = vmatprep.subr.mxu0 0.0
    %616 = vmatpush2.msra.mxu0 0.0
    %617 = vmatprep.subr.mxu0 0.0
    %618 = vmatpush2.msra.mxu0 0.0
    %619 = vmatprep.subr.mxu0 0.0
    %620 = vmatpush2.msra.mxu0 0.0
    %621 = vmatprep.subr.mxu0 0.0
    %622 = vmatpush2.msra.mxu0 0.0
    %623 = vmatprep.mubr.f32.mxu0 0.0
    %624 = vmatmul.mubr.f32.gmra.mxu0 %v557
    %v625 = vpop.f32.mrf.mxu0
    %v626 = vadd.f32 0.0, %v625
    %v627 = vpop.f32.mrf.mxu0
    %628 = vdwg.mxu0
    %v629 = vadd.f32 %v352, %v626
    %v630 = vxor.u32 %v629, 2147483648
    %v631 = vmul.f32 %v630, 1.442695
    %v632 = vpow.pop %v631
    %v633 = vadd.f32 %v632, 1.0
    %v634 = vrcp.pop %v633
    %v635 = vmul.f32 1.0, %v634
    %v636 = vtanh.pop %v629
    %638 = vrot.lane.b32.xlu0 %v547, 64
    %v639 = vpop.permute.xlu0 %638
    %v641 = vmul.f32 %v635, %v639
    %643 = vrot.lane.b32.xlu0 %v636, 80
    %v644 = vpop.permute.xlu0 %643
    %v646 = vmul.f32 %v635, %v644
    %648 = vrot.lane.b32.xlu0 %v646, 16
    %v649 = vpop.permute.xlu0 %648
    %v651 = vadd.f32 %v641, %v649
    %v652 = vtanh.pop %v651
    %654 = vrot.lane.b32.xlu0 %v652, 16
    %v655 = vpop.permute.xlu0 %654
    %v657 = vmul.f32 %v635, %v655
    %659 = vrot.lane.b32.xlu0 %v657, 96
    %v660 = vpop.permute.xlu0 %659
    %v661 = vsel %vm448, %v660, 0
    %663 = vmatprep.subr.mxu0 0.0
    %664 = vmatpush1.msra.mxu0 0.0
    %665 = vmatprep.subr.mxu0 0.0
    %666 = vmatpush1.msra.mxu0 0.0
    %667 = vmatprep.subr.mxu0 0.0
    %668 = vmatpush1.msra.mxu0 0.0
    %669 = vmatprep.subr.mxu0 0.0
    %670 = vmatpush1.msra.mxu0 0.0
    %671 = vmatprep.subr.mxu0 0.0
    %672 = vmatpush1.msra.mxu0 0.0
    %673 = vmatprep.subr.mxu0 0.0
    %674 = vmatpush1.msra.mxu0 0.0
    %675 = vmatprep.subr.mxu0 0.0
    %676 = vmatpush1.msra.mxu0 0.0
    %677 = vmatprep.subr.mxu0 0.0
    %678 = vmatpush1.msra.mxu0 0.0
    %679 = vmatprep.subr.mxu0 0.0
    %680 = vmatpush1.msra.mxu0 0.0
    %681 = vmatprep.subr.mxu0 0.0
    %682 = vmatpush1.msra.mxu0 0.0
    %683 = vmatprep.subr.mxu0 0.0
    %684 = vmatpush1.msra.mxu0 0.0
    %685 = vmatprep.subr.mxu0 0.0
    %686 = vmatpush1.msra.mxu0 0.0
    %687 = vmatprep.subr.mxu0 0.0
    %688 = vmatpush1.msra.mxu0 0.0
    %689 = vmatprep.subr.mxu0 0.0
    %690 = vmatpush1.msra.mxu0 0.0
    %691 = vmatprep.subr.mxu0 0.0
    %692 = vmatpush1.msra.mxu0 %v426
    %693 = vmatprep.subr.mxu0 0.0
    %694 = vmatpush1.msra.mxu0 %v425
    %695 = vmatprep.subr.mxu0 0.0
    %696 = vmatpush2.msra.mxu0 0.0
    %697 = vmatprep.subr.mxu0 0.0
    %698 = vmatpush2.msra.mxu0 0.0
    %699 = vmatprep.subr.mxu0 0.0
    %700 = vmatpush2.msra.mxu0 0.0
    %701 = vmatprep.subr.mxu0 0.0
    %702 = vmatpush2.msra.mxu0 0.0
    %703 = vmatprep.subr.mxu0 0.0
    %704 = vmatpush2.msra.mxu0 0.0
    %705 = vmatprep.subr.mxu0 0.0
    %706 = vmatpush2.msra.mxu0 0.0
    %707 = vmatprep.subr.mxu0 0.0
    %708 = vmatpush2.msra.mxu0 0.0
    %709 = vmatprep.subr.mxu0 0.0
    %710 = vmatpush2.msra.mxu0 0.0
    %711 = vmatprep.subr.mxu0 0.0
    %712 = vmatpush2.msra.mxu0 0.0
    %713 = vmatprep.subr.mxu0 0.0
    %714 = vmatpush2.msra.mxu0 0.0
    %715 = vmatprep.subr.mxu0 0.0
    %716 = vmatpush2.msra.mxu0 0.0
    %717 = vmatprep.subr.mxu0 0.0
    %718 = vmatpush2.msra.mxu0 0.0
    %719 = vmatprep.subr.mxu0 0.0
    %720 = vmatpush2.msra.mxu0 0.0
    %721 = vmatprep.subr.mxu0 0.0
    %722 = vmatpush2.msra.mxu0 0.0
    %723 = vmatprep.subr.mxu0 0.0
    %724 = vmatpush2.msra.mxu0 0.0
    %725 = vmatprep.subr.mxu0 0.0
    %726 = vmatpush2.msra.mxu0 0.0
    %727 = vmatprep.mubr.f32.mxu0 0.0
    %728 = vmatmul.mubr.f32.gmra.mxu0 %v661
    %v729 = vpop.f32.mrf.mxu0
    %v730 = vadd.f32 0.0, %v729
    %v731 = vpop.f32.mrf.mxu0
    %732 = vdwg.mxu0
    %734 = vrot.lane.b32.xlu0 %v730, 64
    %v735 = vpop.permute.xlu0 %734
    %v737 = vadd.f32 %v352, %v735
    %v738 = vxor.u32 %v737, 2147483648
    %v739 = vmul.f32 %v738, 1.442695
    %v740 = vpow.pop %v739
    %v741 = vadd.f32 %v740, 1.0
    %v742 = vrcp.pop %v741
    %v743 = vmul.f32 1.0, %v742
    %v744 = vtanh.pop %v737
    %746 = vrot.lane.b32.xlu0 %v651, 64
    %v747 = vpop.permute.xlu0 %746
    %v749 = vmul.f32 %v743, %v747
    %751 = vrot.lane.b32.xlu0 %v744, 80
    %v752 = vpop.permute.xlu0 %751
    %v754 = vmul.f32 %v743, %v752
    %756 = vrot.lane.b32.xlu0 %v754, 16
    %v757 = vpop.permute.xlu0 %756
    %v759 = vadd.f32 %v749, %v757
    %v760 = vtanh.pop %v759
    %762 = vrot.lane.b32.xlu0 %v760, 16
    %v763 = vpop.permute.xlu0 %762
    %v765 = vmul.f32 %v743, %v763
    %767 = vrot.lane.b32.xlu0 %v765, 32
    %v768 = vpop.permute.xlu0 %767
    %v769 = vsel %vm448, %v768, 0
    %771 = vmatprep.subr.mxu0 0.0
    %772 = vmatpush1.msra.mxu0 0.0
    %773 = vmatprep.subr.mxu0 0.0
    %774 = vmatpush1.msra.mxu0 0.0
    %775 = vmatprep.subr.mxu0 0.0
    %776 = vmatpush1.msra.mxu0 0.0
    %777 = vmatprep.subr.mxu0 0.0
    %778 = vmatpush1.msra.mxu0 0.0
    %779 = vmatprep.subr.mxu0 0.0
    %780 = vmatpush1.msra.mxu0 0.0
    %781 = vmatprep.subr.mxu0 0.0
    %782 = vmatpush1.msra.mxu0 0.0
    %783 = vmatprep.subr.mxu0 0.0
    %784 = vmatpush1.msra.mxu0 0.0
    %785 = vmatprep.subr.mxu0 0.0
    %786 = vmatpush1.msra.mxu0 0.0
    %787 = vmatprep.subr.mxu0 0.0
    %788 = vmatpush1.msra.mxu0 0.0
    %789 = vmatprep.subr.mxu0 0.0
    %790 = vmatpush1.msra.mxu0 0.0
    %791 = vmatprep.subr.mxu0 0.0
    %792 = vmatpush1.msra.mxu0 0.0
    %793 = vmatprep.subr.mxu0 0.0
    %794 = vmatpush1.msra.mxu0 0.0
    %795 = vmatprep.subr.mxu0 0.0
    %796 = vmatpush1.msra.mxu0 0.0
    %797 = vmatprep.subr.mxu0 0.0
    %798 = vmatpush1.msra.mxu0 0.0
    %799 = vmatprep.subr.mxu0 0.0
    %800 = vmatpush1.msra.mxu0 %v426
    %801 = vmatprep.subr.mxu0 0.0
    %802 = vmatpush1.msra.mxu0 %v425
    %803 = vmatprep.subr.mxu0 0.0
    %804 = vmatpush2.msra.mxu0 0.0
    %805 = vmatprep.subr.mxu0 0.0
    %806 = vmatpush2.msra.mxu0 0.0
    %807 = vmatprep.subr.mxu0 0.0
    %808 = vmatpush2.msra.mxu0 0.0
    %809 = vmatprep.subr.mxu0 0.0
    %810 = vmatpush2.msra.mxu0 0.0
    %811 = vmatprep.subr.mxu0 0.0
    %812 = vmatpush2.msra.mxu0 0.0
    %813 = vmatprep.subr.mxu0 0.0
    %814 = vmatpush2.msra.mxu0 0.0
    %815 = vmatprep.subr.mxu0 0.0
    %816 = vmatpush2.msra.mxu0 0.0
    %817 = vmatprep.subr.mxu0 0.0
    %818 = vmatpush2.msra.mxu0 0.0
    %819 = vmatprep.subr.mxu0 0.0
    %820 = vmatpush2.msra.mxu0 0.0
    %821 = vmatprep.subr.mxu0 0.0
    %822 = vmatpush2.msra.mxu0 0.0
    %823 = vmatprep.subr.mxu0 0.0
    %824 = vmatpush2.msra.mxu0 0.0
    %825 = vmatprep.subr.mxu0 0.0
    %826 = vmatpush2.msra.mxu0 0.0
    %827 = vmatprep.subr.mxu0 0.0
    %828 = vmatpush2.msra.mxu0 0.0
    %829 = vmatprep.subr.mxu0 0.0
    %830 = vmatpush2.msra.mxu0 0.0
    %831 = vmatprep.subr.mxu0 0.0
    %832 = vmatpush2.msra.mxu0 0.0
    %833 = vmatprep.subr.mxu0 0.0
    %834 = vmatpush2.msra.mxu0 0.0
    %835 = vmatprep.mubr.f32.mxu0 0.0
    %836 = vmatmul.mubr.f32.gmra.mxu0 %v769
    %v837 = vpop.f32.mrf.mxu0
    %v838 = vadd.f32 0.0, %v837
    %v839 = vpop.f32.mrf.mxu0
    %840 = vdwg.mxu0
    %v841 = vadd.f32 %v421, %v838
    %v842 = vxor.u32 %v841, 2147483648
    %v843 = vmul.f32 %v842, 1.442695
    %v844 = vpow.pop %v843
    %v845 = vadd.f32 %v844, 1.0
    %v846 = vrcp.pop %v845
    %v847 = vmul.f32 1.0, %v846
    %v848 = vtanh.pop %v841
    %850 = vrot.lane.b32.xlu0 %v759, 64
    %v851 = vpop.permute.xlu0 %850
    %v853 = vmul.f32 %v847, %v851
    %855 = vrot.lane.b32.xlu0 %v848, 80
    %v856 = vpop.permute.xlu0 %855
    %v858 = vmul.f32 %v847, %v856
    %860 = vrot.lane.b32.xlu0 %v858, 16
    %v861 = vpop.permute.xlu0 %860
    %v863 = vadd.f32 %v853, %v861
    %v864 = vtanh.pop %v863
    %866 = vrot.lane.b32.xlu0 %v864, 16
    %v867 = vpop.permute.xlu0 %866
    %v869 = vmul.f32 %v847, %v867
    %871 = vrot.lane.b32.xlu0 %v869, 96
    %v872 = vpop.permute.xlu0 %871
    %v873 = vsel %vm448, %v872, 0
    %875 = vmatprep.subr.mxu0 0.0
    %876 = vmatpush1.msra.mxu0 0.0
    %877 = vmatprep.subr.mxu0 0.0
    %878 = vmatpush1.msra.mxu0 0.0
    %879 = vmatprep.subr.mxu0 0.0
    %880 = vmatpush1.msra.mxu0 0.0
    %881 = vmatprep.subr.mxu0 0.0
    %882 = vmatpush1.msra.mxu0 0.0
    %883 = vmatprep.subr.mxu0 0.0
    %884 = vmatpush1.msra.mxu0 0.0
    %885 = vmatprep.subr.mxu0 0.0
    %886 = vmatpush1.msra.mxu0 0.0
    %887 = vmatprep.subr.mxu0 0.0
    %888 = vmatpush1.msra.mxu0 0.0
    %889 = vmatprep.subr.mxu0 0.0
    %890 = vmatpush1.msra.mxu0 0.0
    %891 = vmatprep.subr.mxu0 0.0
    %892 = vmatpush1.msra.mxu0 0.0
    %893 = vmatprep.subr.mxu0 0.0
    %894 = vmatpush1.msra.mxu0 0.0
    %895 = vmatprep.subr.mxu0 0.0
    %896 = vmatpush1.msra.mxu0 0.0
    %897 = vmatprep.subr.mxu0 0.0
    %898 = vmatpush1.msra.mxu0 0.0
    %899 = vmatprep.subr.mxu0 0.0
    %900 = vmatpush1.msra.mxu0 0.0
    %901 = vmatprep.subr.mxu0 0.0
    %902 = vmatpush1.msra.mxu0 0.0
    %903 = vmatprep.subr.mxu0 0.0
    %904 = vmatpush1.msra.mxu0 %v426
    %905 = vmatprep.subr.mxu0 0.0
    %906 = vmatpush1.msra.mxu0 %v425
    %907 = vmatprep.subr.mxu0 0.0
    %908 = vmatpush2.msra.mxu0 0.0
    %909 = vmatprep.subr.mxu0 0.0
    %910 = vmatpush2.msra.mxu0 0.0
    %911 = vmatprep.subr.mxu0 0.0
    %912 = vmatpush2.msra.mxu0 0.0
    %913 = vmatprep.subr.mxu0 0.0
    %914 = vmatpush2.msra.mxu0 0.0
    %915 = vmatprep.subr.mxu0 0.0
    %916 = vmatpush2.msra.mxu0 0.0
    %917 = vmatprep.subr.mxu0 0.0
    %918 = vmatpush2.msra.mxu0 0.0
    %919 = vmatprep.subr.mxu0 0.0
    %920 = vmatpush2.msra.mxu0 0.0
    %921 = vmatprep.subr.mxu0 0.0
    %922 = vmatpush2.msra.mxu0 0.0
    %923 = vmatprep.subr.mxu0 0.0
    %924 = vmatpush2.msra.mxu0 0.0
    %925 = vmatprep.subr.mxu0 0.0
    %926 = vmatpush2.msra.mxu0 0.0
    %927 = vmatprep.subr.mxu0 0.0
    %928 = vmatpush2.msra.mxu0 0.0
    %929 = vmatprep.subr.mxu0 0.0
    %930 = vmatpush2.msra.mxu0 0.0
    %931 = vmatprep.subr.mxu0 0.0
    %932 = vmatpush2.msra.mxu0 0.0
    %933 = vmatprep.subr.mxu0 0.0
    %934 = vmatpush2.msra.mxu0 0.0
    %935 = vmatprep.subr.mxu0 0.0
    %936 = vmatpush2.msra.mxu0 0.0
    %937 = vmatprep.subr.mxu0 0.0
    %938 = vmatpush2.msra.mxu0 0.0
    %939 = vmatprep.mubr.f32.mxu0 0.0
    %940 = vmatmul.mubr.f32.gmra.mxu0 %v873
    %v941 = vpop.f32.mrf.mxu0
    %v942 = vadd.f32 0.0, %v941
    %v943 = vpop.f32.mrf.mxu0
    %944 = vdwg.mxu0
    %946 = vrot.lane.b32.xlu0 %v942, 64
    %v947 = vpop.permute.xlu0 %946
    %v949 = vadd.f32 %v421, %v947
    %v950 = vxor.u32 %v949, 2147483648
    %v951 = vmul.f32 %v950, 1.442695
    %v952 = vpow.pop %v951
    %v953 = vadd.f32 %v952, 1.0
    %v954 = vrcp.pop %v953
    %v955 = vmul.f32 1.0, %v954
    %v956 = vtanh.pop %v949
    %958 = vrot.lane.b32.xlu0 %v863, 64
    %v959 = vpop.permute.xlu0 %958
    %v961 = vmul.f32 %v955, %v959
    %963 = vrot.lane.b32.xlu0 %v956, 80
    %v964 = vpop.permute.xlu0 %963
    %v966 = vmul.f32 %v955, %v964
    %968 = vrot.lane.b32.xlu0 %v966, 16
    %v969 = vpop.permute.xlu0 %968
    %v971 = vadd.f32 %v961, %v969
    %v972 = vtanh.pop %v971
    %974 = vrot.lane.b32.xlu0 %v972, 16
    %v975 = vpop.permute.xlu0 %974
    %v977 = vmul.f32 %v955, %v975
    %979 = vrot.lane.b32.xlu0 %v977, 32
    %v980 = vpop.permute.xlu0 %979
    %v981 = vsel %vm448, %v980, 0
    %983 = vmatprep.subr.mxu0 0.0
    %984 = vmatpush1.msra.mxu0 0.0
    %985 = vmatprep.subr.mxu0 0.0
    %986 = vmatpush1.msra.mxu0 0.0
    %987 = vmatprep.subr.mxu0 0.0
    %988 = vmatpush1.msra.mxu0 0.0
    %989 = vmatprep.subr.mxu0 0.0
    %990 = vmatpush1.msra.mxu0 0.0
    %991 = vmatprep.subr.mxu0 0.0
    %992 = vmatpush1.msra.mxu0 0.0
    %993 = vmatprep.subr.mxu0 0.0
    %994 = vmatpush1.msra.mxu0 0.0
    %995 = vmatprep.subr.mxu0 0.0
    %996 = vmatpush1.msra.mxu0 0.0
    %997 = vmatprep.subr.mxu0 0.0
    %998 = vmatpush1.msra.mxu0 0.0
    %999 = vmatprep.subr.mxu0 0.0
    %1000 = vmatpush1.msra.mxu0 0.0
    %1001 = vmatprep.subr.mxu0 0.0
    %1002 = vmatpush1.msra.mxu0 0.0
    %1003 = vmatprep.subr.mxu0 0.0
    %1004 = vmatpush1.msra.mxu0 0.0
    %1005 = vmatprep.subr.mxu0 0.0
    %1006 = vmatpush1.msra.mxu0 0.0
    %1007 = vmatprep.subr.mxu0 0.0
    %1008 = vmatpush1.msra.mxu0 0.0
    %1009 = vmatprep.subr.mxu0 0.0
    %1010 = vmatpush1.msra.mxu0 0.0
    %1011 = vmatprep.subr.mxu0 0.0
    %1012 = vmatpush1.msra.mxu0 %v426
    %1013 = vmatprep.subr.mxu0 0.0
    %1014 = vmatpush1.msra.mxu0 %v425
    %1015 = vmatprep.subr.mxu0 0.0
    %1016 = vmatpush2.msra.mxu0 0.0
    %1017 = vmatprep.subr.mxu0 0.0
    %1018 = vmatpush2.msra.mxu0 0.0
    %1019 = vmatprep.subr.mxu0 0.0
    %1020 = vmatpush2.msra.mxu0 0.0
    %1021 = vmatprep.subr.mxu0 0.0
    %1022 = vmatpush2.msra.mxu0 0.0
    %1023 = vmatprep.subr.mxu0 0.0
    %1024 = vmatpush2.msra.mxu0 0.0
    %1025 = vmatprep.subr.mxu0 0.0
    %1026 = vmatpush2.msra.mxu0 0.0
    %1027 = vmatprep.subr.mxu0 0.0
    %1028 = vmatpush2.msra.mxu0 0.0
    %1029 = vmatprep.subr.mxu0 0.0
    %1030 = vmatpush2.msra.mxu0 0.0
    %1031 = vmatprep.subr.mxu0 0.0
    %1032 = vmatpush2.msra.mxu0 0.0
    %1033 = vmatprep.subr.mxu0 0.0
    %1034 = vmatpush2.msra.mxu0 0.0
    %1035 = vmatprep.subr.mxu0 0.0
    %1036 = vmatpush2.msra.mxu0 0.0
    %1037 = vmatprep.subr.mxu0 0.0
    %1038 = vmatpush2.msra.mxu0 0.0
    %1039 = vmatprep.subr.mxu0 0.0
    %1040 = vmatpush2.msra.mxu0 0.0
    %1041 = vmatprep.subr.mxu0 0.0
    %1042 = vmatpush2.msra.mxu0 0.0
    %1043 = vmatprep.subr.mxu0 0.0
    %1044 = vmatpush2.msra.mxu0 0.0
    %1045 = vmatprep.subr.mxu0 0.0
    %1046 = vmatpush2.msra.mxu0 0.0
    %1047 = vmatprep.mubr.f32.mxu0 0.0
    %1048 = vmatmul.mubr.f32.gmra.mxu0 %v981
    %v1049 = vpop.f32.mrf.mxu0
    %v1050 = vadd.f32 0.0, %v1049
    %v1051 = vpop.f32.mrf.mxu0
    %1052 = vdwg.mxu0
    %v1053 = vadd.f32 %v423, %v1050
    %v1054 = vxor.u32 %v1053, 2147483648
    %v1055 = vmul.f32 %v1054, 1.442695
    %v1056 = vpow.pop %v1055
    %v1057 = vadd.f32 %v1056, 1.0
    %v1058 = vrcp.pop %v1057
    %v1059 = vmul.f32 1.0, %v1058
    %v1060 = vtanh.pop %v1053
    %1062 = vrot.lane.b32.xlu0 %v971, 64
    %v1063 = vpop.permute.xlu0 %1062
    %v1065 = vmul.f32 %v1059, %v1063
    %1067 = vrot.lane.b32.xlu0 %v1060, 80
    %v1068 = vpop.permute.xlu0 %1067
    %v1070 = vmul.f32 %v1059, %v1068
    %1072 = vrot.lane.b32.xlu0 %v1070, 16
    %v1073 = vpop.permute.xlu0 %1072
    %v1075 = vadd.f32 %v1065, %v1073
    %v1076 = vtanh.pop %v1075
    %1078 = vrot.lane.b32.xlu0 %v1076, 16
    %v1079 = vpop.permute.xlu0 %1078
    %v1081 = vmul.f32 %v1059, %v1079
    %1083 = vrot.lane.b32.xlu0 %v1081, 96
    %v1084 = vpop.permute.xlu0 %1083
    %v1085 = vsel %vm448, %v1084, 0
    %1087 = vmatprep.subr.mxu0 0.0
    %1088 = vmatpush1.msra.mxu0 0.0
    %1089 = vmatprep.subr.mxu0 0.0
    %1090 = vmatpush1.msra.mxu0 0.0
    %1091 = vmatprep.subr.mxu0 0.0
    %1092 = vmatpush1.msra.mxu0 0.0
    %1093 = vmatprep.subr.mxu0 0.0
    %1094 = vmatpush1.msra.mxu0 0.0
    %1095 = vmatprep.subr.mxu0 0.0
    %1096 = vmatpush1.msra.mxu0 0.0
    %1097 = vmatprep.subr.mxu0 0.0
    %1098 = vmatpush1.msra.mxu0 0.0
    %1099 = vmatprep.subr.mxu0 0.0
    %1100 = vmatpush1.msra.mxu0 0.0
    %1101 = vmatprep.subr.mxu0 0.0
    %1102 = vmatpush1.msra.mxu0 0.0
    %1103 = vmatprep.subr.mxu0 0.0
    %1104 = vmatpush1.msra.mxu0 0.0
    %1105 = vmatprep.subr.mxu0 0.0
    %1106 = vmatpush1.msra.mxu0 0.0
    %1107 = vmatprep.subr.mxu0 0.0
    %1108 = vmatpush1.msra.mxu0 0.0
    %1109 = vmatprep.subr.mxu0 0.0
    %1110 = vmatpush1.msra.mxu0 0.0
    %1111 = vmatprep.subr.mxu0 0.0
    %1112 = vmatpush1.msra.mxu0 0.0
    %1113 = vmatprep.subr.mxu0 0.0
    %1114 = vmatpush1.msra.mxu0 0.0
    %1115 = vmatprep.subr.mxu0 0.0
    %1116 = vmatpush1.msra.mxu0 %v426
    %1117 = vmatprep.subr.mxu0 0.0
    %1118 = vmatpush1.msra.mxu0 %v425
    %1119 = vmatprep.subr.mxu0 0.0
    %1120 = vmatpush2.msra.mxu0 0.0
    %1121 = vmatprep.subr.mxu0 0.0
    %1122 = vmatpush2.msra.mxu0 0.0
    %1123 = vmatprep.subr.mxu0 0.0
    %1124 = vmatpush2.msra.mxu0 0.0
    %1125 = vmatprep.subr.mxu0 0.0
    %1126 = vmatpush2.msra.mxu0 0.0
    %1127 = vmatprep.subr.mxu0 0.0
    %1128 = vmatpush2.msra.mxu0 0.0
    %1129 = vmatprep.subr.mxu0 0.0
    %1130 = vmatpush2.msra.mxu0 0.0
    %1131 = vmatprep.subr.mxu0 0.0
    %1132 = vmatpush2.msra.mxu0 0.0
    %1133 = vmatprep.subr.mxu0 0.0
    %1134 = vmatpush2.msra.mxu0 0.0
    %1135 = vmatprep.subr.mxu0 0.0
    %1136 = vmatpush2.msra.mxu0 0.0
    %1137 = vmatprep.subr.mxu0 0.0
    %1138 = vmatpush2.msra.mxu0 0.0
    %1139 = vmatprep.subr.mxu0 0.0
    %1140 = vmatpush2.msra.mxu0 0.0
    %1141 = vmatprep.subr.mxu0 0.0
    %1142 = vmatpush2.msra.mxu0 0.0
    %1143 = vmatprep.subr.mxu0 0.0
    %1144 = vmatpush2.msra.mxu0 0.0
    %1145 = vmatprep.subr.mxu0 0.0
    %1146 = vmatpush2.msra.mxu0 0.0
    %1147 = vmatprep.subr.mxu0 0.0
    %1148 = vmatpush2.msra.mxu0 0.0
    %1149 = vmatprep.subr.mxu0 0.0
    %1150 = vmatpush2.msra.mxu0 0.0
    %1151 = vmatprep.mubr.f32.mxu0 0.0
    %1152 = vmatmul.mubr.f32.gmra.mxu0 %v1085
    %v1153 = vpop.f32.mrf.mxu0
    %v1154 = vadd.f32 0.0, %v1153
    %v1155 = vpop.f32.mrf.mxu0
    %1156 = vdwg.mxu0
    %1158 = vrot.lane.b32.xlu0 %v1154, 64
    %v1159 = vpop.permute.xlu0 %1158
    %v1161 = vadd.f32 %v423, %v1159
    %v1162 = vxor.u32 %v1161, 2147483648
    %v1163 = vmul.f32 %v1162, 1.442695
    %v1164 = vpow.pop %v1163
    %v1165 = vadd.f32 %v1164, 1.0
    %v1166 = vrcp.pop %v1165
    %v1167 = vmul.f32 1.0, %v1166
    %v1168 = vtanh.pop %v1161
    %1170 = vrot.lane.b32.xlu0 %v1075, 64
    %v1171 = vpop.permute.xlu0 %1170
    %v1173 = vmul.f32 %v1167, %v1171
    %1175 = vrot.lane.b32.xlu0 %v1168, 80
    %v1176 = vpop.permute.xlu0 %1175
    %v1178 = vmul.f32 %v1167, %v1176
    %1180 = vrot.lane.b32.xlu0 %v1178, 16
    %v1181 = vpop.permute.xlu0 %1180
    %v1183 = vadd.f32 %v1173, %v1181
    %v1184 = vtanh.pop %v1183
    %1186 = vrot.lane.b32.xlu0 %v1184, 16
    %v1187 = vpop.permute.xlu0 %1186
    %v1189 = vmul.f32 %v1167, %v1187
    %1191 = vrot.lane.b32.xlu0 %v553, 48
    %v1192 = vpop.permute.xlu0 %1191
    %1194 = vrot.lane.b32.xlu0 %v765, 80
    %v1195 = vpop.permute.xlu0 %1194
    %1197 = vrot.lane.b32.xlu0 %v869, 32
    %v1198 = vpop.permute.xlu0 %1197
    %1200 = vrot.lane.b32.xlu0 %v977, 112
    %v1201 = vpop.permute.xlu0 %1200
    %1203 = vrot.lane.b32.xlu0 %v1081, 64
    %v1204 = vpop.permute.xlu0 %1203
    %1207 = vrot.lane.b32.xlu0 %v1189, 16
    %v1208 = vpop.permute.xlu0 %1207
    %v1210 = vsel %vm448, %v447, %v1192
    %v1211 = vsel %vm76, %v1210, %v657
    %vm1212 = vcmask 392192
    %v1213 = vsel %vm1212, %v1211, %v1195
    %vm1214 = vcmask 523264
    %v1215 = vsel %vm1214, %v1213, %v1198
    %vm1216 = vcmask 654336
    %v1217 = vsel %vm1216, %v1215, %v1201
    %vm1218 = vcmask 785408
    %v1219 = vsel %vm1218, %v1217, %v1204
    %vm1220 = vcmask 916480
    %v1221 = vsel %vm1220, %v1219, %v1208
    %v1222 = vld [vmem:[#allocation5 + $0x38] sm:$0xff]
    %v1223 = vld [vmem:[#allocation5 + $0x40] sm:$0xff]
    %v1224 = vld [vmem:[#allocation5 + $0x48] sm:$0xff]
    %v1225 = vld [vmem:[#allocation5 + $0x50] sm:$0xff]
    %v1226 = vld [vmem:[#allocation5 + $0x58] sm:$0xff]
    %v1227 = vld [vmem:[#allocation5 + $0x60] sm:$0xff]
    %v1228 = vld [vmem:[#allocation5 + $0x68] sm:$0xff]
    %v1229 = vld [vmem:[#allocation5 + $0x70] sm:$0xff]
    %v1230 = vld [vmem:[#allocation5 + $0x78] sm:$0xff]
    %v1231 = vld [vmem:[#allocation5 + $0x80] sm:$0xff]
    %v1232 = vld [vmem:[#allocation5 + $0x88] sm:$0xff]
    %v1233 = vld [vmem:[#allocation5 + $0x90] sm:$0xff]
    %v1234 = vld [vmem:[#allocation5 + $0x98] sm:$0xff]
    %v1235 = vld [vmem:[#allocation5 + $0xa0] sm:$0xff]
    %v1236 = vld [vmem:[#allocation5 + $0xa8] sm:$0xff]
    %v1237 = vld [vmem:[#allocation5 + $0xb0] sm:$0xff]
    %v1238 = vld [vmem:[#allocation5 + $0xb8] sm:$0x1]
    %v1239 = vlaneseq
    %v1240 = vshrl.u32 %v1239, 7
    %v1241 = vsub.s32 0, %v1240
    %v1242 = vrot.slane %v1238, %v1241
    %1243 = vmatprep.subr.mxu0 0.0
    %1244 = vmatpush1.msra.mxu0 %v1237
    %1245 = vmatprep.subr.mxu0 0.0
    %1246 = vmatpush1.msra.mxu0 %v1236
    %1247 = vmatprep.subr.mxu0 0.0
    %1248 = vmatpush1.msra.mxu0 %v1235
    %1249 = vmatprep.subr.mxu0 0.0
    %1250 = vmatpush1.msra.mxu0 %v1234
    %1251 = vmatprep.subr.mxu0 0.0
    %1252 = vmatpush1.msra.mxu0 %v1233
    %1253 = vmatprep.subr.mxu0 0.0
    %1254 = vmatpush1.msra.mxu0 %v1232
    %1255 = vmatprep.subr.mxu0 0.0
    %1256 = vmatpush1.msra.mxu0 %v1231
    %1257 = vmatprep.subr.mxu0 0.0
    %1258 = vmatpush1.msra.mxu0 %v1230
    %1259 = vmatprep.subr.mxu0 0.0
    %1260 = vmatpush1.msra.mxu0 %v1229
    %1261 = vmatprep.subr.mxu0 0.0
    %1262 = vmatpush1.msra.mxu0 %v1228
    %1263 = vmatprep.subr.mxu0 0.0
    %1264 = vmatpush1.msra.mxu0 %v1227
    %1265 = vmatprep.subr.mxu0 0.0
    %1266 = vmatpush1.msra.mxu0 %v1226
    %1267 = vmatprep.subr.mxu0 0.0
    %1268 = vmatpush1.msra.mxu0 %v1225
    %1269 = vmatprep.subr.mxu0 0.0
    %1270 = vmatpush1.msra.mxu0 %v1224
    %1271 = vmatprep.subr.mxu0 0.0
    %1272 = vmatpush1.msra.mxu0 %v1223
    %1273 = vmatprep.subr.mxu0 0.0
    %1274 = vmatpush1.msra.mxu0 %v1222
    %1275 = vmatprep.subr.mxu0 0.0
    %1276 = vmatpush2.msra.mxu0 0.0
    %1277 = vmatprep.subr.mxu0 0.0
    %1278 = vmatpush2.msra.mxu0 0.0
    %1279 = vmatprep.subr.mxu0 0.0
    %1280 = vmatpush2.msra.mxu0 0.0
    %1281 = vmatprep.subr.mxu0 0.0
    %1282 = vmatpush2.msra.mxu0 0.0
    %1283 = vmatprep.subr.mxu0 0.0
    %1284 = vmatpush2.msra.mxu0 0.0
    %1285 = vmatprep.subr.mxu0 0.0
    %1286 = vmatpush2.msra.mxu0 0.0
    %1287 = vmatprep.subr.mxu0 0.0
    %1288 = vmatpush2.msra.mxu0 0.0
    %1289 = vmatprep.subr.mxu0 0.0
    %1290 = vmatpush2.msra.mxu0 0.0
    %1291 = vmatprep.subr.mxu0 0.0
    %1292 = vmatpush2.msra.mxu0 0.0
    %1293 = vmatprep.subr.mxu0 0.0
    %1294 = vmatpush2.msra.mxu0 0.0
    %1295 = vmatprep.subr.mxu0 0.0
    %1296 = vmatpush2.msra.mxu0 0.0
    %1297 = vmatprep.subr.mxu0 0.0
    %1298 = vmatpush2.msra.mxu0 0.0
    %1299 = vmatprep.subr.mxu0 0.0
    %1300 = vmatpush2.msra.mxu0 0.0
    %1301 = vmatprep.subr.mxu0 0.0
    %1302 = vmatpush2.msra.mxu0 0.0
    %1303 = vmatprep.subr.mxu0 0.0
    %1304 = vmatpush2.msra.mxu0 0.0
    %1305 = vmatprep.subr.mxu0 0.0
    %1306 = vmatpush2.msra.mxu0 0.0
    %1307 = vmatprep.mubr.f32.mxu0 0.0
    %1308 = vmatmul.mubr.f32.gmra.mxu0 %v1221
    %v1309 = vpop.f32.mrf.mxu0
    %v1310 = vadd.f32 %v1242, %v1309
    %v1311 = vpop.f32.mrf.mxu0
    %1312 = vdwg.mxu0
    %v1313 = vld [vmem:[#allocation5 + $0x140] sm:$0xff]
    %v1314 = vld [vmem:[#allocation5 + $0x148] sm:$0xff]
    %v1315 = vld [vmem:[#allocation5 + $0x150] sm:$0xff]
    %v1316 = vld [vmem:[#allocation5 + $0x158] sm:$0xff]
    %v1317 = vld [vmem:[#allocation5 + $0x160] sm:$0xff]
    %v1318 = vld [vmem:[#allocation5 + $0x168] sm:$0xff]
    %v1319 = vld [vmem:[#allocation5 + $0x170] sm:$0xff]
    %v1320 = vld [vmem:[#allocation5 + $0x178] sm:$0xff]
    %v1321 = vld [vmem:[#allocation5 + $0x180] sm:$0xff]
    %v1322 = vld [vmem:[#allocation5 + $0x188] sm:$0xff]
    %v1323 = vld [vmem:[#allocation5 + $0x190] sm:$0xff]
    %v1324 = vld [vmem:[#allocation5 + $0x198] sm:$0xff]
    %v1325 = vld [vmem:[#allocation5 + $0x1a0] sm:$0xff]
    %v1326 = vld [vmem:[#allocation5 + $0x1a8] sm:$0xff]
    %v1327 = vld [vmem:[#allocation5 + $0x1b0] sm:$0xff]
    %v1328 = vld [vmem:[#allocation5 + $0x1b8] sm:$0xff]
    %1329 = vmatprep.subr.mxu0 0.0
    %1330 = vmatpush1.msra.mxu0 %v1328
    %1331 = vmatprep.subr.mxu0 0.0
    %1332 = vmatpush1.msra.mxu0 %v1327
    %1333 = vmatprep.subr.mxu0 0.0
    %1334 = vmatpush1.msra.mxu0 %v1326
    %1335 = vmatprep.subr.mxu0 0.0
    %1336 = vmatpush1.msra.mxu0 %v1325
    %1337 = vmatprep.subr.mxu0 0.0
    %1338 = vmatpush1.msra.mxu0 %v1324
    %1339 = vmatprep.subr.mxu0 0.0
    %1340 = vmatpush1.msra.mxu0 %v1323
    %1341 = vmatprep.subr.mxu0 0.0
    %1342 = vmatpush1.msra.mxu0 %v1322
    %1343 = vmatprep.subr.mxu0 0.0
    %1344 = vmatpush1.msra.mxu0 %v1321
    %1345 = vmatprep.subr.mxu0 0.0
    %1346 = vmatpush1.msra.mxu0 %v1320
    %1347 = vmatprep.subr.mxu0 0.0
    %1348 = vmatpush1.msra.mxu0 %v1319
    %1349 = vmatprep.subr.mxu0 0.0
    %1350 = vmatpush1.msra.mxu0 %v1318
    %1351 = vmatprep.subr.mxu0 0.0
    %1352 = vmatpush1.msra.mxu0 %v1317
    %1353 = vmatprep.subr.mxu0 0.0
    %1354 = vmatpush1.msra.mxu0 %v1316
    %1355 = vmatprep.subr.mxu0 0.0
    %1356 = vmatpush1.msra.mxu0 %v1315
    %1357 = vmatprep.subr.mxu0 0.0
    %1358 = vmatpush1.msra.mxu0 %v1314
    %1359 = vmatprep.subr.mxu0 0.0
    %1360 = vmatpush1.msra.mxu0 %v1313
    %1361 = vmatprep.subr.mxu0 0.0
    %1362 = vmatpush2.msra.mxu0 0.0
    %1363 = vmatprep.subr.mxu0 0.0
    %1364 = vmatpush2.msra.mxu0 0.0
    %1365 = vmatprep.subr.mxu0 0.0
    %1366 = vmatpush2.msra.mxu0 0.0
    %1367 = vmatprep.subr.mxu0 0.0
    %1368 = vmatpush2.msra.mxu0 0.0
    %1369 = vmatprep.subr.mxu0 0.0
    %1370 = vmatpush2.msra.mxu0 0.0
    %1371 = vmatprep.subr.mxu0 0.0
    %1372 = vmatpush2.msra.mxu0 0.0
    %1373 = vmatprep.subr.mxu0 0.0
    %1374 = vmatpush2.msra.mxu0 0.0
    %1375 = vmatprep.subr.mxu0 0.0
    %1376 = vmatpush2.msra.mxu0 0.0
    %1377 = vmatprep.subr.mxu0 0.0
    %1378 = vmatpush2.msra.mxu0 0.0
    %1379 = vmatprep.subr.mxu0 0.0
    %1380 = vmatpush2.msra.mxu0 0.0
    %1381 = vmatprep.subr.mxu0 0.0
    %1382 = vmatpush2.msra.mxu0 0.0
    %1383 = vmatprep.subr.mxu0 0.0
    %1384 = vmatpush2.msra.mxu0 0.0
    %1385 = vmatprep.subr.mxu0 0.0
    %1386 = vmatpush2.msra.mxu0 0.0
    %1387 = vmatprep.subr.mxu0 0.0
    %1388 = vmatpush2.msra.mxu0 0.0
    %1389 = vmatprep.subr.mxu0 0.0
    %1390 = vmatpush2.msra.mxu0 0.0
    %1391 = vmatprep.subr.mxu0 0.0
    %1392 = vmatpush2.msra.mxu0 0.0
    %1393 = vmatprep.mubr.f32.mxu0 0.0
    %1394 = vmatmul.mubr.f32.gmra.mxu0 %v1221
    %v1395 = vpop.f32.mrf.mxu0
    %v1396 = vadd.f32 0.0, %v1395
    %v1397 = vpop.f32.mrf.mxu0
    %1398 = vdwg.mxu0
    %v1399 = vld [vmem:[#allocation5 + $0xc0] sm:$0xff]
    %v1400 = vld [vmem:[#allocation5 + $0xc8] sm:$0xff]
    %v1401 = vld [vmem:[#allocation5 + $0xd0] sm:$0xff]
    %v1402 = vld [vmem:[#allocation5 + $0xd8] sm:$0xff]
    %v1403 = vld [vmem:[#allocation5 + $0xe0] sm:$0xff]
    %v1404 = vld [vmem:[#allocation5 + $0xe8] sm:$0xff]
    %v1405 = vld [vmem:[#allocation5 + $0xf0] sm:$0xff]
    %v1406 = vld [vmem:[#allocation5 + $0xf8] sm:$0xff]
    %v1407 = vld [vmem:[#allocation5 + $0x100] sm:$0xff]
    %v1408 = vld [vmem:[#allocation5 + $0x108] sm:$0xff]
    %v1409 = vld [vmem:[#allocation5 + $0x110] sm:$0xff]
    %v1410 = vld [vmem:[#allocation5 + $0x118] sm:$0xff]
    %v1411 = vld [vmem:[#allocation5 + $0x120] sm:$0xff]
    %v1412 = vld [vmem:[#allocation5 + $0x128] sm:$0xff]
    %v1413 = vld [vmem:[#allocation5 + $0x130] sm:$0xff]
    %v1414 = vld [vmem:[#allocation5 + $0x138] sm:$0xff]
    %v1415 = vld [vmem:[#allocation8] sm:$0xff]
    %v1416 = vld [vmem:[#allocation8 + $0x8] sm:$0xff]
    %v1417 = vld [vmem:[#allocation8 + $0x10] sm:$0xff]
    %v1418 = vld [vmem:[#allocation8 + $0x18] sm:$0xff]
    %v1419 = vld [vmem:[#allocation8 + $0x20] sm:$0xff]
    %v1420 = vld [vmem:[#allocation8 + $0x28] sm:$0xff]
    %v1421 = vld [vmem:[#allocation8 + $0x30] sm:$0xff]
    %v1422 = vld [vmem:[#allocation8 + $0x38] sm:$0xff]
    %v1423 = vld [vmem:[#allocation5 + $0x1d0] sm:$0x1]
    %s1425 = vtos %v1423
    %v1426 = vstv %s1425
    %v1428 = vmul.f32 %v71, %v1426
    %1429 = vrot.lane.b32.xlu0 %v1423, 127
    %v1430 = vpop.permute.xlu0 %1429
    %s1431 = vtos %v1430
    %v1432 = vstv %s1431
    %v1434 = vadd.f32 %v1428, %v1432
    %v1435 = vld [vmem:[#allocation5 + $0x1c0] sm:$0x1]
    %v1436 = vlaneseq
    %v1437 = vshrl.u32 %v1436, 7
    %v1438 = vsub.s32 0, %v1437
    %v1439 = vrot.slane %v1435, %v1438
    %v1440 = vld [vmem:[#allocation5 + $0x1c8] sm:$0x1]
    %v1441 = vlaneseq
    %v1442 = vshrl.u32 %v1441, 7
    %v1443 = vsub.s32 0, %v1442
    %v1444 = vrot.slane %v1440, %v1443
    %v1445 = vtanh.pop %v1310
    %1446 = vmatprep.subr.mxu0 0.0
    %1447 = vmatpush1.msra.mxu0 %v1414
    %1448 = vmatprep.subr.mxu0 0.0
    %1449 = vmatpush1.msra.mxu0 %v1413
    %1450 = vmatprep.subr.mxu0 0.0
    %1451 = vmatpush1.msra.mxu0 %v1412
    %1452 = vmatprep.subr.mxu0 0.0
    %1453 = vmatpush1.msra.mxu0 %v1411
    %1454 = vmatprep.subr.mxu0 0.0
    %1455 = vmatpush1.msra.mxu0 %v1410
    %1456 = vmatprep.subr.mxu0 0.0
    %1457 = vmatpush1.msra.mxu0 %v1409
    %1458 = vmatprep.subr.mxu0 0.0
    %1459 = vmatpush1.msra.mxu0 %v1408
    %1460 = vmatprep.subr.mxu0 0.0
    %1461 = vmatpush1.msra.mxu0 %v1407
    %1462 = vmatprep.subr.mxu0 0.0
    %1463 = vmatpush1.msra.mxu0 %v1406
    %1464 = vmatprep.subr.mxu0 0.0
    %1465 = vmatpush1.msra.mxu0 %v1405
    %1466 = vmatprep.subr.mxu0 0.0
    %1467 = vmatpush1.msra.mxu0 %v1404
    %1468 = vmatprep.subr.mxu0 0.0
    %1469 = vmatpush1.msra.mxu0 %v1403
    %1470 = vmatprep.subr.mxu0 0.0
    %1471 = vmatpush1.msra.mxu0 %v1402
    %1472 = vmatprep.subr.mxu0 0.0
    %1473 = vmatpush1.msra.mxu0 %v1401
    %1474 = vmatprep.subr.mxu0 0.0
    %1475 = vmatpush1.msra.mxu0 %v1400
    %1476 = vmatprep.subr.mxu0 0.0
    %1477 = vmatpush1.msra.mxu0 %v1399
    %1478 = vmatprep.subr.mxu0 0.0
    %1479 = vmatpush2.msra.mxu0 0.0
    %1480 = vmatprep.subr.mxu0 0.0
    %1481 = vmatpush2.msra.mxu0 0.0
    %1482 = vmatprep.subr.mxu0 0.0
    %1483 = vmatpush2.msra.mxu0 0.0
    %1484 = vmatprep.subr.mxu0 0.0
    %1485 = vmatpush2.msra.mxu0 0.0
    %1486 = vmatprep.subr.mxu0 0.0
    %1487 = vmatpush2.msra.mxu0 0.0
    %1488 = vmatprep.subr.mxu0 0.0
    %1489 = vmatpush2.msra.mxu0 0.0
    %1490 = vmatprep.subr.mxu0 0.0
    %1491 = vmatpush2.msra.mxu0 0.0
    %1492 = vmatprep.subr.mxu0 0.0
    %1493 = vmatpush2.msra.mxu0 0.0
    %1494 = vmatprep.subr.mxu0 0.0
    %1495 = vmatpush2.msra.mxu0 0.0
    %1496 = vmatprep.subr.mxu0 0.0
    %1497 = vmatpush2.msra.mxu0 0.0
    %1498 = vmatprep.subr.mxu0 0.0
    %1499 = vmatpush2.msra.mxu0 0.0
    %1500 = vmatprep.subr.mxu0 0.0
    %1501 = vmatpush2.msra.mxu0 0.0
    %1502 = vmatprep.subr.mxu0 0.0
    %1503 = vmatpush2.msra.mxu0 0.0
    %1504 = vmatprep.subr.mxu0 0.0
    %1505 = vmatpush2.msra.mxu0 0.0
    %1506 = vmatprep.subr.mxu0 0.0
    %1507 = vmatpush2.msra.mxu0 0.0
    %1508 = vmatprep.subr.mxu0 0.0
    %1509 = vmatpush2.msra.mxu0 0.0
    %1510 = vmatprep.mubr.f32.mxu0 0.0
    %1511 = vmatmul.mubr.f32.gmra.mxu0 %v1445
    %v1512 = vpop.f32.mrf.mxu0
    %v1513 = vadd.f32 0.0, %v1512
    %v1514 = vpop.f32.mrf.mxu0
    %1515 = vdwg.mxu0
    %vm1516 = vcmask 64512
    %v1517 = vsel %vm1516, %v1513, -inf
    %1518 = vmax.xlane.f32.xlu0 %v1517
    %v1519 = vpop.xlane.xlu0 %1518
    %v1520 = vsub.f32 %v1513, %v1519
    %v1521 = vmul.f32 %v1520, 1.442695
    %v1522 = vpow.pop %v1521
    %v1523 = vsel %vm1516, %v1522, 0.0
    %1524 = vadd.xlane.f32.xlu0 %v1523
    %v1525 = vpop.xlane.xlu0 %1524
    %v1526 = vrcp.pop %v1525
    %v1527 = vmul.f32 %v1522, %v1526
    %v1528 = vmul.f32 %v1527, %v1396
    %v1529 = vsel %vm1516, %v1528, 0.0
    %1530 = vadd.xlane.f32.xlu0 %v1529
    %v1531 = vpop.xlane.xlu0 %1530
    %v1532 = vadd.f32 %v1531, %v1434
    %1534 = vset.pattern.permute.xlu0 32
    %1535 = vperm.xlu0 %1534, %v1532
    %v1536 = vpop.permute.xlu0 %1535
    %v1538 = vmul.f32 %v1536, %v1439
    %v1539 = vadd.f32 %v1538, %v1444
    %v1540 = vxor.u32 %v1539, 2147483648
    %v1541 = vmul.f32 %v1540, 1.442695
    %v1542 = vpow.pop %v1541
    %v1543 = vadd.f32 %v1542, 1.0
    %v1544 = vrcp.pop %v1543
    %v1545 = vmul.f32 1.0, %v1544
    %v1546 = vtanh.pop %v1539
    %1548 = vrot.lane.b32.xlu0 %v1546, 80
    %v1549 = vpop.permute.xlu0 %1548
    %v1551 = vmul.f32 %v1545, %v1549
    %v1552 = vtanh.pop %v1551
    %1554 = vrot.lane.b32.xlu0 %v1552, 32
    %v1555 = vpop.permute.xlu0 %1554
    %v1557 = vmul.f32 %v1545, %v1555
    %1559 = vrot.lane.b32.xlu0 %v1557, 96
    %v1560 = vpop.permute.xlu0 %1559
    %1563 = vrot.lane.b32.xlu0 %v1551, 16
    %v1564 = vpop.permute.xlu0 %1563
    %v1566 = vsel %vm448, %v1560, %v1564
    %v1568 = vsel %vm76, %v1566, 0
    %1570 = vmatprep.subr.mxu0 0.0
    %1571 = vmatpush1.msra.mxu0 0.0
    %1572 = vmatprep.subr.mxu0 0.0
    %1573 = vmatpush1.msra.mxu0 0.0
    %1574 = vmatprep.subr.mxu0 0.0
    %1575 = vmatpush1.msra.mxu0 0.0
    %1576 = vmatprep.subr.mxu0 0.0
    %1577 = vmatpush1.msra.mxu0 0.0
    %1578 = vmatprep.subr.mxu0 0.0
    %1579 = vmatpush1.msra.mxu0 0.0
    %1580 = vmatprep.subr.mxu0 0.0
    %1581 = vmatpush1.msra.mxu0 0.0
    %1582 = vmatprep.subr.mxu0 0.0
    %1583 = vmatpush1.msra.mxu0 0.0
    %1584 = vmatprep.subr.mxu0 0.0
    %1585 = vmatpush1.msra.mxu0 0.0
    %1586 = vmatprep.subr.mxu0 0.0
    %1587 = vmatpush1.msra.mxu0 0.0
    %1588 = vmatprep.subr.mxu0 0.0
    %1589 = vmatpush1.msra.mxu0 0.0
    %1590 = vmatprep.subr.mxu0 0.0
    %1591 = vmatpush1.msra.mxu0 0.0
    %1592 = vmatprep.subr.mxu0 0.0
    %1593 = vmatpush1.msra.mxu0 0.0
    %1594 = vmatprep.subr.mxu0 %v1422
    %1595 = vmatpush1.msra.mxu0 %v1421
    %1596 = vmatprep.subr.mxu0 %v1420
    %1597 = vmatpush1.msra.mxu0 %v1419
    %1598 = vmatprep.subr.mxu0 %v1418
    %1599 = vmatpush1.msra.mxu0 %v1417
    %1600 = vmatprep.subr.mxu0 %v1416
    %1601 = vmatpush1.msra.mxu0 %v1415
    %1602 = vmatprep.subr.mxu0 0.0
    %1603 = vmatpush2.msra.mxu0 0.0
    %1604 = vmatprep.subr.mxu0 0.0
    %1605 = vmatpush2.msra.mxu0 0.0
    %1606 = vmatprep.subr.mxu0 0.0
    %1607 = vmatpush2.msra.mxu0 0.0
    %1608 = vmatprep.subr.mxu0 0.0
    %1609 = vmatpush2.msra.mxu0 0.0
    %1610 = vmatprep.subr.mxu0 0.0
    %1611 = vmatpush2.msra.mxu0 0.0
    %1612 = vmatprep.subr.mxu0 0.0
    %1613 = vmatpush2.msra.mxu0 0.0
    %1614 = vmatprep.subr.mxu0 0.0
    %1615 = vmatpush2.msra.mxu0 0.0
    %1616 = vmatprep.subr.mxu0 0.0
    %1617 = vmatpush2.msra.mxu0 0.0
    %1618 = vmatprep.subr.mxu0 0.0
    %1619 = vmatpush2.msra.mxu0 0.0
    %1620 = vmatprep.subr.mxu0 0.0
    %1621 = vmatpush2.msra.mxu0 0.0
    %1622 = vmatprep.subr.mxu0 0.0
    %1623 = vmatpush2.msra.mxu0 0.0
    %1624 = vmatprep.subr.mxu0 0.0
    %1625 = vmatpush2.msra.mxu0 0.0
    %1626 = vmatprep.subr.mxu0 0.0
    %1627 = vmatpush2.msra.mxu0 0.0
    %1628 = vmatprep.subr.mxu0 0.0
    %1629 = vmatpush2.msra.mxu0 0.0
    %1630 = vmatprep.subr.mxu0 0.0
    %1631 = vmatpush2.msra.mxu0 0.0
    %1632 = vmatprep.subr.mxu0 0.0
    %1633 = vmatpush2.msra.mxu0 0.0
    %1634 = vmatprep.mubr.f32.mxu0 0.0
    %1635 = vmatmul.mubr.f32.gmra.mxu0 %v1568
    %v1636 = vpop.f32.mrf.mxu0
    %v1637 = vadd.f32 0.0, %v1636
    %v1638 = vpop.f32.mrf.mxu0
    %v1639 = vadd.f32 0.0, %v1638
    %1640 = vdwg.mxu0
    %v1641 = vadd.f32 %v1310, %v1637
    %v1642 = vtanh.pop %v1641
    %1643 = vmatprep.subr.mxu0 0.0
    %1644 = vmatpush1.msra.mxu0 %v1414
    %1645 = vmatprep.subr.mxu0 0.0
    %1646 = vmatpush1.msra.mxu0 %v1413
    %1647 = vmatprep.subr.mxu0 0.0
    %1648 = vmatpush1.msra.mxu0 %v1412
    %1649 = vmatprep.subr.mxu0 0.0
    %1650 = vmatpush1.msra.mxu0 %v1411
    %1651 = vmatprep.subr.mxu0 0.0
    %1652 = vmatpush1.msra.mxu0 %v1410
    %1653 = vmatprep.subr.mxu0 0.0
    %1654 = vmatpush1.msra.mxu0 %v1409
    %1655 = vmatprep.subr.mxu0 0.0
    %1656 = vmatpush1.msra.mxu0 %v1408
    %1657 = vmatprep.subr.mxu0 0.0
    %1658 = vmatpush1.msra.mxu0 %v1407
    %1659 = vmatprep.subr.mxu0 0.0
    %1660 = vmatpush1.msra.mxu0 %v1406
    %1661 = vmatprep.subr.mxu0 0.0
    %1662 = vmatpush1.msra.mxu0 %v1405
    %1663 = vmatprep.subr.mxu0 0.0
    %1664 = vmatpush1.msra.mxu0 %v1404
    %1665 = vmatprep.subr.mxu0 0.0
    %1666 = vmatpush1.msra.mxu0 %v1403
    %1667 = vmatprep.subr.mxu0 0.0
    %1668 = vmatpush1.msra.mxu0 %v1402
    %1669 = vmatprep.subr.mxu0 0.0
    %1670 = vmatpush1.msra.mxu0 %v1401
    %1671 = vmatprep.subr.mxu0 0.0
    %1672 = vmatpush1.msra.mxu0 %v1400
    %1673 = vmatprep.subr.mxu0 0.0
    %1674 = vmatpush1.msra.mxu0 %v1399
    %1675 = vmatprep.subr.mxu0 0.0
    %1676 = vmatpush2.msra.mxu0 0.0
    %1677 = vmatprep.subr.mxu0 0.0
    %1678 = vmatpush2.msra.mxu0 0.0
    %1679 = vmatprep.subr.mxu0 0.0
    %1680 = vmatpush2.msra.mxu0 0.0
    %1681 = vmatprep.subr.mxu0 0.0
    %1682 = vmatpush2.msra.mxu0 0.0
    %1683 = vmatprep.subr.mxu0 0.0
    %1684 = vmatpush2.msra.mxu0 0.0
    %1685 = vmatprep.subr.mxu0 0.0
    %1686 = vmatpush2.msra.mxu0 0.0
    %1687 = vmatprep.subr.mxu0 0.0
    %1688 = vmatpush2.msra.mxu0 0.0
    %1689 = vmatprep.subr.mxu0 0.0
    %1690 = vmatpush2.msra.mxu0 0.0
    %1691 = vmatprep.subr.mxu0 0.0
    %1692 = vmatpush2.msra.mxu0 0.0
    %1693 = vmatprep.subr.mxu0 0.0
    %1694 = vmatpush2.msra.mxu0 0.0
    %1695 = vmatprep.subr.mxu0 0.0
    %1696 = vmatpush2.msra.mxu0 0.0
    %1697 = vmatprep.subr.mxu0 0.0
    %1698 = vmatpush2.msra.mxu0 0.0
    %1699 = vmatprep.subr.mxu0 0.0
    %1700 = vmatpush2.msra.mxu0 0.0
    %1701 = vmatprep.subr.mxu0 0.0
    %1702 = vmatpush2.msra.mxu0 0.0
    %1703 = vmatprep.subr.mxu0 0.0
    %1704 = vmatpush2.msra.mxu0 0.0
    %1705 = vmatprep.subr.mxu0 0.0
    %1706 = vmatpush2.msra.mxu0 0.0
    %1707 = vmatprep.mubr.f32.mxu0 0.0
    %1708 = vmatmul.mubr.f32.gmra.mxu0 %v1642
    %v1709 = vpop.f32.mrf.mxu0
    %v1710 = vadd.f32 0.0, %v1709
    %v1711 = vpop.f32.mrf.mxu0
    %1712 = vdwg.mxu0
    %v1713 = vsel %vm1516, %v1710, -inf
    %1714 = vmax.xlane.f32.xlu0 %v1713
    %v1715 = vpop.xlane.xlu0 %1714
    %v1716 = vsub.f32 %v1710, %v1715
    %v1717 = vmul.f32 %v1716, 1.442695
    %v1718 = vpow.pop %v1717
    %v1719 = vsel %vm1516, %v1718, 0.0
    %1720 = vadd.xlane.f32.xlu0 %v1719
    %v1721 = vpop.xlane.xlu0 %1720
    %v1722 = vrcp.pop %v1721
    %v1723 = vmul.f32 %v1718, %v1722
    %v1724 = vmul.f32 %v1723, %v1396
    %v1725 = vsel %vm1516, %v1724, 0.0
    %1726 = vadd.xlane.f32.xlu0 %v1725
    %v1727 = vpop.xlane.xlu0 %1726
    %v1728 = vadd.f32 %v1727, %v1434
    %1730 = vset.pattern.permute.xlu0 33
    %1731 = vperm.xlu0 %1730, %v1728
    %v1732 = vpop.permute.xlu0 %1731
    %v1734 = vmul.f32 %v1732, %v1439
    %v1735 = vadd.f32 %v1734, %v1444
    %v1736 = vadd.f32 %v1735, %v1639
    %v1737 = vxor.u32 %v1736, 2147483648
    %v1738 = vmul.f32 %v1737, 1.442695
    %v1739 = vpow.pop %v1738
    %v1740 = vadd.f32 %v1739, 1.0
    %v1741 = vrcp.pop %v1740
    %v1742 = vmul.f32 1.0, %v1741
    %v1743 = vtanh.pop %v1736
    %v1744 = vmul.f32 %v1742, %v1564
    %1746 = vrot.lane.b32.xlu0 %v1743, 80
    %v1747 = vpop.permute.xlu0 %1746
    %v1749 = vmul.f32 %v1742, %v1747
    %1751 = vrot.lane.b32.xlu0 %v1749, 16
    %v1752 = vpop.permute.xlu0 %1751
    %v1754 = vadd.f32 %v1744, %v1752
    %v1755 = vtanh.pop %v1754
    %1757 = vrot.lane.b32.xlu0 %v1755, 16
    %v1758 = vpop.permute.xlu0 %1757
    %v1760 = vmul.f32 %v1742, %v1758
    %1762 = vrot.lane.b32.xlu0 %v1760, 96
    %v1763 = vpop.permute.xlu0 %1762
    %v1765 = vsel %vm448, %v1763, %v1754
    %v1767 = vsel %vm76, %v1765, 0
    %1769 = vmatprep.subr.mxu0 0.0
    %1770 = vmatpush1.msra.mxu0 0.0
    %1771 = vmatprep.subr.mxu0 0.0
    %1772 = vmatpush1.msra.mxu0 0.0
    %1773 = vmatprep.subr.mxu0 0.0
    %1774 = vmatpush1.msra.mxu0 0.0
    %1775 = vmatprep.subr.mxu0 0.0
    %1776 = vmatpush1.msra.mxu0 0.0
    %1777 = vmatprep.subr.mxu0 0.0
    %1778 = vmatpush1.msra.mxu0 0.0
    %1779 = vmatprep.subr.mxu0 0.0
    %1780 = vmatpush1.msra.mxu0 0.0
    %1781 = vmatprep.subr.mxu0 0.0
    %1782 = vmatpush1.msra.mxu0 0.0
    %1783 = vmatprep.subr.mxu0 0.0
    %1784 = vmatpush1.msra.mxu0 0.0
    %1785 = vmatprep.subr.mxu0 0.0
    %1786 = vmatpush1.msra.mxu0 0.0
    %1787 = vmatprep.subr.mxu0 0.0
    %1788 = vmatpush1.msra.mxu0 0.0
    %1789 = vmatprep.subr.mxu0 0.0
    %1790 = vmatpush1.msra.mxu0 0.0
    %1791 = vmatprep.subr.mxu0 0.0
    %1792 = vmatpush1.msra.mxu0 0.0
    %1793 = vmatprep.subr.mxu0 %v1422
    %1794 = vmatpush1.msra.mxu0 %v1421
    %1795 = vmatprep.subr.mxu0 %v1420
    %1796 = vmatpush1.msra.mxu0 %v1419
    %1797 = vmatprep.subr.mxu0 %v1418
    %1798 = vmatpush1.msra.mxu0 %v1417
    %1799 = vmatprep.subr.mxu0 %v1416
    %1800 = vmatpush1.msra.mxu0 %v1415
    %1801 = vmatprep.subr.mxu0 0.0
    %1802 = vmatpush2.msra.mxu0 0.0
    %1803 = vmatprep.subr.mxu0 0.0
    %1804 = vmatpush2.msra.mxu0 0.0
    %1805 = vmatprep.subr.mxu0 0.0
    %1806 = vmatpush2.msra.mxu0 0.0
    %1807 = vmatprep.subr.mxu0 0.0
    %1808 = vmatpush2.msra.mxu0 0.0
    %1809 = vmatprep.subr.mxu0 0.0
    %1810 = vmatpush2.msra.mxu0 0.0
    %1811 = vmatprep.subr.mxu0 0.0
    %1812 = vmatpush2.msra.mxu0 0.0
    %1813 = vmatprep.subr.mxu0 0.0
    %1814 = vmatpush2.msra.mxu0 0.0
    %1815 = vmatprep.subr.mxu0 0.0
    %1816 = vmatpush2.msra.mxu0 0.0
    %1817 = vmatprep.subr.mxu0 0.0
    %1818 = vmatpush2.msra.mxu0 0.0
    %1819 = vmatprep.subr.mxu0 0.0
    %1820 = vmatpush2.msra.mxu0 0.0
    %1821 = vmatprep.subr.mxu0 0.0
    %1822 = vmatpush2.msra.mxu0 0.0
    %1823 = vmatprep.subr.mxu0 0.0
    %1824 = vmatpush2.msra.mxu0 0.0
    %1825 = vmatprep.subr.mxu0 0.0
    %1826 = vmatpush2.msra.mxu0 0.0
    %1827 = vmatprep.subr.mxu0 0.0
    %1828 = vmatpush2.msra.mxu0 0.0
    %1829 = vmatprep.subr.mxu0 0.0
    %1830 = vmatpush2.msra.mxu0 0.0
    %1831 = vmatprep.subr.mxu0 0.0
    %1832 = vmatpush2.msra.mxu0 0.0
    %1833 = vmatprep.mubr.f32.mxu0 0.0
    %1834 = vmatmul.mubr.f32.gmra.mxu0 %v1767
    %v1835 = vpop.f32.mrf.mxu0
    %v1836 = vadd.f32 0.0, %v1835
    %v1837 = vpop.f32.mrf.mxu0
    %v1838 = vadd.f32 0.0, %v1837
    %1839 = vdwg.mxu0
    %v1840 = vadd.f32 %v1310, %v1836
    %v1841 = vtanh.pop %v1840
    %1842 = vmatprep.subr.mxu0 0.0
    %1843 = vmatpush1.msra.mxu0 %v1414
    %1844 = vmatprep.subr.mxu0 0.0
    %1845 = vmatpush1.msra.mxu0 %v1413
    %1846 = vmatprep.subr.mxu0 0.0
    %1847 = vmatpush1.msra.mxu0 %v1412
    %1848 = vmatprep.subr.mxu0 0.0
    %1849 = vmatpush1.msra.mxu0 %v1411
    %1850 = vmatprep.subr.mxu0 0.0
    %1851 = vmatpush1.msra.mxu0 %v1410
    %1852 = vmatprep.subr.mxu0 0.0
    %1853 = vmatpush1.msra.mxu0 %v1409
    %1854 = vmatprep.subr.mxu0 0.0
    %1855 = vmatpush1.msra.mxu0 %v1408
    %1856 = vmatprep.subr.mxu0 0.0
    %1857 = vmatpush1.msra.mxu0 %v1407
    %1858 = vmatprep.subr.mxu0 0.0
    %1859 = vmatpush1.msra.mxu0 %v1406
    %1860 = vmatprep.subr.mxu0 0.0
    %1861 = vmatpush1.msra.mxu0 %v1405
    %1862 = vmatprep.subr.mxu0 0.0
    %1863 = vmatpush1.msra.mxu0 %v1404
    %1864 = vmatprep.subr.mxu0 0.0
    %1865 = vmatpush1.msra.mxu0 %v1403
    %1866 = vmatprep.subr.mxu0 0.0
    %1867 = vmatpush1.msra.mxu0 %v1402
    %1868 = vmatprep.subr.mxu0 0.0
    %1869 = vmatpush1.msra.mxu0 %v1401
    %1870 = vmatprep.subr.mxu0 0.0
    %1871 = vmatpush1.msra.mxu0 %v1400
    %1872 = vmatprep.subr.mxu0 0.0
    %1873 = vmatpush1.msra.mxu0 %v1399
    %1874 = vmatprep.subr.mxu0 0.0
    %1875 = vmatpush2.msra.mxu0 0.0
    %1876 = vmatprep.subr.mxu0 0.0
    %1877 = vmatpush2.msra.mxu0 0.0
    %1878 = vmatprep.subr.mxu0 0.0
    %1879 = vmatpush2.msra.mxu0 0.0
    %1880 = vmatprep.subr.mxu0 0.0
    %1881 = vmatpush2.msra.mxu0 0.0
    %1882 = vmatprep.subr.mxu0 0.0
    %1883 = vmatpush2.msra.mxu0 0.0
    %1884 = vmatprep.subr.mxu0 0.0
    %1885 = vmatpush2.msra.mxu0 0.0
    %1886 = vmatprep.subr.mxu0 0.0
    %1887 = vmatpush2.msra.mxu0 0.0
    %1888 = vmatprep.subr.mxu0 0.0
    %1889 = vmatpush2.msra.mxu0 0.0
    %1890 = vmatprep.subr.mxu0 0.0
    %1891 = vmatpush2.msra.mxu0 0.0
    %1892 = vmatprep.subr.mxu0 0.0
    %1893 = vmatpush2.msra.mxu0 0.0
    %1894 = vmatprep.subr.mxu0 0.0
    %1895 = vmatpush2.msra.mxu0 0.0
    %1896 = vmatprep.subr.mxu0 0.0
    %1897 = vmatpush2.msra.mxu0 0.0
    %1898 = vmatprep.subr.mxu0 0.0
    %1899 = vmatpush2.msra.mxu0 0.0
    %1900 = vmatprep.subr.mxu0 0.0
    %1901 = vmatpush2.msra.mxu0 0.0
    %1902 = vmatprep.subr.mxu0 0.0
    %1903 = vmatpush2.msra.mxu0 0.0
    %1904 = vmatprep.subr.mxu0 0.0
    %1905 = vmatpush2.msra.mxu0 0.0
    %1906 = vmatprep.mubr.f32.mxu0 0.0
    %1907 = vmatmul.mubr.f32.gmra.mxu0 %v1841
    %v1908 = vpop.f32.mrf.mxu0
    %v1909 = vadd.f32 0.0, %v1908
    %v1910 = vpop.f32.mrf.mxu0
    %1911 = vdwg.mxu0
    %v1912 = vsel %vm1516, %v1909, -inf
    %1913 = vmax.xlane.f32.xlu0 %v1912
    %v1914 = vpop.xlane.xlu0 %1913
    %v1915 = vsub.f32 %v1909, %v1914
    %v1916 = vmul.f32 %v1915, 1.442695
    %v1917 = vpow.pop %v1916
    %v1918 = vsel %vm1516, %v1917, 0.0
    %1919 = vadd.xlane.f32.xlu0 %v1918
    %v1920 = vpop.xlane.xlu0 %1919
    %v1921 = vrcp.pop %v1920
    %v1922 = vmul.f32 %v1917, %v1921
    %v1923 = vmul.f32 %v1922, %v1396
    %v1924 = vsel %vm1516, %v1923, 0.0
    %1925 = vadd.xlane.f32.xlu0 %v1924
    %v1926 = vpop.xlane.xlu0 %1925
    %v1927 = vadd.f32 %v1926, %v1434
    %1929 = vset.pattern.permute.xlu0 34
    %1930 = vperm.xlu0 %1929, %v1927
    %v1931 = vpop.permute.xlu0 %1930
    %v1933 = vmul.f32 %v1931, %v1439
    %v1934 = vadd.f32 %v1933, %v1444
    %v1935 = vadd.f32 %v1934, %v1838
    %v1936 = vxor.u32 %v1935, 2147483648
    %v1937 = vmul.f32 %v1936, 1.442695
    %v1938 = vpow.pop %v1937
    %v1939 = vadd.f32 %v1938, 1.0
    %v1940 = vrcp.pop %v1939
    %v1941 = vmul.f32 1.0, %v1940
    %v1942 = vtanh.pop %v1935
    %v1943 = vmul.f32 %v1941, %v1754
    %1945 = vrot.lane.b32.xlu0 %v1942, 80
    %v1946 = vpop.permute.xlu0 %1945
    %v1948 = vmul.f32 %v1941, %v1946
    %1950 = vrot.lane.b32.xlu0 %v1948, 16
    %v1951 = vpop.permute.xlu0 %1950
    %v1953 = vadd.f32 %v1943, %v1951
    %v1954 = vtanh.pop %v1953
    %1956 = vrot.lane.b32.xlu0 %v1954, 16
    %v1957 = vpop.permute.xlu0 %1956
    %v1959 = vmul.f32 %v1941, %v1957
    %1961 = vrot.lane.b32.xlu0 %v1959, 96
    %v1962 = vpop.permute.xlu0 %1961
    %v1964 = vsel %vm448, %v1962, %v1953
    %v1966 = vsel %vm76, %v1964, 0
    %1968 = vmatprep.subr.mxu0 0.0
    %1969 = vmatpush1.msra.mxu0 0.0
    %1970 = vmatprep.subr.mxu0 0.0
    %1971 = vmatpush1.msra.mxu0 0.0
    %1972 = vmatprep.subr.mxu0 0.0
    %1973 = vmatpush1.msra.mxu0 0.0
    %1974 = vmatprep.subr.mxu0 0.0
    %1975 = vmatpush1.msra.mxu0 0.0
    %1976 = vmatprep.subr.mxu0 0.0
    %1977 = vmatpush1.msra.mxu0 0.0
    %1978 = vmatprep.subr.mxu0 0.0
    %1979 = vmatpush1.msra.mxu0 0.0
    %1980 = vmatprep.subr.mxu0 0.0
    %1981 = vmatpush1.msra.mxu0 0.0
    %1982 = vmatprep.subr.mxu0 0.0
    %1983 = vmatpush1.msra.mxu0 0.0
    %1984 = vmatprep.subr.mxu0 0.0
    %1985 = vmatpush1.msra.mxu0 0.0
    %1986 = vmatprep.subr.mxu0 0.0
    %1987 = vmatpush1.msra.mxu0 0.0
    %1988 = vmatprep.subr.mxu0 0.0
    %1989 = vmatpush1.msra.mxu0 0.0
    %1990 = vmatprep.subr.mxu0 0.0
    %1991 = vmatpush1.msra.mxu0 0.0
    %1992 = vmatprep.subr.mxu0 %v1422
    %1993 = vmatpush1.msra.mxu0 %v1421
    %1994 = vmatprep.subr.mxu0 %v1420
    %1995 = vmatpush1.msra.mxu0 %v1419
    %1996 = vmatprep.subr.mxu0 %v1418
    %1997 = vmatpush1.msra.mxu0 %v1417
    %1998 = vmatprep.subr.mxu0 %v1416
    %1999 = vmatpush1.msra.mxu0 %v1415
    %2000 = vmatprep.subr.mxu0 0.0
    %2001 = vmatpush2.msra.mxu0 0.0
    %2002 = vmatprep.subr.mxu0 0.0
    %2003 = vmatpush2.msra.mxu0 0.0
    %2004 = vmatprep.subr.mxu0 0.0
    %2005 = vmatpush2.msra.mxu0 0.0
    %2006 = vmatprep.subr.mxu0 0.0
    %2007 = vmatpush2.msra.mxu0 0.0
    %2008 = vmatprep.subr.mxu0 0.0
    %2009 = vmatpush2.msra.mxu0 0.0
    %2010 = vmatprep.subr.mxu0 0.0
    %2011 = vmatpush2.msra.mxu0 0.0
    %2012 = vmatprep.subr.mxu0 0.0
    %2013 = vmatpush2.msra.mxu0 0.0
    %2014 = vmatprep.subr.mxu0 0.0
    %2015 = vmatpush2.msra.mxu0 0.0
    %2016 = vmatprep.subr.mxu0 0.0
    %2017 = vmatpush2.msra.mxu0 0.0
    %2018 = vmatprep.subr.mxu0 0.0
    %2019 = vmatpush2.msra.mxu0 0.0
    %2020 = vmatprep.subr.mxu0 0.0
    %2021 = vmatpush2.msra.mxu0 0.0
    %2022 = vmatprep.subr.mxu0 0.0
    %2023 = vmatpush2.msra.mxu0 0.0
    %2024 = vmatprep.subr.mxu0 0.0
    %2025 = vmatpush2.msra.mxu0 0.0
    %2026 = vmatprep.subr.mxu0 0.0
    %2027 = vmatpush2.msra.mxu0 0.0
    %2028 = vmatprep.subr.mxu0 0.0
    %2029 = vmatpush2.msra.mxu0 0.0
    %2030 = vmatprep.subr.mxu0 0.0
    %2031 = vmatpush2.msra.mxu0 0.0
    %2032 = vmatprep.mubr.f32.mxu0 0.0
    %2033 = vmatmul.mubr.f32.gmra.mxu0 %v1966
    %v2034 = vpop.f32.mrf.mxu0
    %v2035 = vadd.f32 0.0, %v2034
    %v2036 = vpop.f32.mrf.mxu0
    %v2037 = vadd.f32 0.0, %v2036
    %2038 = vdwg.mxu0
    %v2039 = vadd.f32 %v1310, %v2035
    %v2040 = vtanh.pop %v2039
    %2041 = vmatprep.subr.mxu0 0.0
    %2042 = vmatpush1.msra.mxu0 %v1414
    %2043 = vmatprep.subr.mxu0 0.0
    %2044 = vmatpush1.msra.mxu0 %v1413
    %2045 = vmatprep.subr.mxu0 0.0
    %2046 = vmatpush1.msra.mxu0 %v1412
    %2047 = vmatprep.subr.mxu0 0.0
    %2048 = vmatpush1.msra.mxu0 %v1411
    %2049 = vmatprep.subr.mxu0 0.0
    %2050 = vmatpush1.msra.mxu0 %v1410
    %2051 = vmatprep.subr.mxu0 0.0
    %2052 = vmatpush1.msra.mxu0 %v1409
    %2053 = vmatprep.subr.mxu0 0.0
    %2054 = vmatpush1.msra.mxu0 %v1408
    %2055 = vmatprep.subr.mxu0 0.0
    %2056 = vmatpush1.msra.mxu0 %v1407
    %2057 = vmatprep.subr.mxu0 0.0
    %2058 = vmatpush1.msra.mxu0 %v1406
    %2059 = vmatprep.subr.mxu0 0.0
    %2060 = vmatpush1.msra.mxu0 %v1405
    %2061 = vmatprep.subr.mxu0 0.0
    %2062 = vmatpush1.msra.mxu0 %v1404
    %2063 = vmatprep.subr.mxu0 0.0
    %2064 = vmatpush1.msra.mxu0 %v1403
    %2065 = vmatprep.subr.mxu0 0.0
    %2066 = vmatpush1.msra.mxu0 %v1402
    %2067 = vmatprep.subr.mxu0 0.0
    %2068 = vmatpush1.msra.mxu0 %v1401
    %2069 = vmatprep.subr.mxu0 0.0
    %2070 = vmatpush1.msra.mxu0 %v1400
    %2071 = vmatprep.subr.mxu0 0.0
    %2072 = vmatpush1.msra.mxu0 %v1399
    %2073 = vmatprep.subr.mxu0 0.0
    %2074 = vmatpush2.msra.mxu0 0.0
    %2075 = vmatprep.subr.mxu0 0.0
    %2076 = vmatpush2.msra.mxu0 0.0
    %2077 = vmatprep.subr.mxu0 0.0
    %2078 = vmatpush2.msra.mxu0 0.0
    %2079 = vmatprep.subr.mxu0 0.0
    %2080 = vmatpush2.msra.mxu0 0.0
    %2081 = vmatprep.subr.mxu0 0.0
    %2082 = vmatpush2.msra.mxu0 0.0
    %2083 = vmatprep.subr.mxu0 0.0
    %2084 = vmatpush2.msra.mxu0 0.0
    %2085 = vmatprep.subr.mxu0 0.0
    %2086 = vmatpush2.msra.mxu0 0.0
    %2087 = vmatprep.subr.mxu0 0.0
    %2088 = vmatpush2.msra.mxu0 0.0
    %2089 = vmatprep.subr.mxu0 0.0
    %2090 = vmatpush2.msra.mxu0 0.0
    %2091 = vmatprep.subr.mxu0 0.0
    %2092 = vmatpush2.msra.mxu0 0.0
    %2093 = vmatprep.subr.mxu0 0.0
    %2094 = vmatpush2.msra.mxu0 0.0
    %2095 = vmatprep.subr.mxu0 0.0
    %2096 = vmatpush2.msra.mxu0 0.0
    %2097 = vmatprep.subr.mxu0 0.0
    %2098 = vmatpush2.msra.mxu0 0.0
    %2099 = vmatprep.subr.mxu0 0.0
    %2100 = vmatpush2.msra.mxu0 0.0
    %2101 = vmatprep.subr.mxu0 0.0
    %2102 = vmatpush2.msra.mxu0 0.0
    %2103 = vmatprep.subr.mxu0 0.0
    %2104 = vmatpush2.msra.mxu0 0.0
    %2105 = vmatprep.mubr.f32.mxu0 0.0
    %2106 = vmatmul.mubr.f32.gmra.mxu0 %v2040
    %v2107 = vpop.f32.mrf.mxu0
    %v2108 = vadd.f32 0.0, %v2107
    %v2109 = vpop.f32.mrf.mxu0
    %2110 = vdwg.mxu0
    %v2111 = vsel %vm1516, %v2108, -inf
    %2112 = vmax.xlane.f32.xlu0 %v2111
    %v2113 = vpop.xlane.xlu0 %2112
    %v2114 = vsub.f32 %v2108, %v2113
    %v2115 = vmul.f32 %v2114, 1.442695
    %v2116 = vpow.pop %v2115
    %v2117 = vsel %vm1516, %v2116, 0.0
    %2118 = vadd.xlane.f32.xlu0 %v2117
    %v2119 = vpop.xlane.xlu0 %2118
    %v2120 = vrcp.pop %v2119
    %v2121 = vmul.f32 %v2116, %v2120
    %v2122 = vmul.f32 %v2121, %v1396
    %v2123 = vsel %vm1516, %v2122, 0.0
    %2124 = vadd.xlane.f32.xlu0 %v2123
    %v2125 = vpop.xlane.xlu0 %2124
    %v2126 = vadd.f32 %v2125, %v1434
    %2128 = vset.pattern.permute.xlu0 35
    %2129 = vperm.xlu0 %2128, %v2126
    %v2130 = vpop.permute.xlu0 %2129
    %v2132 = vmul.f32 %v2130, %v1439
    %v2133 = vadd.f32 %v2132, %v1444
    %v2134 = vadd.f32 %v2133, %v2037
    %v2135 = vxor.u32 %v2134, 2147483648
    %v2136 = vmul.f32 %v2135, 1.442695
    %v2137 = vpow.pop %v2136
    %v2138 = vadd.f32 %v2137, 1.0
    %v2139 = vrcp.pop %v2138
    %v2140 = vmul.f32 1.0, %v2139
    %v2141 = vtanh.pop %v2134
    %v2142 = vmul.f32 %v2140, %v1953
    %2144 = vrot.lane.b32.xlu0 %v2141, 80
    %v2145 = vpop.permute.xlu0 %2144
    %v2147 = vmul.f32 %v2140, %v2145
    %2149 = vrot.lane.b32.xlu0 %v2147, 16
    %v2150 = vpop.permute.xlu0 %2149
    %v2152 = vadd.f32 %v2142, %v2150
    %v2153 = vtanh.pop %v2152
    %2155 = vrot.lane.b32.xlu0 %v2153, 16
    %v2156 = vpop.permute.xlu0 %2155
    %v2158 = vmul.f32 %v2140, %v2156
    %2160 = vrot.lane.b32.xlu0 %v2158, 96
    %v2161 = vpop.permute.xlu0 %2160
    %v2163 = vsel %vm448, %v2161, %v2152
    %v2165 = vsel %vm76, %v2163, 0
    %2167 = vmatprep.subr.mxu0 0.0
    %2168 = vmatpush1.msra.mxu0 0.0
    %2169 = vmatprep.subr.mxu0 0.0
    %2170 = vmatpush1.msra.mxu0 0.0
    %2171 = vmatprep.subr.mxu0 0.0
    %2172 = vmatpush1.msra.mxu0 0.0
    %2173 = vmatprep.subr.mxu0 0.0
    %2174 = vmatpush1.msra.mxu0 0.0
    %2175 = vmatprep.subr.mxu0 0.0
    %2176 = vmatpush1.msra.mxu0 0.0
    %2177 = vmatprep.subr.mxu0 0.0
    %2178 = vmatpush1.msra.mxu0 0.0
    %2179 = vmatprep.subr.mxu0 0.0
    %2180 = vmatpush1.msra.mxu0 0.0
    %2181 = vmatprep.subr.mxu0 0.0
    %2182 = vmatpush1.msra.mxu0 0.0
    %2183 = vmatprep.subr.mxu0 0.0
    %2184 = vmatpush1.msra.mxu0 0.0
    %2185 = vmatprep.subr.mxu0 0.0
    %2186 = vmatpush1.msra.mxu0 0.0
    %2187 = vmatprep.subr.mxu0 0.0
    %2188 = vmatpush1.msra.mxu0 0.0
    %2189 = vmatprep.subr.mxu0 0.0
    %2190 = vmatpush1.msra.mxu0 0.0
    %2191 = vmatprep.subr.mxu0 %v1422
    %2192 = vmatpush1.msra.mxu0 %v1421
    %2193 = vmatprep.subr.mxu0 %v1420
    %2194 = vmatpush1.msra.mxu0 %v1419
    %2195 = vmatprep.subr.mxu0 %v1418
    %2196 = vmatpush1.msra.mxu0 %v1417
    %2197 = vmatprep.subr.mxu0 %v1416
    %2198 = vmatpush1.msra.mxu0 %v1415
    %2199 = vmatprep.subr.mxu0 0.0
    %2200 = vmatpush2.msra.mxu0 0.0
    %2201 = vmatprep.subr.mxu0 0.0
    %2202 = vmatpush2.msra.mxu0 0.0
    %2203 = vmatprep.subr.mxu0 0.0
    %2204 = vmatpush2.msra.mxu0 0.0
    %2205 = vmatprep.subr.mxu0 0.0
    %2206 = vmatpush2.msra.mxu0 0.0
    %2207 = vmatprep.subr.mxu0 0.0
    %2208 = vmatpush2.msra.mxu0 0.0
    %2209 = vmatprep.subr.mxu0 0.0
    %2210 = vmatpush2.msra.mxu0 0.0
    %2211 = vmatprep.subr.mxu0 0.0
    %2212 = vmatpush2.msra.mxu0 0.0
    %2213 = vmatprep.subr.mxu0 0.0
    %2214 = vmatpush2.msra.mxu0 0.0
    %2215 = vmatprep.subr.mxu0 0.0
    %2216 = vmatpush2.msra.mxu0 0.0
    %2217 = vmatprep.subr.mxu0 0.0
    %2218 = vmatpush2.msra.mxu0 0.0
    %2219 = vmatprep.subr.mxu0 0.0
    %2220 = vmatpush2.msra.mxu0 0.0
    %2221 = vmatprep.subr.mxu0 0.0
    %2222 = vmatpush2.msra.mxu0 0.0
    %2223 = vmatprep.subr.mxu0 0.0
    %2224 = vmatpush2.msra.mxu0 0.0
    %2225 = vmatprep.subr.mxu0 0.0
    %2226 = vmatpush2.msra.mxu0 0.0
    %2227 = vmatprep.subr.mxu0 0.0
    %2228 = vmatpush2.msra.mxu0 0.0
    %2229 = vmatprep.subr.mxu0 0.0
    %2230 = vmatpush2.msra.mxu0 0.0
    %2231 = vmatprep.mubr.f32.mxu0 0.0
    %2232 = vmatmul.mubr.f32.gmra.mxu0 %v2165
    %v2233 = vpop.f32.mrf.mxu0
    %v2234 = vadd.f32 0.0, %v2233
    %v2235 = vpop.f32.mrf.mxu0
    %v2236 = vadd.f32 0.0, %v2235
    %2237 = vdwg.mxu0
    %v2238 = vadd.f32 %v1310, %v2234
    %v2239 = vtanh.pop %v2238
    %2240 = vmatprep.subr.mxu0 0.0
    %2241 = vmatpush1.msra.mxu0 %v1414
    %2242 = vmatprep.subr.mxu0 0.0
    %2243 = vmatpush1.msra.mxu0 %v1413
    %2244 = vmatprep.subr.mxu0 0.0
    %2245 = vmatpush1.msra.mxu0 %v1412
    %2246 = vmatprep.subr.mxu0 0.0
    %2247 = vmatpush1.msra.mxu0 %v1411
    %2248 = vmatprep.subr.mxu0 0.0
    %2249 = vmatpush1.msra.mxu0 %v1410
    %2250 = vmatprep.subr.mxu0 0.0
    %2251 = vmatpush1.msra.mxu0 %v1409
    %2252 = vmatprep.subr.mxu0 0.0
    %2253 = vmatpush1.msra.mxu0 %v1408
    %2254 = vmatprep.subr.mxu0 0.0
    %2255 = vmatpush1.msra.mxu0 %v1407
    %2256 = vmatprep.subr.mxu0 0.0
    %2257 = vmatpush1.msra.mxu0 %v1406
    %2258 = vmatprep.subr.mxu0 0.0
    %2259 = vmatpush1.msra.mxu0 %v1405
    %2260 = vmatprep.subr.mxu0 0.0
    %2261 = vmatpush1.msra.mxu0 %v1404
    %2262 = vmatprep.subr.mxu0 0.0
    %2263 = vmatpush1.msra.mxu0 %v1403
    %2264 = vmatprep.subr.mxu0 0.0
    %2265 = vmatpush1.msra.mxu0 %v1402
    %2266 = vmatprep.subr.mxu0 0.0
    %2267 = vmatpush1.msra.mxu0 %v1401
    %2268 = vmatprep.subr.mxu0 0.0
    %2269 = vmatpush1.msra.mxu0 %v1400
    %2270 = vmatprep.subr.mxu0 0.0
    %2271 = vmatpush1.msra.mxu0 %v1399
    %2272 = vmatprep.subr.mxu0 0.0
    %2273 = vmatpush2.msra.mxu0 0.0
    %2274 = vmatprep.subr.mxu0 0.0
    %2275 = vmatpush2.msra.mxu0 0.0
    %2276 = vmatprep.subr.mxu0 0.0
    %2277 = vmatpush2.msra.mxu0 0.0
    %2278 = vmatprep.subr.mxu0 0.0
    %2279 = vmatpush2.msra.mxu0 0.0
    %2280 = vmatprep.subr.mxu0 0.0
    %2281 = vmatpush2.msra.mxu0 0.0
    %2282 = vmatprep.subr.mxu0 0.0
    %2283 = vmatpush2.msra.mxu0 0.0
    %2284 = vmatprep.subr.mxu0 0.0
    %2285 = vmatpush2.msra.mxu0 0.0
    %2286 = vmatprep.subr.mxu0 0.0
    %2287 = vmatpush2.msra.mxu0 0.0
    %2288 = vmatprep.subr.mxu0 0.0
    %2289 = vmatpush2.msra.mxu0 0.0
    %2290 = vmatprep.subr.mxu0 0.0
    %2291 = vmatpush2.msra.mxu0 0.0
    %2292 = vmatprep.subr.mxu0 0.0
    %2293 = vmatpush2.msra.mxu0 0.0
    %2294 = vmatprep.subr.mxu0 0.0
    %2295 = vmatpush2.msra.mxu0 0.0
    %2296 = vmatprep.subr.mxu0 0.0
    %2297 = vmatpush2.msra.mxu0 0.0
    %2298 = vmatprep.subr.mxu0 0.0
    %2299 = vmatpush2.msra.mxu0 0.0
    %2300 = vmatprep.subr.mxu0 0.0
    %2301 = vmatpush2.msra.mxu0 0.0
    %2302 = vmatprep.subr.mxu0 0.0
    %2303 = vmatpush2.msra.mxu0 0.0
    %2304 = vmatprep.mubr.f32.mxu0 0.0
    %2305 = vmatmul.mubr.f32.gmra.mxu0 %v2239
    %v2306 = vpop.f32.mrf.mxu0
    %v2307 = vadd.f32 0.0, %v2306
    %v2308 = vpop.f32.mrf.mxu0
    %2309 = vdwg.mxu0
    %v2310 = vsel %vm1516, %v2307, -inf
    %2311 = vmax.xlane.f32.xlu0 %v2310
    %v2312 = vpop.xlane.xlu0 %2311
    %v2313 = vsub.f32 %v2307, %v2312
    %v2314 = vmul.f32 %v2313, 1.442695
    %v2315 = vpow.pop %v2314
    %v2316 = vsel %vm1516, %v2315, 0.0
    %2317 = vadd.xlane.f32.xlu0 %v2316
    %v2318 = vpop.xlane.xlu0 %2317
    %v2319 = vrcp.pop %v2318
    %v2320 = vmul.f32 %v2315, %v2319
    %v2321 = vmul.f32 %v2320, %v1396
    %v2322 = vsel %vm1516, %v2321, 0.0
    %2323 = vadd.xlane.f32.xlu0 %v2322
    %v2324 = vpop.xlane.xlu0 %2323
    %v2325 = vadd.f32 %v2324, %v1434
    %2327 = vset.pattern.permute.xlu0 36
    %2328 = vperm.xlu0 %2327, %v2325
    %v2329 = vpop.permute.xlu0 %2328
    %v2331 = vmul.f32 %v2329, %v1439
    %v2332 = vadd.f32 %v2331, %v1444
    %v2333 = vadd.f32 %v2332, %v2236
    %v2334 = vxor.u32 %v2333, 2147483648
    %v2335 = vmul.f32 %v2334, 1.442695
    %v2336 = vpow.pop %v2335
    %v2337 = vadd.f32 %v2336, 1.0
    %v2338 = vrcp.pop %v2337
    %v2339 = vmul.f32 1.0, %v2338
    %v2340 = vtanh.pop %v2333
    %v2341 = vmul.f32 %v2339, %v2152
    %2343 = vrot.lane.b32.xlu0 %v2340, 80
    %v2344 = vpop.permute.xlu0 %2343
    %v2346 = vmul.f32 %v2339, %v2344
    %2348 = vrot.lane.b32.xlu0 %v2346, 16
    %v2349 = vpop.permute.xlu0 %2348
    %v2351 = vadd.f32 %v2341, %v2349
    %v2352 = vtanh.pop %v2351
    %2354 = vrot.lane.b32.xlu0 %v2352, 16
    %v2355 = vpop.permute.xlu0 %2354
    %v2357 = vmul.f32 %v2339, %v2355
    %2359 = vrot.lane.b32.xlu0 %v2357, 96
    %v2360 = vpop.permute.xlu0 %2359
    %v2362 = vsel %vm448, %v2360, %v2351
    %v2364 = vsel %vm76, %v2362, 0
    %2366 = vmatprep.subr.mxu0 0.0
    %2367 = vmatpush1.msra.mxu0 0.0
    %2368 = vmatprep.subr.mxu0 0.0
    %2369 = vmatpush1.msra.mxu0 0.0
    %2370 = vmatprep.subr.mxu0 0.0
    %2371 = vmatpush1.msra.mxu0 0.0
    %2372 = vmatprep.subr.mxu0 0.0
    %2373 = vmatpush1.msra.mxu0 0.0
    %2374 = vmatprep.subr.mxu0 0.0
    %2375 = vmatpush1.msra.mxu0 0.0
    %2376 = vmatprep.subr.mxu0 0.0
    %2377 = vmatpush1.msra.mxu0 0.0
    %2378 = vmatprep.subr.mxu0 0.0
    %2379 = vmatpush1.msra.mxu0 0.0
    %2380 = vmatprep.subr.mxu0 0.0
    %2381 = vmatpush1.msra.mxu0 0.0
    %2382 = vmatprep.subr.mxu0 0.0
    %2383 = vmatpush1.msra.mxu0 0.0
    %2384 = vmatprep.subr.mxu0 0.0
    %2385 = vmatpush1.msra.mxu0 0.0
    %2386 = vmatprep.subr.mxu0 0.0
    %2387 = vmatpush1.msra.mxu0 0.0
    %2388 = vmatprep.subr.mxu0 0.0
    %2389 = vmatpush1.msra.mxu0 0.0
    %2390 = vmatprep.subr.mxu0 %v1422
    %2391 = vmatpush1.msra.mxu0 %v1421
    %2392 = vmatprep.subr.mxu0 %v1420
    %2393 = vmatpush1.msra.mxu0 %v1419
    %2394 = vmatprep.subr.mxu0 %v1418
    %2395 = vmatpush1.msra.mxu0 %v1417
    %2396 = vmatprep.subr.mxu0 %v1416
    %2397 = vmatpush1.msra.mxu0 %v1415
    %2398 = vmatprep.subr.mxu0 0.0
    %2399 = vmatpush2.msra.mxu0 0.0
    %2400 = vmatprep.subr.mxu0 0.0
    %2401 = vmatpush2.msra.mxu0 0.0
    %2402 = vmatprep.subr.mxu0 0.0
    %2403 = vmatpush2.msra.mxu0 0.0
    %2404 = vmatprep.subr.mxu0 0.0
    %2405 = vmatpush2.msra.mxu0 0.0
    %2406 = vmatprep.subr.mxu0 0.0
    %2407 = vmatpush2.msra.mxu0 0.0
    %2408 = vmatprep.subr.mxu0 0.0
    %2409 = vmatpush2.msra.mxu0 0.0
    %2410 = vmatprep.subr.mxu0 0.0
    %2411 = vmatpush2.msra.mxu0 0.0
    %2412 = vmatprep.subr.mxu0 0.0
    %2413 = vmatpush2.msra.mxu0 0.0
    %2414 = vmatprep.subr.mxu0 0.0
    %2415 = vmatpush2.msra.mxu0 0.0
    %2416 = vmatprep.subr.mxu0 0.0
    %2417 = vmatpush2.msra.mxu0 0.0
    %2418 = vmatprep.subr.mxu0 0.0
    %2419 = vmatpush2.msra.mxu0 0.0
    %2420 = vmatprep.subr.mxu0 0.0
    %2421 = vmatpush2.msra.mxu0 0.0
    %2422 = vmatprep.subr.mxu0 0.0
    %2423 = vmatpush2.msra.mxu0 0.0
    %2424 = vmatprep.subr.mxu0 0.0
    %2425 = vmatpush2.msra.mxu0 0.0
    %2426 = vmatprep.subr.mxu0 0.0
    %2427 = vmatpush2.msra.mxu0 0.0
    %2428 = vmatprep.subr.mxu0 0.0
    %2429 = vmatpush2.msra.mxu0 0.0
    %2430 = vmatprep.mubr.f32.mxu0 0.0
    %2431 = vmatmul.mubr.f32.gmra.mxu0 %v2364
    %v2432 = vpop.f32.mrf.mxu0
    %v2433 = vadd.f32 0.0, %v2432
    %v2434 = vpop.f32.mrf.mxu0
    %v2435 = vadd.f32 0.0, %v2434
    %2436 = vdwg.mxu0
    %v2437 = vadd.f32 %v1310, %v2433
    %v2438 = vtanh.pop %v2437
    %2439 = vmatprep.subr.mxu0 0.0
    %2440 = vmatpush1.msra.mxu0 %v1414
    %2441 = vmatprep.subr.mxu0 0.0
    %2442 = vmatpush1.msra.mxu0 %v1413
    %2443 = vmatprep.subr.mxu0 0.0
    %2444 = vmatpush1.msra.mxu0 %v1412
    %2445 = vmatprep.subr.mxu0 0.0
    %2446 = vmatpush1.msra.mxu0 %v1411
    %2447 = vmatprep.subr.mxu0 0.0
    %2448 = vmatpush1.msra.mxu0 %v1410
    %2449 = vmatprep.subr.mxu0 0.0
    %2450 = vmatpush1.msra.mxu0 %v1409
    %2451 = vmatprep.subr.mxu0 0.0
    %2452 = vmatpush1.msra.mxu0 %v1408
    %2453 = vmatprep.subr.mxu0 0.0
    %2454 = vmatpush1.msra.mxu0 %v1407
    %2455 = vmatprep.subr.mxu0 0.0
    %2456 = vmatpush1.msra.mxu0 %v1406
    %2457 = vmatprep.subr.mxu0 0.0
    %2458 = vmatpush1.msra.mxu0 %v1405
    %2459 = vmatprep.subr.mxu0 0.0
    %2460 = vmatpush1.msra.mxu0 %v1404
    %2461 = vmatprep.subr.mxu0 0.0
    %2462 = vmatpush1.msra.mxu0 %v1403
    %2463 = vmatprep.subr.mxu0 0.0
    %2464 = vmatpush1.msra.mxu0 %v1402
    %2465 = vmatprep.subr.mxu0 0.0
    %2466 = vmatpush1.msra.mxu0 %v1401
    %2467 = vmatprep.subr.mxu0 0.0
    %2468 = vmatpush1.msra.mxu0 %v1400
    %2469 = vmatprep.subr.mxu0 0.0
    %2470 = vmatpush1.msra.mxu0 %v1399
    %2471 = vmatprep.subr.mxu0 0.0
    %2472 = vmatpush2.msra.mxu0 0.0
    %2473 = vmatprep.subr.mxu0 0.0
    %2474 = vmatpush2.msra.mxu0 0.0
    %2475 = vmatprep.subr.mxu0 0.0
    %2476 = vmatpush2.msra.mxu0 0.0
    %2477 = vmatprep.subr.mxu0 0.0
    %2478 = vmatpush2.msra.mxu0 0.0
    %2479 = vmatprep.subr.mxu0 0.0
    %2480 = vmatpush2.msra.mxu0 0.0
    %2481 = vmatprep.subr.mxu0 0.0
    %2482 = vmatpush2.msra.mxu0 0.0
    %2483 = vmatprep.subr.mxu0 0.0
    %2484 = vmatpush2.msra.mxu0 0.0
    %2485 = vmatprep.subr.mxu0 0.0
    %2486 = vmatpush2.msra.mxu0 0.0
    %2487 = vmatprep.subr.mxu0 0.0
    %2488 = vmatpush2.msra.mxu0 0.0
    %2489 = vmatprep.subr.mxu0 0.0
    %2490 = vmatpush2.msra.mxu0 0.0
    %2491 = vmatprep.subr.mxu0 0.0
    %2492 = vmatpush2.msra.mxu0 0.0
    %2493 = vmatprep.subr.mxu0 0.0
    %2494 = vmatpush2.msra.mxu0 0.0
    %2495 = vmatprep.subr.mxu0 0.0
    %2496 = vmatpush2.msra.mxu0 0.0
    %2497 = vmatprep.subr.mxu0 0.0
    %2498 = vmatpush2.msra.mxu0 0.0
    %2499 = vmatprep.subr.mxu0 0.0
    %2500 = vmatpush2.msra.mxu0 0.0
    %2501 = vmatprep.subr.mxu0 0.0
    %2502 = vmatpush2.msra.mxu0 0.0
    %2503 = vmatprep.mubr.f32.mxu0 0.0
    %2504 = vmatmul.mubr.f32.gmra.mxu0 %v2438
    %v2505 = vpop.f32.mrf.mxu0
    %v2506 = vadd.f32 0.0, %v2505
    %v2507 = vpop.f32.mrf.mxu0
    %2508 = vdwg.mxu0
    %v2509 = vsel %vm1516, %v2506, -inf
    %2510 = vmax.xlane.f32.xlu0 %v2509
    %v2511 = vpop.xlane.xlu0 %2510
    %v2512 = vsub.f32 %v2506, %v2511
    %v2513 = vmul.f32 %v2512, 1.442695
    %v2514 = vpow.pop %v2513
    %v2515 = vsel %vm1516, %v2514, 0.0
    %2516 = vadd.xlane.f32.xlu0 %v2515
    %v2517 = vpop.xlane.xlu0 %2516
    %v2518 = vrcp.pop %v2517
    %v2519 = vmul.f32 %v2514, %v2518
    %v2520 = vmul.f32 %v2519, %v1396
    %v2521 = vsel %vm1516, %v2520, 0.0
    %2522 = vadd.xlane.f32.xlu0 %v2521
    %v2523 = vpop.xlane.xlu0 %2522
    %v2524 = vadd.f32 %v2523, %v1434
    %2526 = vset.pattern.permute.xlu0 37
    %2527 = vperm.xlu0 %2526, %v2524
    %v2528 = vpop.permute.xlu0 %2527
    %v2530 = vmul.f32 %v2528, %v1439
    %v2531 = vadd.f32 %v2530, %v1444
    %v2532 = vadd.f32 %v2531, %v2435
    %v2533 = vxor.u32 %v2532, 2147483648
    %v2534 = vmul.f32 %v2533, 1.442695
    %v2535 = vpow.pop %v2534
    %v2536 = vadd.f32 %v2535, 1.0
    %v2537 = vrcp.pop %v2536
    %v2538 = vmul.f32 1.0, %v2537
    %v2539 = vtanh.pop %v2532
    %v2540 = vmul.f32 %v2538, %v2351
    %2542 = vrot.lane.b32.xlu0 %v2539, 80
    %v2543 = vpop.permute.xlu0 %2542
    %v2545 = vmul.f32 %v2538, %v2543
    %2547 = vrot.lane.b32.xlu0 %v2545, 16
    %v2548 = vpop.permute.xlu0 %2547
    %v2550 = vadd.f32 %v2540, %v2548
    %v2551 = vtanh.pop %v2550
    %2553 = vrot.lane.b32.xlu0 %v2551, 16
    %v2554 = vpop.permute.xlu0 %2553
    %v2556 = vmul.f32 %v2538, %v2554
    %2558 = vrot.lane.b32.xlu0 %v2556, 96
    %v2559 = vpop.permute.xlu0 %2558
    %v2561 = vsel %vm448, %v2559, %v2550
    %v2563 = vsel %vm76, %v2561, 0
    %2565 = vmatprep.subr.mxu0 0.0
    %2566 = vmatpush1.msra.mxu0 0.0
    %2567 = vmatprep.subr.mxu0 0.0
    %2568 = vmatpush1.msra.mxu0 0.0
    %2569 = vmatprep.subr.mxu0 0.0
    %2570 = vmatpush1.msra.mxu0 0.0
    %2571 = vmatprep.subr.mxu0 0.0
    %2572 = vmatpush1.msra.mxu0 0.0
    %2573 = vmatprep.subr.mxu0 0.0
    %2574 = vmatpush1.msra.mxu0 0.0
    %2575 = vmatprep.subr.mxu0 0.0
    %2576 = vmatpush1.msra.mxu0 0.0
    %2577 = vmatprep.subr.mxu0 0.0
    %2578 = vmatpush1.msra.mxu0 0.0
    %2579 = vmatprep.subr.mxu0 0.0
    %2580 = vmatpush1.msra.mxu0 0.0
    %2581 = vmatprep.subr.mxu0 0.0
    %2582 = vmatpush1.msra.mxu0 0.0
    %2583 = vmatprep.subr.mxu0 0.0
    %2584 = vmatpush1.msra.mxu0 0.0
    %2585 = vmatprep.subr.mxu0 0.0
    %2586 = vmatpush1.msra.mxu0 0.0
    %2587 = vmatprep.subr.mxu0 0.0
    %2588 = vmatpush1.msra.mxu0 0.0
    %2589 = vmatprep.subr.mxu0 %v1422
    %2590 = vmatpush1.msra.mxu0 %v1421
    %2591 = vmatprep.subr.mxu0 %v1420
    %2592 = vmatpush1.msra.mxu0 %v1419
    %2593 = vmatprep.subr.mxu0 %v1418
    %2594 = vmatpush1.msra.mxu0 %v1417
    %2595 = vmatprep.subr.mxu0 %v1416
    %2596 = vmatpush1.msra.mxu0 %v1415
    %2597 = vmatprep.subr.mxu0 0.0
    %2598 = vmatpush2.msra.mxu0 0.0
    %2599 = vmatprep.subr.mxu0 0.0
    %2600 = vmatpush2.msra.mxu0 0.0
    %2601 = vmatprep.subr.mxu0 0.0
    %2602 = vmatpush2.msra.mxu0 0.0
    %2603 = vmatprep.subr.mxu0 0.0
    %2604 = vmatpush2.msra.mxu0 0.0
    %2605 = vmatprep.subr.mxu0 0.0
    %2606 = vmatpush2.msra.mxu0 0.0
    %2607 = vmatprep.subr.mxu0 0.0
    %2608 = vmatpush2.msra.mxu0 0.0
    %2609 = vmatprep.subr.mxu0 0.0
    %2610 = vmatpush2.msra.mxu0 0.0
    %2611 = vmatprep.subr.mxu0 0.0
    %2612 = vmatpush2.msra.mxu0 0.0
    %2613 = vmatprep.subr.mxu0 0.0
    %2614 = vmatpush2.msra.mxu0 0.0
    %2615 = vmatprep.subr.mxu0 0.0
    %2616 = vmatpush2.msra.mxu0 0.0
    %2617 = vmatprep.subr.mxu0 0.0
    %2618 = vmatpush2.msra.mxu0 0.0
    %2619 = vmatprep.subr.mxu0 0.0
    %2620 = vmatpush2.msra.mxu0 0.0
    %2621 = vmatprep.subr.mxu0 0.0
    %2622 = vmatpush2.msra.mxu0 0.0
    %2623 = vmatprep.subr.mxu0 0.0
    %2624 = vmatpush2.msra.mxu0 0.0
    %2625 = vmatprep.subr.mxu0 0.0
    %2626 = vmatpush2.msra.mxu0 0.0
    %2627 = vmatprep.subr.mxu0 0.0
    %2628 = vmatpush2.msra.mxu0 0.0
    %2629 = vmatprep.mubr.f32.mxu0 0.0
    %2630 = vmatmul.mubr.f32.gmra.mxu0 %v2563
    %v2631 = vpop.f32.mrf.mxu0
    %v2632 = vadd.f32 0.0, %v2631
    %v2633 = vpop.f32.mrf.mxu0
    %v2634 = vadd.f32 0.0, %v2633
    %2635 = vdwg.mxu0
    %v2636 = vadd.f32 %v1310, %v2632
    %v2637 = vtanh.pop %v2636
    %2638 = vmatprep.subr.mxu0 0.0
    %2639 = vmatpush1.msra.mxu0 %v1414
    %2640 = vmatprep.subr.mxu0 0.0
    %2641 = vmatpush1.msra.mxu0 %v1413
    %2642 = vmatprep.subr.mxu0 0.0
    %2643 = vmatpush1.msra.mxu0 %v1412
    %2644 = vmatprep.subr.mxu0 0.0
    %2645 = vmatpush1.msra.mxu0 %v1411
    %2646 = vmatprep.subr.mxu0 0.0
    %2647 = vmatpush1.msra.mxu0 %v1410
    %2648 = vmatprep.subr.mxu0 0.0
    %2649 = vmatpush1.msra.mxu0 %v1409
    %2650 = vmatprep.subr.mxu0 0.0
    %2651 = vmatpush1.msra.mxu0 %v1408
    %2652 = vmatprep.subr.mxu0 0.0
    %2653 = vmatpush1.msra.mxu0 %v1407
    %2654 = vmatprep.subr.mxu0 0.0
    %2655 = vmatpush1.msra.mxu0 %v1406
    %2656 = vmatprep.subr.mxu0 0.0
    %2657 = vmatpush1.msra.mxu0 %v1405
    %2658 = vmatprep.subr.mxu0 0.0
    %2659 = vmatpush1.msra.mxu0 %v1404
    %2660 = vmatprep.subr.mxu0 0.0
    %2661 = vmatpush1.msra.mxu0 %v1403
    %2662 = vmatprep.subr.mxu0 0.0
    %2663 = vmatpush1.msra.mxu0 %v1402
    %2664 = vmatprep.subr.mxu0 0.0
    %2665 = vmatpush1.msra.mxu0 %v1401
    %2666 = vmatprep.subr.mxu0 0.0
    %2667 = vmatpush1.msra.mxu0 %v1400
    %2668 = vmatprep.subr.mxu0 0.0
    %2669 = vmatpush1.msra.mxu0 %v1399
    %2670 = vmatprep.subr.mxu0 0.0
    %2671 = vmatpush2.msra.mxu0 0.0
    %2672 = vmatprep.subr.mxu0 0.0
    %2673 = vmatpush2.msra.mxu0 0.0
    %2674 = vmatprep.subr.mxu0 0.0
    %2675 = vmatpush2.msra.mxu0 0.0
    %2676 = vmatprep.subr.mxu0 0.0
    %2677 = vmatpush2.msra.mxu0 0.0
    %2678 = vmatprep.subr.mxu0 0.0
    %2679 = vmatpush2.msra.mxu0 0.0
    %2680 = vmatprep.subr.mxu0 0.0
    %2681 = vmatpush2.msra.mxu0 0.0
    %2682 = vmatprep.subr.mxu0 0.0
    %2683 = vmatpush2.msra.mxu0 0.0
    %2684 = vmatprep.subr.mxu0 0.0
    %2685 = vmatpush2.msra.mxu0 0.0
    %2686 = vmatprep.subr.mxu0 0.0
    %2687 = vmatpush2.msra.mxu0 0.0
    %2688 = vmatprep.subr.mxu0 0.0
    %2689 = vmatpush2.msra.mxu0 0.0
    %2690 = vmatprep.subr.mxu0 0.0
    %2691 = vmatpush2.msra.mxu0 0.0
    %2692 = vmatprep.subr.mxu0 0.0
    %2693 = vmatpush2.msra.mxu0 0.0
    %2694 = vmatprep.subr.mxu0 0.0
    %2695 = vmatpush2.msra.mxu0 0.0
    %2696 = vmatprep.subr.mxu0 0.0
    %2697 = vmatpush2.msra.mxu0 0.0
    %2698 = vmatprep.subr.mxu0 0.0
    %2699 = vmatpush2.msra.mxu0 0.0
    %2700 = vmatprep.subr.mxu0 0.0
    %2701 = vmatpush2.msra.mxu0 0.0
    %2702 = vmatprep.mubr.f32.mxu0 0.0
    %2703 = vmatmul.mubr.f32.gmra.mxu0 %v2637
    %v2704 = vpop.f32.mrf.mxu0
    %v2705 = vadd.f32 0.0, %v2704
    %v2706 = vpop.f32.mrf.mxu0
    %2707 = vdwg.mxu0
    %v2708 = vsel %vm1516, %v2705, -inf
    %2709 = vmax.xlane.f32.xlu0 %v2708
    %v2710 = vpop.xlane.xlu0 %2709
    %v2711 = vsub.f32 %v2705, %v2710
    %v2712 = vmul.f32 %v2711, 1.442695
    %v2713 = vpow.pop %v2712
    %v2714 = vsel %vm1516, %v2713, 0.0
    %2715 = vadd.xlane.f32.xlu0 %v2714
    %v2716 = vpop.xlane.xlu0 %2715
    %v2717 = vrcp.pop %v2716
    %v2718 = vmul.f32 %v2713, %v2717
    %v2719 = vmul.f32 %v2718, %v1396
    %v2720 = vsel %vm1516, %v2719, 0.0
    %2721 = vadd.xlane.f32.xlu0 %v2720
    %v2722 = vpop.xlane.xlu0 %2721
    %v2723 = vadd.f32 %v2722, %v1434
    %2725 = vset.pattern.permute.xlu0 38
    %2726 = vperm.xlu0 %2725, %v2723
    %v2727 = vpop.permute.xlu0 %2726
    %v2729 = vmul.f32 %v2727, %v1439
    %v2730 = vadd.f32 %v2729, %v1444
    %v2731 = vadd.f32 %v2730, %v2634
    %v2732 = vxor.u32 %v2731, 2147483648
    %v2733 = vmul.f32 %v2732, 1.442695
    %v2734 = vpow.pop %v2733
    %v2735 = vadd.f32 %v2734, 1.0
    %v2736 = vrcp.pop %v2735
    %v2737 = vmul.f32 1.0, %v2736
    %v2738 = vtanh.pop %v2731
    %v2739 = vmul.f32 %v2737, %v2550
    %2741 = vrot.lane.b32.xlu0 %v2738, 80
    %v2742 = vpop.permute.xlu0 %2741
    %v2744 = vmul.f32 %v2737, %v2742
    %2746 = vrot.lane.b32.xlu0 %v2744, 16
    %v2747 = vpop.permute.xlu0 %2746
    %v2749 = vadd.f32 %v2739, %v2747
    %v2750 = vtanh.pop %v2749
    %2752 = vrot.lane.b32.xlu0 %v2750, 16
    %v2753 = vpop.permute.xlu0 %2752
    %v2755 = vmul.f32 %v2737, %v2753
    %2757 = vrot.lane.b32.xlu0 %v2755, 96
    %v2758 = vpop.permute.xlu0 %2757
    %v2760 = vsel %vm448, %v2758, %v2749
    %v2762 = vsel %vm76, %v2760, 0
    %2764 = vmatprep.subr.mxu0 0.0
    %2765 = vmatpush1.msra.mxu0 0.0
    %2766 = vmatprep.subr.mxu0 0.0
    %2767 = vmatpush1.msra.mxu0 0.0
    %2768 = vmatprep.subr.mxu0 0.0
    %2769 = vmatpush1.msra.mxu0 0.0
    %2770 = vmatprep.subr.mxu0 0.0
    %2771 = vmatpush1.msra.mxu0 0.0
    %2772 = vmatprep.subr.mxu0 0.0
    %2773 = vmatpush1.msra.mxu0 0.0
    %2774 = vmatprep.subr.mxu0 0.0
    %2775 = vmatpush1.msra.mxu0 0.0
    %2776 = vmatprep.subr.mxu0 0.0
    %2777 = vmatpush1.msra.mxu0 0.0
    %2778 = vmatprep.subr.mxu0 0.0
    %2779 = vmatpush1.msra.mxu0 0.0
    %2780 = vmatprep.subr.mxu0 0.0
    %2781 = vmatpush1.msra.mxu0 0.0
    %2782 = vmatprep.subr.mxu0 0.0
    %2783 = vmatpush1.msra.mxu0 0.0
    %2784 = vmatprep.subr.mxu0 0.0
    %2785 = vmatpush1.msra.mxu0 0.0
    %2786 = vmatprep.subr.mxu0 0.0
    %2787 = vmatpush1.msra.mxu0 0.0
    %2788 = vmatprep.subr.mxu0 %v1422
    %2789 = vmatpush1.msra.mxu0 %v1421
    %2790 = vmatprep.subr.mxu0 %v1420
    %2791 = vmatpush1.msra.mxu0 %v1419
    %2792 = vmatprep.subr.mxu0 %v1418
    %2793 = vmatpush1.msra.mxu0 %v1417
    %2794 = vmatprep.subr.mxu0 %v1416
    %2795 = vmatpush1.msra.mxu0 %v1415
    %2796 = vmatprep.subr.mxu0 0.0
    %2797 = vmatpush2.msra.mxu0 0.0
    %2798 = vmatprep.subr.mxu0 0.0
    %2799 = vmatpush2.msra.mxu0 0.0
    %2800 = vmatprep.subr.mxu0 0.0
    %2801 = vmatpush2.msra.mxu0 0.0
    %2802 = vmatprep.subr.mxu0 0.0
    %2803 = vmatpush2.msra.mxu0 0.0
    %2804 = vmatprep.subr.mxu0 0.0
    %2805 = vmatpush2.msra.mxu0 0.0
    %2806 = vmatprep.subr.mxu0 0.0
    %2807 = vmatpush2.msra.mxu0 0.0
    %2808 = vmatprep.subr.mxu0 0.0
    %2809 = vmatpush2.msra.mxu0 0.0
    %2810 = vmatprep.subr.mxu0 0.0
    %2811 = vmatpush2.msra.mxu0 0.0
    %2812 = vmatprep.subr.mxu0 0.0
    %2813 = vmatpush2.msra.mxu0 0.0
    %2814 = vmatprep.subr.mxu0 0.0
    %2815 = vmatpush2.msra.mxu0 0.0
    %2816 = vmatprep.subr.mxu0 0.0
    %2817 = vmatpush2.msra.mxu0 0.0
    %2818 = vmatprep.subr.mxu0 0.0
    %2819 = vmatpush2.msra.mxu0 0.0
    %2820 = vmatprep.subr.mxu0 0.0
    %2821 = vmatpush2.msra.mxu0 0.0
    %2822 = vmatprep.subr.mxu0 0.0
    %2823 = vmatpush2.msra.mxu0 0.0
    %2824 = vmatprep.subr.mxu0 0.0
    %2825 = vmatpush2.msra.mxu0 0.0
    %2826 = vmatprep.subr.mxu0 0.0
    %2827 = vmatpush2.msra.mxu0 0.0
    %2828 = vmatprep.mubr.f32.mxu0 0.0
    %2829 = vmatmul.mubr.f32.gmra.mxu0 %v2762
    %v2830 = vpop.f32.mrf.mxu0
    %v2831 = vadd.f32 0.0, %v2830
    %v2832 = vpop.f32.mrf.mxu0
    %v2833 = vadd.f32 0.0, %v2832
    %2834 = vdwg.mxu0
    %v2835 = vadd.f32 %v1310, %v2831
    %v2836 = vtanh.pop %v2835
    %2837 = vmatprep.subr.mxu0 0.0
    %2838 = vmatpush1.msra.mxu0 %v1414
    %2839 = vmatprep.subr.mxu0 0.0
    %2840 = vmatpush1.msra.mxu0 %v1413
    %2841 = vmatprep.subr.mxu0 0.0
    %2842 = vmatpush1.msra.mxu0 %v1412
    %2843 = vmatprep.subr.mxu0 0.0
    %2844 = vmatpush1.msra.mxu0 %v1411
    %2845 = vmatprep.subr.mxu0 0.0
    %2846 = vmatpush1.msra.mxu0 %v1410
    %2847 = vmatprep.subr.mxu0 0.0
    %2848 = vmatpush1.msra.mxu0 %v1409
    %2849 = vmatprep.subr.mxu0 0.0
    %2850 = vmatpush1.msra.mxu0 %v1408
    %2851 = vmatprep.subr.mxu0 0.0
    %2852 = vmatpush1.msra.mxu0 %v1407
    %2853 = vmatprep.subr.mxu0 0.0
    %2854 = vmatpush1.msra.mxu0 %v1406
    %2855 = vmatprep.subr.mxu0 0.0
    %2856 = vmatpush1.msra.mxu0 %v1405
    %2857 = vmatprep.subr.mxu0 0.0
    %2858 = vmatpush1.msra.mxu0 %v1404
    %2859 = vmatprep.subr.mxu0 0.0
    %2860 = vmatpush1.msra.mxu0 %v1403
    %2861 = vmatprep.subr.mxu0 0.0
    %2862 = vmatpush1.msra.mxu0 %v1402
    %2863 = vmatprep.subr.mxu0 0.0
    %2864 = vmatpush1.msra.mxu0 %v1401
    %2865 = vmatprep.subr.mxu0 0.0
    %2866 = vmatpush1.msra.mxu0 %v1400
    %2867 = vmatprep.subr.mxu0 0.0
    %2868 = vmatpush1.msra.mxu0 %v1399
    %2869 = vmatprep.subr.mxu0 0.0
    %2870 = vmatpush2.msra.mxu0 0.0
    %2871 = vmatprep.subr.mxu0 0.0
    %2872 = vmatpush2.msra.mxu0 0.0
    %2873 = vmatprep.subr.mxu0 0.0
    %2874 = vmatpush2.msra.mxu0 0.0
    %2875 = vmatprep.subr.mxu0 0.0
    %2876 = vmatpush2.msra.mxu0 0.0
    %2877 = vmatprep.subr.mxu0 0.0
    %2878 = vmatpush2.msra.mxu0 0.0
    %2879 = vmatprep.subr.mxu0 0.0
    %2880 = vmatpush2.msra.mxu0 0.0
    %2881 = vmatprep.subr.mxu0 0.0
    %2882 = vmatpush2.msra.mxu0 0.0
    %2883 = vmatprep.subr.mxu0 0.0
    %2884 = vmatpush2.msra.mxu0 0.0
    %2885 = vmatprep.subr.mxu0 0.0
    %2886 = vmatpush2.msra.mxu0 0.0
    %2887 = vmatprep.subr.mxu0 0.0
    %2888 = vmatpush2.msra.mxu0 0.0
    %2889 = vmatprep.subr.mxu0 0.0
    %2890 = vmatpush2.msra.mxu0 0.0
    %2891 = vmatprep.subr.mxu0 0.0
    %2892 = vmatpush2.msra.mxu0 0.0
    %2893 = vmatprep.subr.mxu0 0.0
    %2894 = vmatpush2.msra.mxu0 0.0
    %2895 = vmatprep.subr.mxu0 0.0
    %2896 = vmatpush2.msra.mxu0 0.0
    %2897 = vmatprep.subr.mxu0 0.0
    %2898 = vmatpush2.msra.mxu0 0.0
    %2899 = vmatprep.subr.mxu0 0.0
    %2900 = vmatpush2.msra.mxu0 0.0
    %2901 = vmatprep.mubr.f32.mxu0 0.0
    %2902 = vmatmul.mubr.f32.gmra.mxu0 %v2836
    %v2903 = vpop.f32.mrf.mxu0
    %v2904 = vadd.f32 0.0, %v2903
    %v2905 = vpop.f32.mrf.mxu0
    %2906 = vdwg.mxu0
    %v2907 = vsel %vm1516, %v2904, -inf
    %2908 = vmax.xlane.f32.xlu0 %v2907
    %v2909 = vpop.xlane.xlu0 %2908
    %v2910 = vsub.f32 %v2904, %v2909
    %v2911 = vmul.f32 %v2910, 1.442695
    %v2912 = vpow.pop %v2911
    %v2913 = vsel %vm1516, %v2912, 0.0
    %2914 = vadd.xlane.f32.xlu0 %v2913
    %v2915 = vpop.xlane.xlu0 %2914
    %v2916 = vrcp.pop %v2915
    %v2917 = vmul.f32 %v2912, %v2916
    %v2918 = vmul.f32 %v2917, %v1396
    %v2919 = vsel %vm1516, %v2918, 0.0
    %2920 = vadd.xlane.f32.xlu0 %v2919
    %v2921 = vpop.xlane.xlu0 %2920
    %v2922 = vadd.f32 %v2921, %v1434
    %2924 = vset.pattern.permute.xlu0 39
    %2925 = vperm.xlu0 %2924, %v2922
    %v2926 = vpop.permute.xlu0 %2925
    %v2928 = vmul.f32 %v2926, %v1439
    %v2929 = vadd.f32 %v2928, %v1444
    %v2930 = vadd.f32 %v2929, %v2833
    %v2931 = vxor.u32 %v2930, 2147483648
    %v2932 = vmul.f32 %v2931, 1.442695
    %v2933 = vpow.pop %v2932
    %v2934 = vadd.f32 %v2933, 1.0
    %v2935 = vrcp.pop %v2934
    %v2936 = vmul.f32 1.0, %v2935
    %v2937 = vtanh.pop %v2930
    %v2938 = vmul.f32 %v2936, %v2749
    %2940 = vrot.lane.b32.xlu0 %v2937, 80
    %v2941 = vpop.permute.xlu0 %2940
    %v2943 = vmul.f32 %v2936, %v2941
    %2945 = vrot.lane.b32.xlu0 %v2943, 16
    %v2946 = vpop.permute.xlu0 %2945
    %v2948 = vadd.f32 %v2938, %v2946
    %v2949 = vtanh.pop %v2948
    %2951 = vrot.lane.b32.xlu0 %v2949, 16
    %v2952 = vpop.permute.xlu0 %2951
    %v2954 = vmul.f32 %v2936, %v2952
    %v2955 = vld [vmem:[#allocation5 + $0x1d8] sm:$0xff]
    %v2956 = vld [vmem:[#allocation5 + $0x1e0] sm:$0xff]
    %v2957 = vld [vmem:[#allocation5 + $0x1e8] sm:$0x1]
    %v2958 = vlaneseq
    %v2959 = vshrl.u32 %v2958, 7
    %v2960 = vsub.s32 0, %v2959
    %v2961 = vrot.slane %v2957, %v2960
    %2963 = vrot.lane.b32.xlu0 %v2954, 96
    %v2964 = vpop.permute.xlu0 %2963
    %v2965 = vsel %vm448, %v2964, 0
    %2967 = vmatprep.subr.mxu0 0.0
    %2968 = vmatpush1.msra.mxu0 0.0
    %2969 = vmatprep.subr.mxu0 0.0
    %2970 = vmatpush1.msra.mxu0 0.0
    %2971 = vmatprep.subr.mxu0 0.0
    %2972 = vmatpush1.msra.mxu0 0.0
    %2973 = vmatprep.subr.mxu0 0.0
    %2974 = vmatpush1.msra.mxu0 0.0
    %2975 = vmatprep.subr.mxu0 0.0
    %2976 = vmatpush1.msra.mxu0 0.0
    %2977 = vmatprep.subr.mxu0 0.0
    %2978 = vmatpush1.msra.mxu0 0.0
    %2979 = vmatprep.subr.mxu0 0.0
    %2980 = vmatpush1.msra.mxu0 0.0
    %2981 = vmatprep.subr.mxu0 0.0
    %2982 = vmatpush1.msra.mxu0 0.0
    %2983 = vmatprep.subr.mxu0 0.0
    %2984 = vmatpush1.msra.mxu0 0.0
    %2985 = vmatprep.subr.mxu0 0.0
    %2986 = vmatpush1.msra.mxu0 0.0
    %2987 = vmatprep.subr.mxu0 0.0
    %2988 = vmatpush1.msra.mxu0 0.0
    %2989 = vmatprep.subr.mxu0 0.0
    %2990 = vmatpush1.msra.mxu0 0.0
    %2991 = vmatprep.subr.mxu0 0.0
    %2992 = vmatpush1.msra.mxu0 0.0
    %2993 = vmatprep.subr.mxu0 0.0
    %2994 = vmatpush1.msra.mxu0 0.0
    %2995 = vmatprep.subr.mxu0 0.0
    %2996 = vmatpush1.msra.mxu0 %v2956
    %2997 = vmatprep.subr.mxu0 0.0
    %2998 = vmatpush1.msra.mxu0 %v2955
    %2999 = vmatprep.subr.mxu0 0.0
    %3000 = vmatpush2.msra.mxu0 0.0
    %3001 = vmatprep.subr.mxu0 0.0
    %3002 = vmatpush2.msra.mxu0 0.0
    %3003 = vmatprep.subr.mxu0 0.0
    %3004 = vmatpush2.msra.mxu0 0.0
    %3005 = vmatprep.subr.mxu0 0.0
    %3006 = vmatpush2.msra.mxu0 0.0
    %3007 = vmatprep.subr.mxu0 0.0
    %3008 = vmatpush2.msra.mxu0 0.0
    %3009 = vmatprep.subr.mxu0 0.0
    %3010 = vmatpush2.msra.mxu0 0.0
    %3011 = vmatprep.subr.mxu0 0.0
    %3012 = vmatpush2.msra.mxu0 0.0
    %3013 = vmatprep.subr.mxu0 0.0
    %3014 = vmatpush2.msra.mxu0 0.0
    %3015 = vmatprep.subr.mxu0 0.0
    %3016 = vmatpush2.msra.mxu0 0.0
    %3017 = vmatprep.subr.mxu0 0.0
    %3018 = vmatpush2.msra.mxu0 0.0
    %3019 = vmatprep.subr.mxu0 0.0
    %3020 = vmatpush2.msra.mxu0 0.0
    %3021 = vmatprep.subr.mxu0 0.0
    %3022 = vmatpush2.msra.mxu0 0.0
    %3023 = vmatprep.subr.mxu0 0.0
    %3024 = vmatpush2.msra.mxu0 0.0
    %3025 = vmatprep.subr.mxu0 0.0
    %3026 = vmatpush2.msra.mxu0 0.0
    %3027 = vmatprep.subr.mxu0 0.0
    %3028 = vmatpush2.msra.mxu0 0.0
    %3029 = vmatprep.subr.mxu0 0.0
    %3030 = vmatpush2.msra.mxu0 0.0
    %3031 = vmatprep.mubr.f32.mxu0 0.0
    %3032 = vmatmul.mubr.f32.gmra.mxu0 %v2965
    %v3033 = vpop.f32.mrf.mxu0
    %v3034 = vadd.f32 %v2961, %v3033
    %v3035 = vpop.f32.mrf.mxu0
    %3036 = vdwg.mxu0
    %v3037 = vtanh.pop %v3034
    %v3038 = vld [vmem:[#allocation5 + $0x1f0] sm:$0xff]
    %v3039 = vld [vmem:[#allocation5 + $0x1f8] sm:$0xff]
    %v3040 = vld [vmem:[#allocation5 + $0x200] sm:$0xff]
    %v3041 = vld [vmem:[#allocation5 + $0x208] sm:$0xff]
    %v3042 = vld [vmem:[#allocation5 + $0x210] sm:$0x1]
    %v3043 = vlaneseq
    %v3044 = vshrl.u32 %v3043, 7
    %v3045 = vsub.s32 0, %v3044
    %v3046 = vrot.slane %v3042, %v3045
    %v3048 = vsel %vm76, %v3037, 0
    %3050 = vmatprep.subr.mxu0 0.0
    %3051 = vmatpush1.msra.mxu0 0.0
    %3052 = vmatprep.subr.mxu0 0.0
    %3053 = vmatpush1.msra.mxu0 0.0
    %3054 = vmatprep.subr.mxu0 0.0
    %3055 = vmatpush1.msra.mxu0 0.0
    %3056 = vmatprep.subr.mxu0 0.0
    %3057 = vmatpush1.msra.mxu0 0.0
    %3058 = vmatprep.subr.mxu0 0.0
    %3059 = vmatpush1.msra.mxu0 0.0
    %3060 = vmatprep.subr.mxu0 0.0
    %3061 = vmatpush1.msra.mxu0 0.0
    %3062 = vmatprep.subr.mxu0 0.0
    %3063 = vmatpush1.msra.mxu0 0.0
    %3064 = vmatprep.subr.mxu0 0.0
    %3065 = vmatpush1.msra.mxu0 0.0
    %3066 = vmatprep.subr.mxu0 0.0
    %3067 = vmatpush1.msra.mxu0 0.0
    %3068 = vmatprep.subr.mxu0 0.0
    %3069 = vmatpush1.msra.mxu0 0.0
    %3070 = vmatprep.subr.mxu0 0.0
    %3071 = vmatpush1.msra.mxu0 0.0
    %3072 = vmatprep.subr.mxu0 0.0
    %3073 = vmatpush1.msra.mxu0 0.0
    %3074 = vmatprep.subr.mxu0 0.0
    %3075 = vmatpush1.msra.mxu0 %v3041
    %3076 = vmatprep.subr.mxu0 0.0
    %3077 = vmatpush1.msra.mxu0 %v3040
    %3078 = vmatprep.subr.mxu0 0.0
    %3079 = vmatpush1.msra.mxu0 %v3039
    %3080 = vmatprep.subr.mxu0 0.0
    %3081 = vmatpush1.msra.mxu0 %v3038
    %3082 = vmatprep.subr.mxu0 0.0
    %3083 = vmatpush2.msra.mxu0 0.0
    %3084 = vmatprep.subr.mxu0 0.0
    %3085 = vmatpush2.msra.mxu0 0.0
    %3086 = vmatprep.subr.mxu0 0.0
    %3087 = vmatpush2.msra.mxu0 0.0
    %3088 = vmatprep.subr.mxu0 0.0
    %3089 = vmatpush2.msra.mxu0 0.0
    %3090 = vmatprep.subr.mxu0 0.0
    %3091 = vmatpush2.msra.mxu0 0.0
    %3092 = vmatprep.subr.mxu0 0.0
    %3093 = vmatpush2.msra.mxu0 0.0
    %3094 = vmatprep.subr.mxu0 0.0
    %3095 = vmatpush2.msra.mxu0 0.0
    %3096 = vmatprep.subr.mxu0 0.0
    %3097 = vmatpush2.msra.mxu0 0.0
    %3098 = vmatprep.subr.mxu0 0.0
    %3099 = vmatpush2.msra.mxu0 0.0
    %3100 = vmatprep.subr.mxu0 0.0
    %3101 = vmatpush2.msra.mxu0 0.0
    %3102 = vmatprep.subr.mxu0 0.0
    %3103 = vmatpush2.msra.mxu0 0.0
    %3104 = vmatprep.subr.mxu0 0.0
    %3105 = vmatpush2.msra.mxu0 0.0
    %3106 = vmatprep.subr.mxu0 0.0
    %3107 = vmatpush2.msra.mxu0 0.0
    %3108 = vmatprep.subr.mxu0 0.0
    %3109 = vmatpush2.msra.mxu0 0.0
    %3110 = vmatprep.subr.mxu0 0.0
    %3111 = vmatpush2.msra.mxu0 0.0
    %3112 = vmatprep.subr.mxu0 0.0
    %3113 = vmatpush2.msra.mxu0 0.0
    %3114 = vmatprep.mubr.f32.mxu0 0.0
    %3115 = vmatmul.mubr.f32.gmra.mxu0 %v3048
    %v3116 = vpop.f32.mrf.mxu0
    %v3117 = vadd.f32 %v3046, %v3116
    %v3118 = vpop.f32.mrf.mxu0
    %3119 = vdwg.mxu0
    %v3120 = vxor.u32 %v3117, 2147483648
    %v3121 = vmul.f32 %v3120, 1.442695
    %v3122 = vpow.pop %v3121
    %v3123 = vadd.f32 %v3122, 1.0
    %v3124 = vrcp.pop %v3123
    %v3125 = vmul.f32 1.0, %v3124
    %v3127 = vrot.slane %v3125, 2
    %v3129 = vmax.f32 %v3125, %v3127
    %v3130 = vrot.slane %v3125, 4
    %v3132 = vmax.f32 %v3129, %v3130
    %v3133 = vrot.slane %v3125, 6
    %v3135 = vmax.f32 %v3132, %v3133
    %vm3136 = vcmask 25600
    %3137 = vst.msk [vmem:[#allocation10] sm:$0x3] %vm3136, %v3135
    // Predicated region
    $region34: #{tpu_custom_call.1} parent=1 // pred_check
      _
    $region35: #{tpu_custom_call.1} parent=1 // pred_check_branch
      %3139 = sbr.rel (0) target = $region37
    $region36: #{tpu_custom_call.1} parent=1 // pred_region
      %s3141 = ssub.s32 32, 32
      %3142 = vsyncadd [#allocation4], %s3141
      %s3144 = sshll.u32 [#allocation10], 4
      %s3145 = int_to_ptr.vmem [resolvable:$true] %s3144
      %3147 = dma.vmem_to_hbm [thread:$0]  %s3145, 32, %s4, [#allocation4]
    $region37: #{tpu_custom_call.1} parent=1 // pred_fallthru
      _
    // Predicated region
    $region38: #{tpu_custom_call.1} parent=1 // pred_check
      _
    $region39: #{tpu_custom_call.1} parent=1 // pred_check_branch
      %3149 = sbr.rel (0) target = $region41
    $region40: #{tpu_custom_call.1} parent=1 // pred_region
      %3150 = dma.done [#allocation4], 32
    $region41: #{tpu_custom_call.1} parent=1 // pred_fallthru
      _
    %3151 = vsyncpa [#allocation3], 1
    %3152 = vsyncpa [#allocation6], 1
    %3153 = vsyncpa [#allocation9], 1
    %3154 = vsyncpa [#allocation4], 1

</llo_original>
